<compile_context>
chip_gen: v7x
topology: tpu7x:2x2x1
jax: 0.10.0
libtpu: 0.0.40
codegen_flags: <defaults>
</compile_context>

<pallas_src>
import numpy as np
import jax
import jax.numpy as jnp
from jax import lax
from jax.experimental import pallas as pl
from jax.experimental.pallas import tpu as pltpu

WINDOW_SIZE = 15
SIGMA = 1.5
PAD = WINDOW_SIZE // 2
C1 = 0.01 ** 2
C2 = 0.03 ** 2

ROW_STRIP = 256   # output-row tile of the vertical (left) banded matmul
COL_STRIP = 256   # output-col tile of the horizontal (right) banded matmul


# ----------------------------- small helpers --------------------------------
def gaussian_1d(window_size: int, sigma: float) -> np.ndarray:
    # mirrors torch: arange(ws).float() - ws//2, exp(-0.5*(x/sigma)^2), normalize
    seq = np.arange(window_size, dtype=np.float32) - window_size // 2
    g = np.exp(-0.5 * (seq / np.float32(sigma)) ** 2).astype(np.float32)
    return (g / g.sum()).astype(np.float32)


def band_matrix(n: int, g: np.ndarray) -> np.ndarray:
    """A[i, r] = g[r - i + pad] (0 outside the band).

    A @ x is the 1D "same" conv along the leading axis of x with zero padding
    (truncated bands at the borders are exactly the zero-padded taps).
    """
    ws = len(g)
    pad = ws // 2
    A = np.zeros((n, n), dtype=np.float32)
    for i in range(n):
        for r in range(max(0, i - pad), min(n, i + pad + 1)):
            A[i, r] = g[r - i + pad]
    return A


def _largest_divisor_leq(n: int, cap: int) -> int:
    cap = max(1, min(n, cap))
    for d in range(cap, 0, -1):
        if n % d == 0:
            return d
    return 1


def _vmem_limit_bytes() -> int:
    """Generation-aware VMEM limit: ~3/4 of physical VMEM, capped at 100 MiB
    (v5e/v6e: 128 MiB physical -> 96 MiB; v7x: 64 MiB -> 48 MiB).  The
    fallback is safe on every generation."""
    limit = 48 * 1024 * 1024
    try:
        cap = int(pltpu.get_tpu_info().vmem_capacity_bytes)
        limit = max(32 * 1024 * 1024, min((cap * 3) // 4, 100 * 1024 * 1024))
    except Exception:
        pass
    return limit


_PRECISION_CACHE = None


def _matmul_precision():
    """Precision.HIGH (3-pass bf16, ~2x HIGHEST throughput) if the Mosaic
    lowering accepts it, else HIGHEST.  Probed once with a tiny kernel."""
    global _PRECISION_CACHE
    if _PRECISION_CACHE is not None:
        return _PRECISION_CACHE
    chosen = jax.lax.Precision.HIGHEST
    try:
        prec = jax.lax.Precision.HIGH

        def probe_kernel(a_ref, b_ref, o_ref):
            o_ref[...] = jnp.dot(a_ref[...], b_ref[...],
                                 preferred_element_type=jnp.float32,
                                 precision=prec)

        x = jnp.ones((128, 128), jnp.float32)
        out = pl.pallas_call(
            probe_kernel,
            out_shape=jax.ShapeDtypeStruct((128, 128), jnp.float32),
        )(x, x)
        jax.block_until_ready(out)
        chosen = prec
    except Exception:
        chosen = jax.lax.Precision.HIGHEST
    _PRECISION_CACHE = chosen
    return chosen


def _aligned_band_window(lo: int, hi: int, n: int):
    """128-aligned K window covering the band [lo-PAD, hi+PAD) clipped to [0, n)
    (alignment avoids lane/sublane relayout copies on the slices)."""
    k0 = max(0, ((lo - PAD) // 128) * 128)
    k1 = min(n, ((hi + PAD + 127) // 128) * 128)
    return k0, k1


def _banded_matmul_left(m_ref, x, prec):
    """y = M @ x for banded M (half-bandwidth PAD): per 256-row output strip,
    contract only the K window overlapping the band."""
    rows = m_ref.shape[0]
    if rows <= ROW_STRIP:
        return jnp.dot(m_ref[...], x,
                       preferred_element_type=jnp.float32, precision=prec)
    parts = []
    for r0 in range(0, rows, ROW_STRIP):
        r1 = min(rows, r0 + ROW_STRIP)
        k0, k1 = _aligned_band_window(r0, r1, rows)
        parts.append(jnp.dot(m_ref[r0:r1, k0:k1], x[k0:k1, :],
                             preferred_element_type=jnp.float32,
                             precision=prec))
    return jnp.concatenate(parts, axis=0)


def _banded_matmul_right(x, m_ref, prec):
    """y = x @ M for banded M (half-bandwidth PAD), tiled over output cols."""
    cols = m_ref.shape[1]
    if cols <= COL_STRIP:
        return jnp.dot(x, m_ref[...],
                       preferred_element_type=jnp.float32, precision=prec)
    parts = []
    for c0 in range(0, cols, COL_STRIP):
        c1 = min(cols, c0 + COL_STRIP)
        k0, k1 = _aligned_band_window(c0, c1, cols)
        parts.append(jnp.dot(x[:, k0:k1], m_ref[k0:k1, c0:c1],
                             preferred_element_type=jnp.float32,
                             precision=prec))
    return jnp.concatenate(parts, axis=1)


# ------------------------------ main kernel ---------------------------------
def ssim_pallas(img1: jax.Array, img2: jax.Array,
                window_size: int = WINDOW_SIZE) -> jax.Array:
    """SSIM with size_average=True for float32 NCHW inputs."""
    assert img1.shape == img2.shape
    N, C, H, W = img1.shape
    NC = N * C
    g = gaussian_1d(window_size, SIGMA)
    prec = _matmul_precision()

    # --- lane packing: fold k slabs along the lane axis when W < 128 --------
    k = _largest_divisor_leq(NC, max(1, 128 // W))
    NCp = NC // k
    Wl = k * W

    # --- slabs per grid step (bcp): generation-aware VMEM budget ------------
    vmem_limit = _vmem_limit_bytes()
    budget = int(vmem_limit * 0.8)

    def _working_set(b):
        r = b * H
        # 2 inputs x 2 (double-buffered) + ~12 live f32 temporaries,
        # + (conservatively) double-buffered banded operators.
        return (16 * r * Wl + 2 * r * r + 2 * Wl * Wl) * 4

    # Keep num_blocks >= 2 whenever possible so the grid's "parallel" axis can
    # feed both v7x TensorCores (near-free on single-TC v5e/v6e).
    bcap = NCp if NCp == 1 else max(1, NCp // 2)
    bcp = 1
    for d in range(bcap, 0, -1):
        if NCp % d == 0 and _working_set(d) <= budget:
            bcp = d
            break
    num_blocks = NCp // bcp
    R = bcp * H
    # TODO(synk): halo'd row-strip tiling over H for planes whose working set
    # exceeds the VMEM budget even at bcp=1 (e.g. 1080p f32 on v7x).

    # --- banded conv operators (zero "same" padding folded into the band) ---
    BH = band_matrix(H, g)            # vertical pass: left-multiply
    BWt = band_matrix(W, g).T         # horizontal pass: right-multiply
    M_v = jnp.asarray(np.kron(np.eye(bcp, dtype=np.float32), BH))   # (R, R)
    M_h = jnp.asarray(np.kron(np.eye(k, dtype=np.float32), BWt))    # (Wl, Wl)

    def pack(x):
        x = x.astype(jnp.float32).reshape(NCp, k, H, W)
        return x.transpose(0, 2, 1, 3).reshape(NCp, H, Wl)

    x1 = pack(img1)
    x2 = pack(img2)

    lane_partial = (R % 8 == 0)

    def kernel(mv_ref, mh_ref, a_ref, b_ref, out_ref):
        a = a_ref[...].reshape(R, Wl)      # layout-trivial leading-dim merge
        b = b_ref[...].reshape(R, Wl)

        def gauss_conv(x):
            v = _banded_matmul_left(mv_ref, x, prec)      # vertical 15 taps
            return _banded_matmul_right(v, mh_ref, prec)  # horizontal 15 taps

        mu1 = gauss_conv(a)
        mu2 = gauss_conv(b)
        mu1_sq = mu1 * mu1
        mu2_sq = mu2 * mu2
        mu1_mu2 = mu1 * mu2
        # Form sigmas immediately so the E[x*y] planes die right away.
        sigma1_sq = gauss_conv(a * a) - mu1_sq
        sigma2_sq = gauss_conv(b * b) - mu2_sq
        sigma12 = gauss_conv(a * b) - mu1_mu2

        ssim_map = ((2.0 * mu1_mu2 + C1) * (2.0 * sigma12 + C2)) / (
            (mu1_sq + mu2_sq + C1) * (sigma1_sq + sigma2_sq + C2))

        if lane_partial:
            # VPU-only partial reduction over the leading axis: lanes stay
            # parallel, no cross-lane XLU reduce, no iota/where filler.
            out_ref[...] = jnp.sum(ssim_map.reshape(R // 8, 8, Wl), axis=0)
        else:
            # Fallback (R not a multiple of 8): scalar sum at [0, 0].
            s = jnp.sum(ssim_map)
            rows_i = lax.broadcasted_iota(jnp.int32, (8, Wl), 0)
            cols_i = lax.broadcasted_iota(jnp.int32, (8, Wl), 1)
            out_ref[...] = jnp.where((rows_i == 0) & (cols_i == 0), s,
                                     jnp.float32(0.0))

    # Grid-invariant operators only need a single VMEM buffer; request it only
    # when they are big enough to matter (small/demo sizes stay on the
    # default, previously validated path).
    band_kwargs = {}
    if (R * R + Wl * Wl) * 4 > (2 << 20):
        band_kwargs = dict(pipeline_mode=pl.Buffered(1))

    elems = NC * H * W
    cost = pl.CostEstimate(
        flops=elems * (5 * 2 * 2 * window_size + 30),
        transcendentals=0,
        bytes_accessed=(2 * elems + R * R + Wl * Wl + num_blocks * 8 * Wl) * 4)

    partial = pl.pallas_call(
        kernel,
        out_shape=jax.ShapeDtypeStruct((num_blocks, 8, Wl), jnp.float32),
        grid_spec=pltpu.PrefetchScalarGridSpec(
            num_scalar_prefetch=0,
            grid=(num_blocks,),
            in_specs=[
                pl.BlockSpec((R, R), lambda i: (0, 0), **band_kwargs),     # M_v
                pl.BlockSpec((Wl, Wl), lambda i: (0, 0), **band_kwargs),   # M_h
                pl.BlockSpec((bcp, H, Wl), lambda i: (i, 0, 0)),           # img1
                pl.BlockSpec((bcp, H, Wl), lambda i: (i, 0, 0)),           # img2
            ],
            out_specs=pl.BlockSpec((None, 8, Wl), lambda i: (i, 0, 0)),
        ),
        compiler_params=pltpu.CompilerParams(
            dimension_semantics=("parallel",),
            vmem_limit_bytes=vmem_limit),
        cost_estimate=cost,
    )(M_v, M_h, x1, x2)

    return jnp.sum(partial) / jnp.float32(NC * H * W)


# ------------------------------ reference -----------------------------------
def ssim_reference(img1: jax.Array, img2: jax.Array,
                   window_size: int = WINDOW_SIZE) -> jax.Array:
    """Pure-JAX reference matching torch's _ssim (full 2D depthwise conv)."""
    N, C, H, W = img1.shape
    pad = window_size // 2
    g = gaussian_1d(window_size, SIGMA)
    w2d = np.outer(g, g).astype(np.float32)
    window = jnp.asarray(
        np.broadcast_to(w2d, (C, 1, window_size, window_size)).copy())

    def dwconv(x):
        return jax.lax.conv_general_dilated(
            x, window, window_strides=(1, 1),
            padding=[(pad, pad), (pad, pad)],
            dimension_numbers=("NCHW", "OIHW", "NCHW"),
            feature_group_count=C,
            precision=jax.lax.Precision.HIGHEST)

    mu1 = dwconv(img1)
    mu2 = dwconv(img2)
    mu1_sq, mu2_sq, mu1_mu2 = mu1 * mu1, mu2 * mu2, mu1 * mu2
    sigma1_sq = dwconv(img1 * img1) - mu1_sq
    sigma2_sq = dwconv(img2 * img2) - mu2_sq
    sigma12 = dwconv(img1 * img2) - mu1_mu2
    ssim_map = (2 * mu1_mu2 + C1) * (2 * sigma12 + C2) / (
        (mu1_sq + mu2_sq + C1) * (sigma1_sq + sigma2_sq + C2))
    return jnp.mean(ssim_map)


if __name__ == "__main__":
    key = jax.random.PRNGKey(0)
    k1, k2, k3, k4 = jax.random.split(key, 4)

    # Primary small-shape check (matches the PyTorch module's NCHW inputs).
    N, C, H, W = 2, 3, 16, 16
    img1 = jax.random.uniform(k1, (N, C, H, W), dtype=jnp.float32)
    img2 = jax.random.uniform(k2, (N, C, H, W), dtype=jnp.float32)
    out = jax.block_until_ready(ssim_pallas(img1, img2))
    ref = jax.block_until_ready(ssim_reference(img1, img2))
    assert np.isfinite(np.asarray(out)), "non-finite SSIM"
    assert abs(float(out) - float(ref)) < 1e-3, (float(out), float(ref))

    # Secondary check exercising the band-aware K-tiling path (H, W > strip).
    a = jax.random.uniform(k3, (1, 1, 288, 288), dtype=jnp.float32)
    b = jax.random.uniform(k4, (1, 1, 288, 288), dtype=jnp.float32)
    out2 = jax.block_until_ready(ssim_pallas(a, b))
    ref2 = jax.block_until_ready(ssim_reference(a, b))
    assert abs(float(out2) - float(ref2)) < 1e-3, (float(out2), float(ref2))

    print("KERNEL_OK")
</pallas_src>

<mosaic_0001>
module attributes {stable_mosaic.version = 11 : i64} {
  func.func @kernel(%arg0: i32, %arg1: memref<16x16xf32, #tpu.memory_space<vmem>>, %arg2: memref<96x96xf32, #tpu.memory_space<vmem>>, %arg3: memref<1x16x96xf32, #tpu.memory_space<vmem>>, %arg4: memref<1x16x96xf32, #tpu.memory_space<vmem>>, %arg5: memref<1x8x96xf32, #tpu.memory_space<vmem>>) attributes {dimension_semantics = [#tpu.dimension_semantics<parallel>], iteration_bounds = array<i64: 1>, scalar_prefetch = 0 : i64, scratch_operands = 0 : i64, tpu.core_type = #tpu.core_type<tc>, window_params = [{pipeline_mode = #tpu.pipeline_mode<synchronous>, transform_indices = @transform_0, window_bounds = array<i64: 16, 16>}, {pipeline_mode = #tpu.pipeline_mode<synchronous>, transform_indices = @transform_1, window_bounds = array<i64: 96, 96>}, {transform_indices = @transform_2, window_bounds = array<i64: 1, 16, 96>}, {transform_indices = @transform_3, window_bounds = array<i64: 1, 16, 96>}, {transform_indices = @transform_4, window_bounds = array<i64: 1, 8, 96>}]} {
    %c0 = arith.constant 0 : index
    %c0_0 = arith.constant 0 : index
    %c0_1 = arith.constant 0 : index
    %0 = vector.load %arg3[%c0, %c0_0, %c0_1] : memref<1x16x96xf32, #tpu.memory_space<vmem>>, vector<1x16x96xf32>
    %1 = vector.shape_cast %0 : vector<1x16x96xf32> to vector<16x96xf32>
    %c0_2 = arith.constant 0 : index
    %c0_3 = arith.constant 0 : index
    %c0_4 = arith.constant 0 : index
    %2 = vector.load %arg4[%c0_2, %c0_3, %c0_4] : memref<1x16x96xf32, #tpu.memory_space<vmem>>, vector<1x16x96xf32>
    %3 = vector.shape_cast %2 : vector<1x16x96xf32> to vector<16x96xf32>
    %c0_5 = arith.constant 0 : index
    %c0_6 = arith.constant 0 : index
    %4 = vector.load %arg1[%c0_5, %c0_6] : memref<16x16xf32, #tpu.memory_space<vmem>>, vector<16x16xf32>
    %cst = arith.constant dense<0.000000e+00> : vector<16x96xf32>
    %5 = tpu.matmul %4, %1, %cst {dimension_numbers = #tpu.dot_dimension_numbers<[1], [0], [0], [1], [0, 0, 1, 1], [], []>, precision = #tpu.contract_precision<fp32>} : vector<16x16xf32>, vector<16x96xf32>, vector<16x96xf32> -> vector<16x96xf32>
    %c0_7 = arith.constant 0 : index
    %c0_8 = arith.constant 0 : index
    %6 = vector.load %arg2[%c0_7, %c0_8] : memref<96x96xf32, #tpu.memory_space<vmem>>, vector<96x96xf32>
    %cst_9 = arith.constant dense<0.000000e+00> : vector<16x96xf32>
    %7 = tpu.matmul %5, %6, %cst_9 {dimension_numbers = #tpu.dot_dimension_numbers<[1], [0], [0], [1], [0, 0, 1, 1], [], []>, precision = #tpu.contract_precision<fp32>} : vector<16x96xf32>, vector<96x96xf32>, vector<16x96xf32> -> vector<16x96xf32>
    %c0_10 = arith.constant 0 : index
    %c0_11 = arith.constant 0 : index
    %8 = vector.load %arg1[%c0_10, %c0_11] : memref<16x16xf32, #tpu.memory_space<vmem>>, vector<16x16xf32>
    %cst_12 = arith.constant dense<0.000000e+00> : vector<16x96xf32>
    %9 = tpu.matmul %8, %3, %cst_12 {dimension_numbers = #tpu.dot_dimension_numbers<[1], [0], [0], [1], [0, 0, 1, 1], [], []>, precision = #tpu.contract_precision<fp32>} : vector<16x16xf32>, vector<16x96xf32>, vector<16x96xf32> -> vector<16x96xf32>
    %c0_13 = arith.constant 0 : index
    %c0_14 = arith.constant 0 : index
    %10 = vector.load %arg2[%c0_13, %c0_14] : memref<96x96xf32, #tpu.memory_space<vmem>>, vector<96x96xf32>
    %cst_15 = arith.constant dense<0.000000e+00> : vector<16x96xf32>
    %11 = tpu.matmul %9, %10, %cst_15 {dimension_numbers = #tpu.dot_dimension_numbers<[1], [0], [0], [1], [0, 0, 1, 1], [], []>, precision = #tpu.contract_precision<fp32>} : vector<16x96xf32>, vector<96x96xf32>, vector<16x96xf32> -> vector<16x96xf32>
    %12 = arith.mulf %7, %7 : vector<16x96xf32>
    %13 = arith.mulf %11, %11 : vector<16x96xf32>
    %14 = arith.mulf %7, %11 : vector<16x96xf32>
    %15 = arith.mulf %1, %1 : vector<16x96xf32>
    %c0_16 = arith.constant 0 : index
    %c0_17 = arith.constant 0 : index
    %16 = vector.load %arg1[%c0_16, %c0_17] : memref<16x16xf32, #tpu.memory_space<vmem>>, vector<16x16xf32>
    %cst_18 = arith.constant dense<0.000000e+00> : vector<16x96xf32>
    %17 = tpu.matmul %16, %15, %cst_18 {dimension_numbers = #tpu.dot_dimension_numbers<[1], [0], [0], [1], [0, 0, 1, 1], [], []>, precision = #tpu.contract_precision<fp32>} : vector<16x16xf32>, vector<16x96xf32>, vector<16x96xf32> -> vector<16x96xf32>
    %c0_19 = arith.constant 0 : index
    %c0_20 = arith.constant 0 : index
    %18 = vector.load %arg2[%c0_19, %c0_20] : memref<96x96xf32, #tpu.memory_space<vmem>>, vector<96x96xf32>
    %cst_21 = arith.constant dense<0.000000e+00> : vector<16x96xf32>
    %19 = tpu.matmul %17, %18, %cst_21 {dimension_numbers = #tpu.dot_dimension_numbers<[1], [0], [0], [1], [0, 0, 1, 1], [], []>, precision = #tpu.contract_precision<fp32>} : vector<16x96xf32>, vector<96x96xf32>, vector<16x96xf32> -> vector<16x96xf32>
    %20 = arith.subf %19, %12 : vector<16x96xf32>
    %21 = arith.mulf %3, %3 : vector<16x96xf32>
    %c0_22 = arith.constant 0 : index
    %c0_23 = arith.constant 0 : index
    %22 = vector.load %arg1[%c0_22, %c0_23] : memref<16x16xf32, #tpu.memory_space<vmem>>, vector<16x16xf32>
    %cst_24 = arith.constant dense<0.000000e+00> : vector<16x96xf32>
    %23 = tpu.matmul %22, %21, %cst_24 {dimension_numbers = #tpu.dot_dimension_numbers<[1], [0], [0], [1], [0, 0, 1, 1], [], []>, precision = #tpu.contract_precision<fp32>} : vector<16x16xf32>, vector<16x96xf32>, vector<16x96xf32> -> vector<16x96xf32>
    %c0_25 = arith.constant 0 : index
    %c0_26 = arith.constant 0 : index
    %24 = vector.load %arg2[%c0_25, %c0_26] : memref<96x96xf32, #tpu.memory_space<vmem>>, vector<96x96xf32>
    %cst_27 = arith.constant dense<0.000000e+00> : vector<16x96xf32>
    %25 = tpu.matmul %23, %24, %cst_27 {dimension_numbers = #tpu.dot_dimension_numbers<[1], [0], [0], [1], [0, 0, 1, 1], [], []>, precision = #tpu.contract_precision<fp32>} : vector<16x96xf32>, vector<96x96xf32>, vector<16x96xf32> -> vector<16x96xf32>
    %26 = arith.subf %25, %13 : vector<16x96xf32>
    %27 = arith.mulf %1, %3 : vector<16x96xf32>
    %c0_28 = arith.constant 0 : index
    %c0_29 = arith.constant 0 : index
    %28 = vector.load %arg1[%c0_28, %c0_29] : memref<16x16xf32, #tpu.memory_space<vmem>>, vector<16x16xf32>
    %cst_30 = arith.constant dense<0.000000e+00> : vector<16x96xf32>
    %29 = tpu.matmul %28, %27, %cst_30 {dimension_numbers = #tpu.dot_dimension_numbers<[1], [0], [0], [1], [0, 0, 1, 1], [], []>, precision = #tpu.contract_precision<fp32>} : vector<16x16xf32>, vector<16x96xf32>, vector<16x96xf32> -> vector<16x96xf32>
    %c0_31 = arith.constant 0 : index
    %c0_32 = arith.constant 0 : index
    %30 = vector.load %arg2[%c0_31, %c0_32] : memref<96x96xf32, #tpu.memory_space<vmem>>, vector<96x96xf32>
    %cst_33 = arith.constant dense<0.000000e+00> : vector<16x96xf32>
    %31 = tpu.matmul %29, %30, %cst_33 {dimension_numbers = #tpu.dot_dimension_numbers<[1], [0], [0], [1], [0, 0, 1, 1], [], []>, precision = #tpu.contract_precision<fp32>} : vector<16x96xf32>, vector<96x96xf32>, vector<16x96xf32> -> vector<16x96xf32>
    %32 = arith.subf %31, %14 : vector<16x96xf32>
    %cst_34 = arith.constant 2.000000e+00 : f32
    %33 = vector.broadcast %cst_34 : f32 to vector<16x96xf32>
    %34 = arith.mulf %33, %14 : vector<16x96xf32>
    %cst_35 = arith.constant 9.99999974E-5 : f32
    %35 = vector.broadcast %cst_35 : f32 to vector<16x96xf32>
    %36 = arith.addf %34, %35 : vector<16x96xf32>
    %cst_36 = arith.constant 2.000000e+00 : f32
    %37 = vector.broadcast %cst_36 : f32 to vector<16x96xf32>
    %38 = arith.mulf %37, %32 : vector<16x96xf32>
    %cst_37 = arith.constant 8.99999984E-4 : f32
    %39 = vector.broadcast %cst_37 : f32 to vector<16x96xf32>
    %40 = arith.addf %38, %39 : vector<16x96xf32>
    %41 = arith.mulf %36, %40 : vector<16x96xf32>
    %42 = arith.addf %12, %13 : vector<16x96xf32>
    %cst_38 = arith.constant 9.99999974E-5 : f32
    %43 = vector.broadcast %cst_38 : f32 to vector<16x96xf32>
    %44 = arith.addf %42, %43 : vector<16x96xf32>
    %45 = arith.addf %20, %26 : vector<16x96xf32>
    %cst_39 = arith.constant 8.99999984E-4 : f32
    %46 = vector.broadcast %cst_39 : f32 to vector<16x96xf32>
    %47 = arith.addf %45, %46 : vector<16x96xf32>
    %48 = arith.mulf %44, %47 : vector<16x96xf32>
    %49 = arith.divf %41, %48 : vector<16x96xf32>
    %50 = vector.shape_cast %49 : vector<16x96xf32> to vector<2x8x96xf32>
    %cst_40 = arith.constant dense<0.000000e+00> : vector<8x96xf32>
    %51 = vector.multi_reduction <add>, %50, %cst_40 [0] : vector<2x8x96xf32> to vector<8x96xf32>
    %c0_41 = arith.constant 0 : index
    %c0_42 = arith.constant 0 : index
    %c0_43 = arith.constant 0 : index
    %52 = vector.load %arg5[%c0_41, %c0_42, %c0_43] : memref<1x8x96xf32, #tpu.memory_space<vmem>>, vector<1x8x96xf32>
    %53 = vector.shape_cast %52 : vector<1x8x96xf32> to vector<8x96xf32>
    %54 = vector.shape_cast %51 : vector<8x96xf32> to vector<1x8x96xf32>
    tpu.vector_store %arg5[%c0_41, %c0_42, %c0_43], %54 {strides = array<i32>} : memref<1x8x96xf32, #tpu.memory_space<vmem>>, vector<1x8x96xf32>,
    return
  }
  func.func @transform_0(%arg0: i32) -> (i32, i32) {
    %c0_i32 = arith.constant 0 : i32
    %c0_i32_0 = arith.constant 0 : i32
    %c0_i32_1 = arith.constant 0 : i32
    return %c0_i32, %c0_i32_0 : i32, i32
  }
  func.func @transform_1(%arg0: i32) -> (i32, i32) {
    %c0_i32 = arith.constant 0 : i32
    %c0_i32_0 = arith.constant 0 : i32
    %c0_i32_1 = arith.constant 0 : i32
    return %c0_i32, %c0_i32_0 : i32, i32
  }
  func.func @transform_2(%arg0: i32) -> (i32, i32, i32) {
    %c0_i32 = arith.constant 0 : i32
    %c0_i32_0 = arith.constant 0 : i32
    %c0_i32_1 = arith.constant 0 : i32
    return %arg0, %c0_i32, %c0_i32_0 : i32, i32, i32
  }
  func.func @transform_3(%arg0: i32) -> (i32, i32, i32) {
    %c0_i32 = arith.constant 0 : i32
    %c0_i32_0 = arith.constant 0 : i32
    %c0_i32_1 = arith.constant 0 : i32
    return %arg0, %c0_i32, %c0_i32_0 : i32, i32, i32
  }
  func.func @transform_4(%arg0: i32) -> (i32, i32, i32) {
    %c0_i32 = arith.constant 0 : i32
    %c0_i32_0 = arith.constant 0 : i32
    %c0_i32_1 = arith.constant 0 : i32
    return %arg0, %c0_i32, %c0_i32_0 : i32, i32, i32
  }
}

</mosaic_0001>

<llo_original>
// kernel: tpu_custom_call.1
$region0: #{tpu_custom_call.1}
  #allocation0 [shape = 'u32[]', space=smem, size = 0x4, offset = 0x4, fixed_abs, tag = 'smem constant byte address 0x4 - core index']
  #allocation1 [shape = 'u32[144,128]{1,0:T(1,128)}', space=vmem, size = 0x12000, scoped, tag = 'internal scratch']
  %s0 = inlined_call_operand.hbm [shape: f32[16,16], index: 0, kind: input, shape index: {}]
  %s1 = inlined_call_operand.hbm [shape: f32[96,96], index: 1, kind: input, shape index: {}]
  %s2 = inlined_call_operand.hbm [shape: f32[1,16,96], index: 2, kind: input, shape index: {}]
  %s3 = inlined_call_operand.hbm [shape: f32[1,16,96], index: 3, kind: input, shape index: {}]
  %s4 = inlined_call_operand.hbm [shape: f32[1,8,96], index: 4, kind: output, shape index: {}]
  %s5 = sld [smem:[#allocation0]]
  $region42: #{tpu_custom_call.1} parent=0
    _
  %s7 = ssub.s32 1, %s5
  %s8 = scalar_select 0, %s7, %s5
  $region1: #{tpu_custom_call.1} parent=0
    #allocation2 [shape = 'u8[8192]{0}', space=vmem, size = 0x2000, scoped, tag = 'input window, operand 0, single buffered']
    #allocation3 [shape = 's32[1]{0}', space=sflag, size = 0x4, scoped, tag = 'scoped memory for tpu_custom_call.1']
    #allocation4 [shape = 's32[1]{0}', space=sflag, size = 0x4, scoped, tag = 'scoped memory for tpu_custom_call.1']
    #allocation5 [shape = 'u8[49152]{0}', space=vmem, size = 0xc000, scoped, tag = 'input window, operand 1, single buffered']
    #allocation6 [shape = 's32[1]{0}', space=sflag, size = 0x4, scoped, tag = 'scoped memory for tpu_custom_call.1']
    #allocation7 [shape = 'u8[8192]{0}', space=vmem, size = 0x2000, scoped, tag = 'input window, operand 2, single buffered']
    #allocation8 [shape = 'u8[8192]{0}', space=vmem, size = 0x2000, scoped, tag = 'input window, operand 3, single buffered']
    #allocation9 [shape = 's32[1]{0}', space=sflag, size = 0x4, scoped, tag = 'scoped memory for tpu_custom_call.1']
    #allocation10 [shape = 'u8[4096]{0}', space=vmem, size = 0x1000, scoped, tag = 'output window, operand 0, single buffered']
    %9 = vsyncpa [#allocation3], 0
    %10 = vsyncpa [#allocation6], 0
    %11 = vsyncpa [#allocation9], 0
    %12 = vsyncpa [#allocation4], 0
    // Predicated region
    $region2: #{tpu_custom_call.1} parent=1 // pred_check
      _
    $region3: #{tpu_custom_call.1} parent=1 // pred_check_branch
      %14 = sbr.rel (0) target = $region5
    $region4: #{tpu_custom_call.1} parent=1 // pred_region
      %s16 = ssub.s32 256, 256
      %17 = vsyncadd [#allocation3], %s16
      %s18 = sshll.u32 [#allocation2], 4
      %s19 = int_to_ptr.vmem [resolvable:$true] %s18
      %24 = dma.hbm_to_vmem [thread:$0]  %s0, 256, %s19, [#allocation3], 128, 128, 8
    $region5: #{tpu_custom_call.1} parent=1 // pred_fallthru
      _
    // Predicated region
    $region6: #{tpu_custom_call.1} parent=1 // pred_check
      _
    $region7: #{tpu_custom_call.1} parent=1 // pred_check_branch
      %26 = sbr.rel (0) target = $region9
    $region8: #{tpu_custom_call.1} parent=1 // pred_region
      %s28 = ssub.s32 1536, 1536
      %29 = vsyncadd [#allocation6], %s28
      %s30 = sshll.u32 [#allocation5], 4
      %s31 = int_to_ptr.vmem [resolvable:$true] %s30
      %36 = dma.hbm_to_vmem [thread:$0]  %s1, 1536, %s31, [#allocation6], 128, 128, 8
    $region9: #{tpu_custom_call.1} parent=1 // pred_fallthru
      _
    // Predicated region
    $region10: #{tpu_custom_call.1} parent=1 // pred_check
      _
    $region11: #{tpu_custom_call.1} parent=1 // pred_check_branch
      %38 = sbr.rel (0) target = $region13
    $region12: #{tpu_custom_call.1} parent=1 // pred_region
      %s40 = ssub.s32 256, 256
      %41 = vsyncadd [#allocation6], %s40
      %s42 = sshll.u32 [#allocation7], 4
      %s43 = int_to_ptr.vmem [resolvable:$true] %s42
      %48 = dma.hbm_to_vmem [thread:$0]  %s2, 256, %s43, [#allocation6], 128, 128, 8
    $region13: #{tpu_custom_call.1} parent=1 // pred_fallthru
      _
    // Predicated region
    $region14: #{tpu_custom_call.1} parent=1 // pred_check
      _
    $region15: #{tpu_custom_call.1} parent=1 // pred_check_branch
      %50 = sbr.rel (0) target = $region17
    $region16: #{tpu_custom_call.1} parent=1 // pred_region
      %s52 = ssub.s32 256, 256
      %53 = vsyncadd [#allocation9], %s52
      %s54 = sshll.u32 [#allocation8], 4
      %s55 = int_to_ptr.vmem [resolvable:$true] %s54
      %60 = dma.hbm_to_vmem [thread:$0]  %s3, 256, %s55, [#allocation9], 128, 128, 8
    $region17: #{tpu_custom_call.1} parent=1 // pred_fallthru
      _
    // Predicated region
    $region18: #{tpu_custom_call.1} parent=1 // pred_check
      _
    $region19: #{tpu_custom_call.1} parent=1 // pred_check_branch
      %62 = sbr.rel (0) target = $region21
    $region20: #{tpu_custom_call.1} parent=1 // pred_region
      %63 = dma.done [#allocation3], 256
    $region21: #{tpu_custom_call.1} parent=1 // pred_fallthru
      _
    // Predicated region
    $region22: #{tpu_custom_call.1} parent=1 // pred_check
      _
    $region23: #{tpu_custom_call.1} parent=1 // pred_check_branch
      %65 = sbr.rel (0) target = $region25
    $region24: #{tpu_custom_call.1} parent=1 // pred_region
      %66 = dma.done [#allocation6], 1536
    $region25: #{tpu_custom_call.1} parent=1 // pred_fallthru
      _
    // Predicated region
    $region26: #{tpu_custom_call.1} parent=1 // pred_check
      _
    $region27: #{tpu_custom_call.1} parent=1 // pred_check_branch
      %68 = sbr.rel (0) target = $region29
    $region28: #{tpu_custom_call.1} parent=1 // pred_region
      %69 = dma.done [#allocation6], 256
    $region29: #{tpu_custom_call.1} parent=1 // pred_fallthru
      _
    // Predicated region
    $region30: #{tpu_custom_call.1} parent=1 // pred_check
      _
    $region31: #{tpu_custom_call.1} parent=1 // pred_check_branch
      %71 = sbr.rel (0) target = $region33
    $region32: #{tpu_custom_call.1} parent=1 // pred_region
      %72 = dma.done [#allocation9], 256
    $region33: #{tpu_custom_call.1} parent=1 // pred_fallthru
      _
    %v73 = vld [vmem:[#allocation7] sm:$0xff]
    %v74 = vld [vmem:[#allocation7 + $0x8] sm:$0xff]
    %v75 = vld [vmem:[#allocation8] sm:$0xff]
    %v76 = vld [vmem:[#allocation8 + $0x8] sm:$0xff]
    %v77 = vld [vmem:[#allocation2] sm:$0xff]
    %v78 = vld [vmem:[#allocation2 + $0x8] sm:$0xff]
    %vm79 = vcmask 130048
    %v81 = vsel %vm79, %v77, 0
    %v84 = vsel %vm79, %v78, 0
    %86 = vmatprep.subr.mxu0 0.0
    %v87 = vand.u32 %v73, 4294901760
    %88 = vmatpush1.msra.mxu0 %v87
    %89 = vmatprep.subr.mxu0 0.0
    %v90 = vand.u32 %v74, 4294901760
    %91 = vmatpush1.msra.mxu0 %v90
    %92 = vmatprep.subr.mxu0 0.0
    %93 = vmatpush1.msra.mxu0 0.0
    %94 = vmatprep.subr.mxu0 0.0
    %95 = vmatpush1.msra.mxu0 0.0
    %96 = vmatprep.subr.mxu0 0.0
    %97 = vmatpush1.msra.mxu0 0.0
    %98 = vmatprep.subr.mxu0 0.0
    %99 = vmatpush1.msra.mxu0 0.0
    %100 = vmatprep.subr.mxu0 0.0
    %101 = vmatpush1.msra.mxu0 0.0
    %102 = vmatprep.subr.mxu0 0.0
    %103 = vmatpush1.msra.mxu0 0.0
    %104 = vmatprep.subr.mxu0 0.0
    %105 = vmatpush1.msra.mxu0 0.0
    %106 = vmatprep.subr.mxu0 0.0
    %107 = vmatpush1.msra.mxu0 0.0
    %108 = vmatprep.subr.mxu0 0.0
    %109 = vmatpush1.msra.mxu0 0.0
    %110 = vmatprep.subr.mxu0 0.0
    %111 = vmatpush1.msra.mxu0 0.0
    %112 = vmatprep.subr.mxu0 0.0
    %113 = vmatpush1.msra.mxu0 0.0
    %114 = vmatprep.subr.mxu0 0.0
    %115 = vmatpush1.msra.mxu0 0.0
    %116 = vmatprep.subr.mxu0 0.0
    %117 = vmatpush1.msra.mxu0 0.0
    %118 = vmatprep.subr.mxu0 0.0
    %119 = vmatpush1.msra.mxu0 0.0
    %120 = vmatprep.subr.mxu0 0.0
    %121 = vmatpush1.msra.mxu0 0.0
    %122 = vmatprep.subr.mxu0 0.0
    %123 = vmatpush1.msra.mxu0 0.0
    %124 = vmatprep.subr.mxu0 0.0
    %125 = vmatpush1.msra.mxu0 0.0
    %126 = vmatprep.subr.mxu0 0.0
    %127 = vmatpush1.msra.mxu0 0.0
    %128 = vmatprep.subr.mxu0 0.0
    %129 = vmatpush1.msra.mxu0 0.0
    %130 = vmatprep.subr.mxu0 0.0
    %131 = vmatpush1.msra.mxu0 0.0
    %132 = vmatprep.subr.mxu0 0.0
    %133 = vmatpush1.msra.mxu0 0.0
    %134 = vmatprep.subr.mxu0 0.0
    %135 = vmatpush1.msra.mxu0 0.0
    %136 = vmatprep.subr.mxu0 0.0
    %137 = vmatpush1.msra.mxu0 0.0
    %138 = vmatprep.subr.mxu0 0.0
    %139 = vmatpush1.msra.mxu0 0.0
    %140 = vmatprep.subr.mxu0 0.0
    %141 = vmatpush1.msra.mxu0 0.0
    %142 = vmatprep.subr.mxu0 0.0
    %143 = vmatpush1.msra.mxu0 0.0
    %144 = vmatprep.subr.mxu0 0.0
    %145 = vmatpush1.msra.mxu0 0.0
    %146 = vmatprep.subr.mxu0 0.0
    %147 = vmatpush1.msra.mxu0 0.0
    %148 = vmatprep.subr.mxu0 0.0
    %149 = vmatpush1.msra.mxu0 0.0
    %150 = vmatprep.subr.mxu0 0.0
    %151 = vmatpush1.msra.mxu0 0.0
    %152 = vmatprep.mubr.f32.mxu0 0.0
    %v153 = vand.u32 %v81, 4294901760
    %v154 = vsub.f32 %v81, %v153
    %v155 = vand.u32 %v154, 4294901760
    %v156 = vsub.f32 %v154, %v155
    %v157 = vand.u32 %v156, 4294901760
    %158 = vmatmul.mubr.f32.gmra.mrb[0].mxu0 %v157
    %v159 = vpop.f32.mrb[0].mxu0
    %v160 = vadd.f32 0.0, %v159
    %v161 = vpop.f32.mrb[0].mxu0
    %162 = vmatprep.mubr.f32.mxu0 0.0
    %v163 = vand.u32 %v84, 4294901760
    %v164 = vsub.f32 %v84, %v163
    %v165 = vand.u32 %v164, 4294901760
    %v166 = vsub.f32 %v164, %v165
    %v167 = vand.u32 %v166, 4294901760
    %168 = vmatmul.mubr.f32.gmra.mrb[0].mxu0 %v167
    %v169 = vpop.f32.mrb[0].mxu0
    %v170 = vadd.f32 0.0, %v169
    %v171 = vpop.f32.mrb[0].mxu0
    %172 = vdwg.mxu0
    %173 = vmatprep.subr.mxu0 0.0
    %v174 = vand.u32 %v73, 4294901760
    %v175 = vsub.f32 %v73, %v174
    %v176 = vand.u32 %v175, 4294901760
    %v177 = vsub.f32 %v175, %v176
    %v178 = vand.u32 %v177, 4294901760
    %179 = vmatpush1.msra.mxu0 %v178
    %180 = vmatprep.subr.mxu0 0.0
    %v181 = vand.u32 %v74, 4294901760
    %v182 = vsub.f32 %v74, %v181
    %v183 = vand.u32 %v182, 4294901760
    %v184 = vsub.f32 %v182, %v183
    %v185 = vand.u32 %v184, 4294901760
    %186 = vmatpush1.msra.mxu0 %v185
    %187 = vmatprep.subr.mxu0 0.0
    %188 = vmatpush1.msra.mxu0 0.0
    %189 = vmatprep.subr.mxu0 0.0
    %190 = vmatpush1.msra.mxu0 0.0
    %191 = vmatprep.subr.mxu0 0.0
    %192 = vmatpush1.msra.mxu0 0.0
    %193 = vmatprep.subr.mxu0 0.0
    %194 = vmatpush1.msra.mxu0 0.0
    %195 = vmatprep.subr.mxu0 0.0
    %196 = vmatpush1.msra.mxu0 0.0
    %197 = vmatprep.subr.mxu0 0.0
    %198 = vmatpush1.msra.mxu0 0.0
    %199 = vmatprep.subr.mxu0 0.0
    %200 = vmatpush1.msra.mxu0 0.0
    %201 = vmatprep.subr.mxu0 0.0
    %202 = vmatpush1.msra.mxu0 0.0
    %203 = vmatprep.subr.mxu0 0.0
    %204 = vmatpush1.msra.mxu0 0.0
    %205 = vmatprep.subr.mxu0 0.0
    %206 = vmatpush1.msra.mxu0 0.0
    %207 = vmatprep.subr.mxu0 0.0
    %208 = vmatpush1.msra.mxu0 0.0
    %209 = vmatprep.subr.mxu0 0.0
    %210 = vmatpush1.msra.mxu0 0.0
    %211 = vmatprep.subr.mxu0 0.0
    %212 = vmatpush1.msra.mxu0 0.0
    %213 = vmatprep.subr.mxu0 0.0
    %214 = vmatpush1.msra.mxu0 0.0
    %215 = vmatprep.subr.mxu0 0.0
    %216 = vmatpush1.msra.mxu0 0.0
    %217 = vmatprep.subr.mxu0 0.0
    %218 = vmatpush1.msra.mxu0 0.0
    %219 = vmatprep.subr.mxu0 0.0
    %220 = vmatpush1.msra.mxu0 0.0
    %221 = vmatprep.subr.mxu0 0.0
    %222 = vmatpush1.msra.mxu0 0.0
    %223 = vmatprep.subr.mxu0 0.0
    %224 = vmatpush1.msra.mxu0 0.0
    %225 = vmatprep.subr.mxu0 0.0
    %226 = vmatpush1.msra.mxu0 0.0
    %227 = vmatprep.subr.mxu0 0.0
    %228 = vmatpush1.msra.mxu0 0.0
    %229 = vmatprep.subr.mxu0 0.0
    %230 = vmatpush1.msra.mxu0 0.0
    %231 = vmatprep.subr.mxu0 0.0
    %232 = vmatpush1.msra.mxu0 0.0
    %233 = vmatprep.subr.mxu0 0.0
    %234 = vmatpush1.msra.mxu0 0.0
    %235 = vmatprep.subr.mxu0 0.0
    %236 = vmatpush1.msra.mxu0 0.0
    %237 = vmatprep.subr.mxu0 0.0
    %238 = vmatpush1.msra.mxu0 0.0
    %239 = vmatprep.subr.mxu0 0.0
    %240 = vmatpush1.msra.mxu0 0.0
    %241 = vmatprep.subr.mxu0 0.0
    %242 = vmatpush1.msra.mxu0 0.0
    %243 = vmatprep.subr.mxu0 0.0
    %244 = vmatpush1.msra.mxu0 0.0
    %245 = vmatprep.subr.mxu0 0.0
    %246 = vmatpush1.msra.mxu0 0.0
    %247 = vmatprep.mubr.f32.mxu0 0.0
    %v248 = vand.u32 %v81, 4294901760
    %249 = vmatmul.mubr.f32.gmra.mrb[0].mxu0 %v248
    %v250 = vpop.f32.mrb[0].mxu0
    %v251 = vadd.f32 %v160, %v250
    %v252 = vpop.f32.mrb[0].mxu0
    %253 = vmatprep.mubr.f32.mxu0 0.0
    %v254 = vand.u32 %v84, 4294901760
    %255 = vmatmul.mubr.f32.gmra.mrb[0].mxu0 %v254
    %v256 = vpop.f32.mrb[0].mxu0
    %v257 = vadd.f32 %v170, %v256
    %v258 = vpop.f32.mrb[0].mxu0
    %259 = vdwg.mxu0
    %260 = vmatprep.subr.mxu0 0.0
    %v261 = vand.u32 %v73, 4294901760
    %v262 = vsub.f32 %v73, %v261
    %263 = vmatpush1.msra.mxu0 %v262
    %264 = vmatprep.subr.mxu0 0.0
    %v265 = vand.u32 %v74, 4294901760
    %v266 = vsub.f32 %v74, %v265
    %267 = vmatpush1.msra.mxu0 %v266
    %268 = vmatprep.subr.mxu0 0.0
    %269 = vmatpush1.msra.mxu0 0.0
    %270 = vmatprep.subr.mxu0 0.0
    %271 = vmatpush1.msra.mxu0 0.0
    %272 = vmatprep.subr.mxu0 0.0
    %273 = vmatpush1.msra.mxu0 0.0
    %274 = vmatprep.subr.mxu0 0.0
    %275 = vmatpush1.msra.mxu0 0.0
    %276 = vmatprep.subr.mxu0 0.0
    %277 = vmatpush1.msra.mxu0 0.0
    %278 = vmatprep.subr.mxu0 0.0
    %279 = vmatpush1.msra.mxu0 0.0
    %280 = vmatprep.subr.mxu0 0.0
    %281 = vmatpush1.msra.mxu0 0.0
    %282 = vmatprep.subr.mxu0 0.0
    %283 = vmatpush1.msra.mxu0 0.0
    %284 = vmatprep.subr.mxu0 0.0
    %285 = vmatpush1.msra.mxu0 0.0
    %286 = vmatprep.subr.mxu0 0.0
    %287 = vmatpush1.msra.mxu0 0.0
    %288 = vmatprep.subr.mxu0 0.0
    %289 = vmatpush1.msra.mxu0 0.0
    %290 = vmatprep.subr.mxu0 0.0
    %291 = vmatpush1.msra.mxu0 0.0
    %292 = vmatprep.subr.mxu0 0.0
    %293 = vmatpush1.msra.mxu0 0.0
    %294 = vmatprep.subr.mxu0 0.0
    %295 = vmatpush1.msra.mxu0 0.0
    %296 = vmatprep.subr.mxu0 0.0
    %297 = vmatpush1.msra.mxu0 0.0
    %298 = vmatprep.subr.mxu0 0.0
    %299 = vmatpush1.msra.mxu0 0.0
    %300 = vmatprep.subr.mxu0 0.0
    %301 = vmatpush1.msra.mxu0 0.0
    %302 = vmatprep.subr.mxu0 0.0
    %303 = vmatpush1.msra.mxu0 0.0
    %304 = vmatprep.subr.mxu0 0.0
    %305 = vmatpush1.msra.mxu0 0.0
    %306 = vmatprep.subr.mxu0 0.0
    %307 = vmatpush1.msra.mxu0 0.0
    %308 = vmatprep.subr.mxu0 0.0
    %309 = vmatpush1.msra.mxu0 0.0
    %310 = vmatprep.subr.mxu0 0.0
    %311 = vmatpush1.msra.mxu0 0.0
    %312 = vmatprep.subr.mxu0 0.0
    %313 = vmatpush1.msra.mxu0 0.0
    %314 = vmatprep.subr.mxu0 0.0
    %315 = vmatpush1.msra.mxu0 0.0
    %316 = vmatprep.subr.mxu0 0.0
    %317 = vmatpush1.msra.mxu0 0.0
    %318 = vmatprep.subr.mxu0 0.0
    %319 = vmatpush1.msra.mxu0 0.0
    %320 = vmatprep.subr.mxu0 0.0
    %321 = vmatpush1.msra.mxu0 0.0
    %322 = vmatprep.subr.mxu0 0.0
    %323 = vmatpush1.msra.mxu0 0.0
    %324 = vmatprep.subr.mxu0 0.0
    %325 = vmatpush1.msra.mxu0 0.0
    %326 = vmatprep.subr.mxu0 0.0
    %327 = vmatpush1.msra.mxu0 0.0
    %328 = vmatprep.mubr.f32.mxu0 0.0
    %v329 = vand.u32 %v81, 4294901760
    %v330 = vsub.f32 %v81, %v329
    %331 = vmatmul.mubr.f32.gmra.mrb[0].mxu0 %v330
    %v332 = vpop.f32.mrb[0].mxu0
    %v333 = vadd.f32 %v251, %v332
    %v334 = vpop.f32.mrb[0].mxu0
    %335 = vmatprep.mubr.f32.mxu0 0.0
    %v336 = vand.u32 %v84, 4294901760
    %v337 = vsub.f32 %v84, %v336
    %338 = vmatmul.mubr.f32.gmra.mrb[0].mxu0 %v337
    %v339 = vpop.f32.mrb[0].mxu0
    %v340 = vadd.f32 %v257, %v339
    %v341 = vpop.f32.mrb[0].mxu0
    %342 = vdwg.mxu0
    %343 = vmatprep.subr.mxu0 0.0
    %v344 = vand.u32 %v73, 4294901760
    %345 = vmatpush1.msra.mxu0 %v344
    %346 = vmatprep.subr.mxu0 0.0
    %v347 = vand.u32 %v74, 4294901760
    %348 = vmatpush1.msra.mxu0 %v347
    %349 = vmatprep.subr.mxu0 0.0
    %350 = vmatpush1.msra.mxu0 0.0
    %351 = vmatprep.subr.mxu0 0.0
    %352 = vmatpush1.msra.mxu0 0.0
    %353 = vmatprep.subr.mxu0 0.0
    %354 = vmatpush1.msra.mxu0 0.0
    %355 = vmatprep.subr.mxu0 0.0
    %356 = vmatpush1.msra.mxu0 0.0
    %357 = vmatprep.subr.mxu0 0.0
    %358 = vmatpush1.msra.mxu0 0.0
    %359 = vmatprep.subr.mxu0 0.0
    %360 = vmatpush1.msra.mxu0 0.0
    %361 = vmatprep.subr.mxu0 0.0
    %362 = vmatpush1.msra.mxu0 0.0
    %363 = vmatprep.subr.mxu0 0.0
    %364 = vmatpush1.msra.mxu0 0.0
    %365 = vmatprep.subr.mxu0 0.0
    %366 = vmatpush1.msra.mxu0 0.0
    %367 = vmatprep.subr.mxu0 0.0
    %368 = vmatpush1.msra.mxu0 0.0
    %369 = vmatprep.subr.mxu0 0.0
    %370 = vmatpush1.msra.mxu0 0.0
    %371 = vmatprep.subr.mxu0 0.0
    %372 = vmatpush1.msra.mxu0 0.0
    %373 = vmatprep.subr.mxu0 0.0
    %374 = vmatpush1.msra.mxu0 0.0
    %375 = vmatprep.subr.mxu0 0.0
    %376 = vmatpush1.msra.mxu0 0.0
    %377 = vmatprep.subr.mxu0 0.0
    %378 = vmatpush1.msra.mxu0 0.0
    %379 = vmatprep.subr.mxu0 0.0
    %380 = vmatpush1.msra.mxu0 0.0
    %381 = vmatprep.subr.mxu0 0.0
    %382 = vmatpush1.msra.mxu0 0.0
    %383 = vmatprep.subr.mxu0 0.0
    %384 = vmatpush1.msra.mxu0 0.0
    %385 = vmatprep.subr.mxu0 0.0
    %386 = vmatpush1.msra.mxu0 0.0
    %387 = vmatprep.subr.mxu0 0.0
    %388 = vmatpush1.msra.mxu0 0.0
    %389 = vmatprep.subr.mxu0 0.0
    %390 = vmatpush1.msra.mxu0 0.0
    %391 = vmatprep.subr.mxu0 0.0
    %392 = vmatpush1.msra.mxu0 0.0
    %393 = vmatprep.subr.mxu0 0.0
    %394 = vmatpush1.msra.mxu0 0.0
    %395 = vmatprep.subr.mxu0 0.0
    %396 = vmatpush1.msra.mxu0 0.0
    %397 = vmatprep.subr.mxu0 0.0
    %398 = vmatpush1.msra.mxu0 0.0
    %399 = vmatprep.subr.mxu0 0.0
    %400 = vmatpush1.msra.mxu0 0.0
    %401 = vmatprep.subr.mxu0 0.0
    %402 = vmatpush1.msra.mxu0 0.0
    %403 = vmatprep.subr.mxu0 0.0
    %404 = vmatpush1.msra.mxu0 0.0
    %405 = vmatprep.subr.mxu0 0.0
    %406 = vmatpush1.msra.mxu0 0.0
    %407 = vmatprep.subr.mxu0 0.0
    %408 = vmatpush1.msra.mxu0 0.0
    %409 = vmatprep.mubr.f32.mxu0 0.0
    %v410 = vand.u32 %v81, 4294901760
    %v411 = vsub.f32 %v81, %v410
    %v412 = vand.u32 %v411, 4294901760
    %413 = vmatmul.mubr.f32.gmra.mrb[0].mxu0 %v412
    %v414 = vpop.f32.mrb[0].mxu0
    %v415 = vadd.f32 %v333, %v414
    %v416 = vpop.f32.mrb[0].mxu0
    %417 = vmatprep.mubr.f32.mxu0 0.0
    %v418 = vand.u32 %v84, 4294901760
    %v419 = vsub.f32 %v84, %v418
    %v420 = vand.u32 %v419, 4294901760
    %421 = vmatmul.mubr.f32.gmra.mrb[0].mxu0 %v420
    %v422 = vpop.f32.mrb[0].mxu0
    %v423 = vadd.f32 %v340, %v422
    %v424 = vpop.f32.mrb[0].mxu0
    %425 = vdwg.mxu0
    %426 = vmatprep.subr.mxu0 0.0
    %v427 = vand.u32 %v73, 4294901760
    %v428 = vsub.f32 %v73, %v427
    %v429 = vand.u32 %v428, 4294901760
    %430 = vmatpush1.msra.mxu0 %v429
    %431 = vmatprep.subr.mxu0 0.0
    %v432 = vand.u32 %v74, 4294901760
    %v433 = vsub.f32 %v74, %v432
    %v434 = vand.u32 %v433, 4294901760
    %435 = vmatpush1.msra.mxu0 %v434
    %436 = vmatprep.subr.mxu0 0.0
    %437 = vmatpush1.msra.mxu0 0.0
    %438 = vmatprep.subr.mxu0 0.0
    %439 = vmatpush1.msra.mxu0 0.0
    %440 = vmatprep.subr.mxu0 0.0
    %441 = vmatpush1.msra.mxu0 0.0
    %442 = vmatprep.subr.mxu0 0.0
    %443 = vmatpush1.msra.mxu0 0.0
    %444 = vmatprep.subr.mxu0 0.0
    %445 = vmatpush1.msra.mxu0 0.0
    %446 = vmatprep.subr.mxu0 0.0
    %447 = vmatpush1.msra.mxu0 0.0
    %448 = vmatprep.subr.mxu0 0.0
    %449 = vmatpush1.msra.mxu0 0.0
    %450 = vmatprep.subr.mxu0 0.0
    %451 = vmatpush1.msra.mxu0 0.0
    %452 = vmatprep.subr.mxu0 0.0
    %453 = vmatpush1.msra.mxu0 0.0
    %454 = vmatprep.subr.mxu0 0.0
    %455 = vmatpush1.msra.mxu0 0.0
    %456 = vmatprep.subr.mxu0 0.0
    %457 = vmatpush1.msra.mxu0 0.0
    %458 = vmatprep.subr.mxu0 0.0
    %459 = vmatpush1.msra.mxu0 0.0
    %460 = vmatprep.subr.mxu0 0.0
    %461 = vmatpush1.msra.mxu0 0.0
    %462 = vmatprep.subr.mxu0 0.0
    %463 = vmatpush1.msra.mxu0 0.0
    %464 = vmatprep.subr.mxu0 0.0
    %465 = vmatpush1.msra.mxu0 0.0
    %466 = vmatprep.subr.mxu0 0.0
    %467 = vmatpush1.msra.mxu0 0.0
    %468 = vmatprep.subr.mxu0 0.0
    %469 = vmatpush1.msra.mxu0 0.0
    %470 = vmatprep.subr.mxu0 0.0
    %471 = vmatpush1.msra.mxu0 0.0
    %472 = vmatprep.subr.mxu0 0.0
    %473 = vmatpush1.msra.mxu0 0.0
    %474 = vmatprep.subr.mxu0 0.0
    %475 = vmatpush1.msra.mxu0 0.0
    %476 = vmatprep.subr.mxu0 0.0
    %477 = vmatpush1.msra.mxu0 0.0
    %478 = vmatprep.subr.mxu0 0.0
    %479 = vmatpush1.msra.mxu0 0.0
    %480 = vmatprep.subr.mxu0 0.0
    %481 = vmatpush1.msra.mxu0 0.0
    %482 = vmatprep.subr.mxu0 0.0
    %483 = vmatpush1.msra.mxu0 0.0
    %484 = vmatprep.subr.mxu0 0.0
    %485 = vmatpush1.msra.mxu0 0.0
    %486 = vmatprep.subr.mxu0 0.0
    %487 = vmatpush1.msra.mxu0 0.0
    %488 = vmatprep.subr.mxu0 0.0
    %489 = vmatpush1.msra.mxu0 0.0
    %490 = vmatprep.subr.mxu0 0.0
    %491 = vmatpush1.msra.mxu0 0.0
    %492 = vmatprep.subr.mxu0 0.0
    %493 = vmatpush1.msra.mxu0 0.0
    %494 = vmatprep.subr.mxu0 0.0
    %495 = vmatpush1.msra.mxu0 0.0
    %496 = vmatprep.mubr.f32.mxu0 0.0
    %v497 = vand.u32 %v81, 4294901760
    %498 = vmatmul.mubr.f32.gmra.mrb[0].mxu0 %v497
    %v499 = vpop.f32.mrb[0].mxu0
    %v500 = vadd.f32 %v415, %v499
    %v501 = vpop.f32.mrb[0].mxu0
    %502 = vmatprep.mubr.f32.mxu0 0.0
    %v503 = vand.u32 %v84, 4294901760
    %504 = vmatmul.mubr.f32.gmra.mrb[0].mxu0 %v503
    %v505 = vpop.f32.mrb[0].mxu0
    %v506 = vadd.f32 %v423, %v505
    %v507 = vpop.f32.mrb[0].mxu0
    %508 = vdwg.mxu0
    %509 = vmatprep.subr.mxu0 0.0
    %v510 = vand.u32 %v73, 4294901760
    %511 = vmatpush1.msra.mxu0 %v510
    %512 = vmatprep.subr.mxu0 0.0
    %v513 = vand.u32 %v74, 4294901760
    %514 = vmatpush1.msra.mxu0 %v513
    %515 = vmatprep.subr.mxu0 0.0
    %516 = vmatpush1.msra.mxu0 0.0
    %517 = vmatprep.subr.mxu0 0.0
    %518 = vmatpush1.msra.mxu0 0.0
    %519 = vmatprep.subr.mxu0 0.0
    %520 = vmatpush1.msra.mxu0 0.0
    %521 = vmatprep.subr.mxu0 0.0
    %522 = vmatpush1.msra.mxu0 0.0
    %523 = vmatprep.subr.mxu0 0.0
    %524 = vmatpush1.msra.mxu0 0.0
    %525 = vmatprep.subr.mxu0 0.0
    %526 = vmatpush1.msra.mxu0 0.0
    %527 = vmatprep.subr.mxu0 0.0
    %528 = vmatpush1.msra.mxu0 0.0
    %529 = vmatprep.subr.mxu0 0.0
    %530 = vmatpush1.msra.mxu0 0.0
    %531 = vmatprep.subr.mxu0 0.0
    %532 = vmatpush1.msra.mxu0 0.0
    %533 = vmatprep.subr.mxu0 0.0
    %534 = vmatpush1.msra.mxu0 0.0
    %535 = vmatprep.subr.mxu0 0.0
    %536 = vmatpush1.msra.mxu0 0.0
    %537 = vmatprep.subr.mxu0 0.0
    %538 = vmatpush1.msra.mxu0 0.0
    %539 = vmatprep.subr.mxu0 0.0
    %540 = vmatpush1.msra.mxu0 0.0
    %541 = vmatprep.subr.mxu0 0.0
    %542 = vmatpush1.msra.mxu0 0.0
    %543 = vmatprep.subr.mxu0 0.0
    %544 = vmatpush1.msra.mxu0 0.0
    %545 = vmatprep.subr.mxu0 0.0
    %546 = vmatpush1.msra.mxu0 0.0
    %547 = vmatprep.subr.mxu0 0.0
    %548 = vmatpush1.msra.mxu0 0.0
    %549 = vmatprep.subr.mxu0 0.0
    %550 = vmatpush1.msra.mxu0 0.0
    %551 = vmatprep.subr.mxu0 0.0
    %552 = vmatpush1.msra.mxu0 0.0
    %553 = vmatprep.subr.mxu0 0.0
    %554 = vmatpush1.msra.mxu0 0.0
    %555 = vmatprep.subr.mxu0 0.0
    %556 = vmatpush1.msra.mxu0 0.0
    %557 = vmatprep.subr.mxu0 0.0
    %558 = vmatpush1.msra.mxu0 0.0
    %559 = vmatprep.subr.mxu0 0.0
    %560 = vmatpush1.msra.mxu0 0.0
    %561 = vmatprep.subr.mxu0 0.0
    %562 = vmatpush1.msra.mxu0 0.0
    %563 = vmatprep.subr.mxu0 0.0
    %564 = vmatpush1.msra.mxu0 0.0
    %565 = vmatprep.subr.mxu0 0.0
    %566 = vmatpush1.msra.mxu0 0.0
    %567 = vmatprep.subr.mxu0 0.0
    %568 = vmatpush1.msra.mxu0 0.0
    %569 = vmatprep.subr.mxu0 0.0
    %570 = vmatpush1.msra.mxu0 0.0
    %571 = vmatprep.subr.mxu0 0.0
    %572 = vmatpush1.msra.mxu0 0.0
    %573 = vmatprep.subr.mxu0 0.0
    %574 = vmatpush1.msra.mxu0 0.0
    %575 = vmatprep.mubr.f32.mxu0 0.0
    %v576 = vand.u32 %v81, 4294901760
    %577 = vmatmul.mubr.f32.gmra.mrb[0].mxu0 %v576
    %v578 = vpop.f32.mrb[0].mxu0
    %v579 = vadd.f32 %v500, %v578
    %v580 = vpop.f32.mrb[0].mxu0
    %581 = vmatprep.mubr.f32.mxu0 0.0
    %v582 = vand.u32 %v84, 4294901760
    %583 = vmatmul.mubr.f32.gmra.mrb[0].mxu0 %v582
    %v584 = vpop.f32.mrb[0].mxu0
    %v585 = vadd.f32 %v506, %v584
    %v586 = vpop.f32.mrb[0].mxu0
    %587 = vdwg.mxu0
    %v588 = vld [vmem:[#allocation5] sm:$0xff]
    %v589 = vld [vmem:[#allocation5 + $0x8] sm:$0xff]
    %v590 = vld [vmem:[#allocation5 + $0x10] sm:$0xff]
    %v591 = vld [vmem:[#allocation5 + $0x18] sm:$0xff]
    %v592 = vld [vmem:[#allocation5 + $0x20] sm:$0xff]
    %v593 = vld [vmem:[#allocation5 + $0x28] sm:$0xff]
    %v594 = vld [vmem:[#allocation5 + $0x30] sm:$0xff]
    %v595 = vld [vmem:[#allocation5 + $0x38] sm:$0xff]
    %v596 = vld [vmem:[#allocation5 + $0x40] sm:$0xff]
    %v597 = vld [vmem:[#allocation5 + $0x48] sm:$0xff]
    %v598 = vld [vmem:[#allocation5 + $0x50] sm:$0xff]
    %v599 = vld [vmem:[#allocation5 + $0x58] sm:$0xff]
    %vm600 = vcmask 785408
    %v602 = vsel %vm600, %v579, 0
    %v605 = vsel %vm600, %v585, 0
    %607 = vmatprep.subr.mxu0 0.0
    %v608 = vand.u32 %v588, 4294901760
    %609 = vmatpush1.msra.mxu0 %v608
    %610 = vmatprep.subr.mxu0 0.0
    %v611 = vand.u32 %v589, 4294901760
    %612 = vmatpush1.msra.mxu0 %v611
    %613 = vmatprep.subr.mxu0 0.0
    %v614 = vand.u32 %v590, 4294901760
    %615 = vmatpush1.msra.mxu0 %v614
    %616 = vmatprep.subr.mxu0 0.0
    %v617 = vand.u32 %v591, 4294901760
    %618 = vmatpush1.msra.mxu0 %v617
    %619 = vmatprep.subr.mxu0 0.0
    %v620 = vand.u32 %v592, 4294901760
    %621 = vmatpush1.msra.mxu0 %v620
    %622 = vmatprep.subr.mxu0 0.0
    %v623 = vand.u32 %v593, 4294901760
    %624 = vmatpush1.msra.mxu0 %v623
    %625 = vmatprep.subr.mxu0 0.0
    %v626 = vand.u32 %v594, 4294901760
    %627 = vmatpush1.msra.mxu0 %v626
    %628 = vmatprep.subr.mxu0 0.0
    %v629 = vand.u32 %v595, 4294901760
    %630 = vmatpush1.msra.mxu0 %v629
    %631 = vmatprep.subr.mxu0 0.0
    %v632 = vand.u32 %v596, 4294901760
    %633 = vmatpush1.msra.mxu0 %v632
    %634 = vmatprep.subr.mxu0 0.0
    %v635 = vand.u32 %v597, 4294901760
    %636 = vmatpush1.msra.mxu0 %v635
    %637 = vmatprep.subr.mxu0 0.0
    %v638 = vand.u32 %v598, 4294901760
    %639 = vmatpush1.msra.mxu0 %v638
    %640 = vmatprep.subr.mxu0 0.0
    %v641 = vand.u32 %v599, 4294901760
    %642 = vmatpush1.msra.mxu0 %v641
    %643 = vmatprep.subr.mxu0 0.0
    %644 = vmatpush1.msra.mxu0 0.0
    %645 = vmatprep.subr.mxu0 0.0
    %646 = vmatpush1.msra.mxu0 0.0
    %647 = vmatprep.subr.mxu0 0.0
    %648 = vmatpush1.msra.mxu0 0.0
    %649 = vmatprep.subr.mxu0 0.0
    %650 = vmatpush1.msra.mxu0 0.0
    %651 = vmatprep.subr.mxu0 0.0
    %652 = vmatpush1.msra.mxu0 0.0
    %653 = vmatprep.subr.mxu0 0.0
    %654 = vmatpush1.msra.mxu0 0.0
    %655 = vmatprep.subr.mxu0 0.0
    %656 = vmatpush1.msra.mxu0 0.0
    %657 = vmatprep.subr.mxu0 0.0
    %658 = vmatpush1.msra.mxu0 0.0
    %659 = vmatprep.subr.mxu0 0.0
    %660 = vmatpush1.msra.mxu0 0.0
    %661 = vmatprep.subr.mxu0 0.0
    %662 = vmatpush1.msra.mxu0 0.0
    %663 = vmatprep.subr.mxu0 0.0
    %664 = vmatpush1.msra.mxu0 0.0
    %665 = vmatprep.subr.mxu0 0.0
    %666 = vmatpush1.msra.mxu0 0.0
    %667 = vmatprep.subr.mxu0 0.0
    %668 = vmatpush1.msra.mxu0 0.0
    %669 = vmatprep.subr.mxu0 0.0
    %670 = vmatpush1.msra.mxu0 0.0
    %671 = vmatprep.subr.mxu0 0.0
    %672 = vmatpush1.msra.mxu0 0.0
    %673 = vmatprep.subr.mxu0 0.0
    %674 = vmatpush1.msra.mxu0 0.0
    %675 = vmatprep.subr.mxu0 0.0
    %676 = vmatpush1.msra.mxu0 0.0
    %677 = vmatprep.subr.mxu0 0.0
    %678 = vmatpush1.msra.mxu0 0.0
    %679 = vmatprep.subr.mxu0 0.0
    %680 = vmatpush1.msra.mxu0 0.0
    %681 = vmatprep.subr.mxu0 0.0
    %682 = vmatpush1.msra.mxu0 0.0
    %683 = vmatprep.mubr.f32.mxu0 0.0
    %v684 = vand.u32 %v602, 4294901760
    %v685 = vsub.f32 %v602, %v684
    %v686 = vand.u32 %v685, 4294901760
    %v687 = vsub.f32 %v685, %v686
    %v688 = vand.u32 %v687, 4294901760
    %689 = vmatmul.mubr.f32.gmra.mrb[0].mxu0 %v688
    %v690 = vpop.f32.mrb[0].mxu0
    %v691 = vadd.f32 0.0, %v690
    %v692 = vpop.f32.mrb[0].mxu0
    %693 = vmatprep.mubr.f32.mxu0 0.0
    %v694 = vand.u32 %v605, 4294901760
    %v695 = vsub.f32 %v605, %v694
    %v696 = vand.u32 %v695, 4294901760
    %v697 = vsub.f32 %v695, %v696
    %v698 = vand.u32 %v697, 4294901760
    %699 = vmatmul.mubr.f32.gmra.mrb[0].mxu0 %v698
    %v700 = vpop.f32.mrb[0].mxu0
    %v701 = vadd.f32 0.0, %v700
    %v702 = vpop.f32.mrb[0].mxu0
    %703 = vdwg.mxu0
    %704 = vmatprep.subr.mxu0 0.0
    %v705 = vand.u32 %v588, 4294901760
    %v706 = vsub.f32 %v588, %v705
    %v707 = vand.u32 %v706, 4294901760
    %v708 = vsub.f32 %v706, %v707
    %v709 = vand.u32 %v708, 4294901760
    %710 = vmatpush1.msra.mxu0 %v709
    %711 = vmatprep.subr.mxu0 0.0
    %v712 = vand.u32 %v589, 4294901760
    %v713 = vsub.f32 %v589, %v712
    %v714 = vand.u32 %v713, 4294901760
    %v715 = vsub.f32 %v713, %v714
    %v716 = vand.u32 %v715, 4294901760
    %717 = vmatpush1.msra.mxu0 %v716
    %718 = vmatprep.subr.mxu0 0.0
    %v719 = vand.u32 %v590, 4294901760
    %v720 = vsub.f32 %v590, %v719
    %v721 = vand.u32 %v720, 4294901760
    %v722 = vsub.f32 %v720, %v721
    %v723 = vand.u32 %v722, 4294901760
    %724 = vmatpush1.msra.mxu0 %v723
    %725 = vmatprep.subr.mxu0 0.0
    %v726 = vand.u32 %v591, 4294901760
    %v727 = vsub.f32 %v591, %v726
    %v728 = vand.u32 %v727, 4294901760
    %v729 = vsub.f32 %v727, %v728
    %v730 = vand.u32 %v729, 4294901760
    %731 = vmatpush1.msra.mxu0 %v730
    %732 = vmatprep.subr.mxu0 0.0
    %v733 = vand.u32 %v592, 4294901760
    %v734 = vsub.f32 %v592, %v733
    %v735 = vand.u32 %v734, 4294901760
    %v736 = vsub.f32 %v734, %v735
    %v737 = vand.u32 %v736, 4294901760
    %738 = vmatpush1.msra.mxu0 %v737
    %739 = vmatprep.subr.mxu0 0.0
    %v740 = vand.u32 %v593, 4294901760
    %v741 = vsub.f32 %v593, %v740
    %v742 = vand.u32 %v741, 4294901760
    %v743 = vsub.f32 %v741, %v742
    %v744 = vand.u32 %v743, 4294901760
    %745 = vmatpush1.msra.mxu0 %v744
    %746 = vmatprep.subr.mxu0 0.0
    %v747 = vand.u32 %v594, 4294901760
    %v748 = vsub.f32 %v594, %v747
    %v749 = vand.u32 %v748, 4294901760
    %v750 = vsub.f32 %v748, %v749
    %v751 = vand.u32 %v750, 4294901760
    %752 = vmatpush1.msra.mxu0 %v751
    %753 = vmatprep.subr.mxu0 0.0
    %v754 = vand.u32 %v595, 4294901760
    %v755 = vsub.f32 %v595, %v754
    %v756 = vand.u32 %v755, 4294901760
    %v757 = vsub.f32 %v755, %v756
    %v758 = vand.u32 %v757, 4294901760
    %759 = vmatpush1.msra.mxu0 %v758
    %760 = vmatprep.subr.mxu0 0.0
    %v761 = vand.u32 %v596, 4294901760
    %v762 = vsub.f32 %v596, %v761
    %v763 = vand.u32 %v762, 4294901760
    %v764 = vsub.f32 %v762, %v763
    %v765 = vand.u32 %v764, 4294901760
    %766 = vmatpush1.msra.mxu0 %v765
    %767 = vmatprep.subr.mxu0 0.0
    %v768 = vand.u32 %v597, 4294901760
    %v769 = vsub.f32 %v597, %v768
    %v770 = vand.u32 %v769, 4294901760
    %v771 = vsub.f32 %v769, %v770
    %v772 = vand.u32 %v771, 4294901760
    %773 = vmatpush1.msra.mxu0 %v772
    %774 = vmatprep.subr.mxu0 0.0
    %v775 = vand.u32 %v598, 4294901760
    %v776 = vsub.f32 %v598, %v775
    %v777 = vand.u32 %v776, 4294901760
    %v778 = vsub.f32 %v776, %v777
    %v779 = vand.u32 %v778, 4294901760
    %780 = vmatpush1.msra.mxu0 %v779
    %781 = vmatprep.subr.mxu0 0.0
    %v782 = vand.u32 %v599, 4294901760
    %v783 = vsub.f32 %v599, %v782
    %v784 = vand.u32 %v783, 4294901760
    %v785 = vsub.f32 %v783, %v784
    %v786 = vand.u32 %v785, 4294901760
    %787 = vmatpush1.msra.mxu0 %v786
    %788 = vmatprep.subr.mxu0 0.0
    %789 = vmatpush1.msra.mxu0 0.0
    %790 = vmatprep.subr.mxu0 0.0
    %791 = vmatpush1.msra.mxu0 0.0
    %792 = vmatprep.subr.mxu0 0.0
    %793 = vmatpush1.msra.mxu0 0.0
    %794 = vmatprep.subr.mxu0 0.0
    %795 = vmatpush1.msra.mxu0 0.0
    %796 = vmatprep.subr.mxu0 0.0
    %797 = vmatpush1.msra.mxu0 0.0
    %798 = vmatprep.subr.mxu0 0.0
    %799 = vmatpush1.msra.mxu0 0.0
    %800 = vmatprep.subr.mxu0 0.0
    %801 = vmatpush1.msra.mxu0 0.0
    %802 = vmatprep.subr.mxu0 0.0
    %803 = vmatpush1.msra.mxu0 0.0
    %804 = vmatprep.subr.mxu0 0.0
    %805 = vmatpush1.msra.mxu0 0.0
    %806 = vmatprep.subr.mxu0 0.0
    %807 = vmatpush1.msra.mxu0 0.0
    %808 = vmatprep.subr.mxu0 0.0
    %809 = vmatpush1.msra.mxu0 0.0
    %810 = vmatprep.subr.mxu0 0.0
    %811 = vmatpush1.msra.mxu0 0.0
    %812 = vmatprep.subr.mxu0 0.0
    %813 = vmatpush1.msra.mxu0 0.0
    %814 = vmatprep.subr.mxu0 0.0
    %815 = vmatpush1.msra.mxu0 0.0
    %816 = vmatprep.subr.mxu0 0.0
    %817 = vmatpush1.msra.mxu0 0.0
    %818 = vmatprep.subr.mxu0 0.0
    %819 = vmatpush1.msra.mxu0 0.0
    %820 = vmatprep.subr.mxu0 0.0
    %821 = vmatpush1.msra.mxu0 0.0
    %822 = vmatprep.subr.mxu0 0.0
    %823 = vmatpush1.msra.mxu0 0.0
    %824 = vmatprep.subr.mxu0 0.0
    %825 = vmatpush1.msra.mxu0 0.0
    %826 = vmatprep.subr.mxu0 0.0
    %827 = vmatpush1.msra.mxu0 0.0
    %828 = vmatprep.mubr.f32.mxu0 0.0
    %v829 = vand.u32 %v602, 4294901760
    %830 = vmatmul.mubr.f32.gmra.mrb[0].mxu0 %v829
    %v831 = vpop.f32.mrb[0].mxu0
    %v832 = vadd.f32 %v691, %v831
    %v833 = vpop.f32.mrb[0].mxu0
    %834 = vmatprep.mubr.f32.mxu0 0.0
    %v835 = vand.u32 %v605, 4294901760
    %836 = vmatmul.mubr.f32.gmra.mrb[0].mxu0 %v835
    %v837 = vpop.f32.mrb[0].mxu0
    %v838 = vadd.f32 %v701, %v837
    %v839 = vpop.f32.mrb[0].mxu0
    %840 = vdwg.mxu0
    %841 = vmatprep.subr.mxu0 0.0
    %v842 = vand.u32 %v588, 4294901760
    %v843 = vsub.f32 %v588, %v842
    %844 = vmatpush1.msra.mxu0 %v843
    %845 = vmatprep.subr.mxu0 0.0
    %v846 = vand.u32 %v589, 4294901760
    %v847 = vsub.f32 %v589, %v846
    %848 = vmatpush1.msra.mxu0 %v847
    %849 = vmatprep.subr.mxu0 0.0
    %v850 = vand.u32 %v590, 4294901760
    %v851 = vsub.f32 %v590, %v850
    %852 = vmatpush1.msra.mxu0 %v851
    %853 = vmatprep.subr.mxu0 0.0
    %v854 = vand.u32 %v591, 4294901760
    %v855 = vsub.f32 %v591, %v854
    %856 = vmatpush1.msra.mxu0 %v855
    %857 = vmatprep.subr.mxu0 0.0
    %v858 = vand.u32 %v592, 4294901760
    %v859 = vsub.f32 %v592, %v858
    %860 = vmatpush1.msra.mxu0 %v859
    %861 = vmatprep.subr.mxu0 0.0
    %v862 = vand.u32 %v593, 4294901760
    %v863 = vsub.f32 %v593, %v862
    %864 = vmatpush1.msra.mxu0 %v863
    %865 = vmatprep.subr.mxu0 0.0
    %v866 = vand.u32 %v594, 4294901760
    %v867 = vsub.f32 %v594, %v866
    %868 = vmatpush1.msra.mxu0 %v867
    %869 = vmatprep.subr.mxu0 0.0
    %v870 = vand.u32 %v595, 4294901760
    %v871 = vsub.f32 %v595, %v870
    %872 = vmatpush1.msra.mxu0 %v871
    %873 = vmatprep.subr.mxu0 0.0
    %v874 = vand.u32 %v596, 4294901760
    %v875 = vsub.f32 %v596, %v874
    %876 = vmatpush1.msra.mxu0 %v875
    %877 = vmatprep.subr.mxu0 0.0
    %v878 = vand.u32 %v597, 4294901760
    %v879 = vsub.f32 %v597, %v878
    %880 = vmatpush1.msra.mxu0 %v879
    %881 = vmatprep.subr.mxu0 0.0
    %v882 = vand.u32 %v598, 4294901760
    %v883 = vsub.f32 %v598, %v882
    %884 = vmatpush1.msra.mxu0 %v883
    %885 = vmatprep.subr.mxu0 0.0
    %v886 = vand.u32 %v599, 4294901760
    %v887 = vsub.f32 %v599, %v886
    %888 = vmatpush1.msra.mxu0 %v887
    %889 = vmatprep.subr.mxu0 0.0
    %890 = vmatpush1.msra.mxu0 0.0
    %891 = vmatprep.subr.mxu0 0.0
    %892 = vmatpush1.msra.mxu0 0.0
    %893 = vmatprep.subr.mxu0 0.0
    %894 = vmatpush1.msra.mxu0 0.0
    %895 = vmatprep.subr.mxu0 0.0
    %896 = vmatpush1.msra.mxu0 0.0
    %897 = vmatprep.subr.mxu0 0.0
    %898 = vmatpush1.msra.mxu0 0.0
    %899 = vmatprep.subr.mxu0 0.0
    %900 = vmatpush1.msra.mxu0 0.0
    %901 = vmatprep.subr.mxu0 0.0
    %902 = vmatpush1.msra.mxu0 0.0
    %903 = vmatprep.subr.mxu0 0.0
    %904 = vmatpush1.msra.mxu0 0.0
    %905 = vmatprep.subr.mxu0 0.0
    %906 = vmatpush1.msra.mxu0 0.0
    %907 = vmatprep.subr.mxu0 0.0
    %908 = vmatpush1.msra.mxu0 0.0
    %909 = vmatprep.subr.mxu0 0.0
    %910 = vmatpush1.msra.mxu0 0.0
    %911 = vmatprep.subr.mxu0 0.0
    %912 = vmatpush1.msra.mxu0 0.0
    %913 = vmatprep.subr.mxu0 0.0
    %914 = vmatpush1.msra.mxu0 0.0
    %915 = vmatprep.subr.mxu0 0.0
    %916 = vmatpush1.msra.mxu0 0.0
    %917 = vmatprep.subr.mxu0 0.0
    %918 = vmatpush1.msra.mxu0 0.0
    %919 = vmatprep.subr.mxu0 0.0
    %920 = vmatpush1.msra.mxu0 0.0
    %921 = vmatprep.subr.mxu0 0.0
    %922 = vmatpush1.msra.mxu0 0.0
    %923 = vmatprep.subr.mxu0 0.0
    %924 = vmatpush1.msra.mxu0 0.0
    %925 = vmatprep.subr.mxu0 0.0
    %926 = vmatpush1.msra.mxu0 0.0
    %927 = vmatprep.subr.mxu0 0.0
    %928 = vmatpush1.msra.mxu0 0.0
    %929 = vmatprep.mubr.f32.mxu0 0.0
    %v930 = vand.u32 %v602, 4294901760
    %v931 = vsub.f32 %v602, %v930
    %932 = vmatmul.mubr.f32.gmra.mrb[0].mxu0 %v931
    %v933 = vpop.f32.mrb[0].mxu0
    %v934 = vadd.f32 %v832, %v933
    %v935 = vpop.f32.mrb[0].mxu0
    %936 = vmatprep.mubr.f32.mxu0 0.0
    %v937 = vand.u32 %v605, 4294901760
    %v938 = vsub.f32 %v605, %v937
    %939 = vmatmul.mubr.f32.gmra.mrb[0].mxu0 %v938
    %v940 = vpop.f32.mrb[0].mxu0
    %v941 = vadd.f32 %v838, %v940
    %v942 = vpop.f32.mrb[0].mxu0
    %943 = vdwg.mxu0
    %944 = vmatprep.subr.mxu0 0.0
    %v945 = vand.u32 %v588, 4294901760
    %946 = vmatpush1.msra.mxu0 %v945
    %947 = vmatprep.subr.mxu0 0.0
    %v948 = vand.u32 %v589, 4294901760
    %949 = vmatpush1.msra.mxu0 %v948
    %950 = vmatprep.subr.mxu0 0.0
    %v951 = vand.u32 %v590, 4294901760
    %952 = vmatpush1.msra.mxu0 %v951
    %953 = vmatprep.subr.mxu0 0.0
    %v954 = vand.u32 %v591, 4294901760
    %955 = vmatpush1.msra.mxu0 %v954
    %956 = vmatprep.subr.mxu0 0.0
    %v957 = vand.u32 %v592, 4294901760
    %958 = vmatpush1.msra.mxu0 %v957
    %959 = vmatprep.subr.mxu0 0.0
    %v960 = vand.u32 %v593, 4294901760
    %961 = vmatpush1.msra.mxu0 %v960
    %962 = vmatprep.subr.mxu0 0.0
    %v963 = vand.u32 %v594, 4294901760
    %964 = vmatpush1.msra.mxu0 %v963
    %965 = vmatprep.subr.mxu0 0.0
    %v966 = vand.u32 %v595, 4294901760
    %967 = vmatpush1.msra.mxu0 %v966
    %968 = vmatprep.subr.mxu0 0.0
    %v969 = vand.u32 %v596, 4294901760
    %970 = vmatpush1.msra.mxu0 %v969
    %971 = vmatprep.subr.mxu0 0.0
    %v972 = vand.u32 %v597, 4294901760
    %973 = vmatpush1.msra.mxu0 %v972
    %974 = vmatprep.subr.mxu0 0.0
    %v975 = vand.u32 %v598, 4294901760
    %976 = vmatpush1.msra.mxu0 %v975
    %977 = vmatprep.subr.mxu0 0.0
    %v978 = vand.u32 %v599, 4294901760
    %979 = vmatpush1.msra.mxu0 %v978
    %980 = vmatprep.subr.mxu0 0.0
    %981 = vmatpush1.msra.mxu0 0.0
    %982 = vmatprep.subr.mxu0 0.0
    %983 = vmatpush1.msra.mxu0 0.0
    %984 = vmatprep.subr.mxu0 0.0
    %985 = vmatpush1.msra.mxu0 0.0
    %986 = vmatprep.subr.mxu0 0.0
    %987 = vmatpush1.msra.mxu0 0.0
    %988 = vmatprep.subr.mxu0 0.0
    %989 = vmatpush1.msra.mxu0 0.0
    %990 = vmatprep.subr.mxu0 0.0
    %991 = vmatpush1.msra.mxu0 0.0
    %992 = vmatprep.subr.mxu0 0.0
    %993 = vmatpush1.msra.mxu0 0.0
    %994 = vmatprep.subr.mxu0 0.0
    %995 = vmatpush1.msra.mxu0 0.0
    %996 = vmatprep.subr.mxu0 0.0
    %997 = vmatpush1.msra.mxu0 0.0
    %998 = vmatprep.subr.mxu0 0.0
    %999 = vmatpush1.msra.mxu0 0.0
    %1000 = vmatprep.subr.mxu0 0.0
    %1001 = vmatpush1.msra.mxu0 0.0
    %1002 = vmatprep.subr.mxu0 0.0
    %1003 = vmatpush1.msra.mxu0 0.0
    %1004 = vmatprep.subr.mxu0 0.0
    %1005 = vmatpush1.msra.mxu0 0.0
    %1006 = vmatprep.subr.mxu0 0.0
    %1007 = vmatpush1.msra.mxu0 0.0
    %1008 = vmatprep.subr.mxu0 0.0
    %1009 = vmatpush1.msra.mxu0 0.0
    %1010 = vmatprep.subr.mxu0 0.0
    %1011 = vmatpush1.msra.mxu0 0.0
    %1012 = vmatprep.subr.mxu0 0.0
    %1013 = vmatpush1.msra.mxu0 0.0
    %1014 = vmatprep.subr.mxu0 0.0
    %1015 = vmatpush1.msra.mxu0 0.0
    %1016 = vmatprep.subr.mxu0 0.0
    %1017 = vmatpush1.msra.mxu0 0.0
    %1018 = vmatprep.subr.mxu0 0.0
    %1019 = vmatpush1.msra.mxu0 0.0
    %1020 = vmatprep.mubr.f32.mxu0 0.0
    %v1021 = vand.u32 %v602, 4294901760
    %v1022 = vsub.f32 %v602, %v1021
    %v1023 = vand.u32 %v1022, 4294901760
    %1024 = vmatmul.mubr.f32.gmra.mrb[0].mxu0 %v1023
    %v1025 = vpop.f32.mrb[0].mxu0
    %v1026 = vadd.f32 %v934, %v1025
    %v1027 = vpop.f32.mrb[0].mxu0
    %1028 = vmatprep.mubr.f32.mxu0 0.0
    %v1029 = vand.u32 %v605, 4294901760
    %v1030 = vsub.f32 %v605, %v1029
    %v1031 = vand.u32 %v1030, 4294901760
    %1032 = vmatmul.mubr.f32.gmra.mrb[0].mxu0 %v1031
    %v1033 = vpop.f32.mrb[0].mxu0
    %v1034 = vadd.f32 %v941, %v1033
    %v1035 = vpop.f32.mrb[0].mxu0
    %1036 = vdwg.mxu0
    %1037 = vmatprep.subr.mxu0 0.0
    %v1038 = vand.u32 %v588, 4294901760
    %v1039 = vsub.f32 %v588, %v1038
    %v1040 = vand.u32 %v1039, 4294901760
    %1041 = vmatpush1.msra.mxu0 %v1040
    %1042 = vmatprep.subr.mxu0 0.0
    %v1043 = vand.u32 %v589, 4294901760
    %v1044 = vsub.f32 %v589, %v1043
    %v1045 = vand.u32 %v1044, 4294901760
    %1046 = vmatpush1.msra.mxu0 %v1045
    %1047 = vmatprep.subr.mxu0 0.0
    %v1048 = vand.u32 %v590, 4294901760
    %v1049 = vsub.f32 %v590, %v1048
    %v1050 = vand.u32 %v1049, 4294901760
    %1051 = vmatpush1.msra.mxu0 %v1050
    %1052 = vmatprep.subr.mxu0 0.0
    %v1053 = vand.u32 %v591, 4294901760
    %v1054 = vsub.f32 %v591, %v1053
    %v1055 = vand.u32 %v1054, 4294901760
    %1056 = vmatpush1.msra.mxu0 %v1055
    %1057 = vmatprep.subr.mxu0 0.0
    %v1058 = vand.u32 %v592, 4294901760
    %v1059 = vsub.f32 %v592, %v1058
    %v1060 = vand.u32 %v1059, 4294901760
    %1061 = vmatpush1.msra.mxu0 %v1060
    %1062 = vmatprep.subr.mxu0 0.0
    %v1063 = vand.u32 %v593, 4294901760
    %v1064 = vsub.f32 %v593, %v1063
    %v1065 = vand.u32 %v1064, 4294901760
    %1066 = vmatpush1.msra.mxu0 %v1065
    %1067 = vmatprep.subr.mxu0 0.0
    %v1068 = vand.u32 %v594, 4294901760
    %v1069 = vsub.f32 %v594, %v1068
    %v1070 = vand.u32 %v1069, 4294901760
    %1071 = vmatpush1.msra.mxu0 %v1070
    %1072 = vmatprep.subr.mxu0 0.0
    %v1073 = vand.u32 %v595, 4294901760
    %v1074 = vsub.f32 %v595, %v1073
    %v1075 = vand.u32 %v1074, 4294901760
    %1076 = vmatpush1.msra.mxu0 %v1075
    %1077 = vmatprep.subr.mxu0 0.0
    %v1078 = vand.u32 %v596, 4294901760
    %v1079 = vsub.f32 %v596, %v1078
    %v1080 = vand.u32 %v1079, 4294901760
    %1081 = vmatpush1.msra.mxu0 %v1080
    %1082 = vmatprep.subr.mxu0 0.0
    %v1083 = vand.u32 %v597, 4294901760
    %v1084 = vsub.f32 %v597, %v1083
    %v1085 = vand.u32 %v1084, 4294901760
    %1086 = vmatpush1.msra.mxu0 %v1085
    %1087 = vmatprep.subr.mxu0 0.0
    %v1088 = vand.u32 %v598, 4294901760
    %v1089 = vsub.f32 %v598, %v1088
    %v1090 = vand.u32 %v1089, 4294901760
    %1091 = vmatpush1.msra.mxu0 %v1090
    %1092 = vmatprep.subr.mxu0 0.0
    %v1093 = vand.u32 %v599, 4294901760
    %v1094 = vsub.f32 %v599, %v1093
    %v1095 = vand.u32 %v1094, 4294901760
    %1096 = vmatpush1.msra.mxu0 %v1095
    %1097 = vmatprep.subr.mxu0 0.0
    %1098 = vmatpush1.msra.mxu0 0.0
    %1099 = vmatprep.subr.mxu0 0.0
    %1100 = vmatpush1.msra.mxu0 0.0
    %1101 = vmatprep.subr.mxu0 0.0
    %1102 = vmatpush1.msra.mxu0 0.0
    %1103 = vmatprep.subr.mxu0 0.0
    %1104 = vmatpush1.msra.mxu0 0.0
    %1105 = vmatprep.subr.mxu0 0.0
    %1106 = vmatpush1.msra.mxu0 0.0
    %1107 = vmatprep.subr.mxu0 0.0
    %1108 = vmatpush1.msra.mxu0 0.0
    %1109 = vmatprep.subr.mxu0 0.0
    %1110 = vmatpush1.msra.mxu0 0.0
    %1111 = vmatprep.subr.mxu0 0.0
    %1112 = vmatpush1.msra.mxu0 0.0
    %1113 = vmatprep.subr.mxu0 0.0
    %1114 = vmatpush1.msra.mxu0 0.0
    %1115 = vmatprep.subr.mxu0 0.0
    %1116 = vmatpush1.msra.mxu0 0.0
    %1117 = vmatprep.subr.mxu0 0.0
    %1118 = vmatpush1.msra.mxu0 0.0
    %1119 = vmatprep.subr.mxu0 0.0
    %1120 = vmatpush1.msra.mxu0 0.0
    %1121 = vmatprep.subr.mxu0 0.0
    %1122 = vmatpush1.msra.mxu0 0.0
    %1123 = vmatprep.subr.mxu0 0.0
    %1124 = vmatpush1.msra.mxu0 0.0
    %1125 = vmatprep.subr.mxu0 0.0
    %1126 = vmatpush1.msra.mxu0 0.0
    %1127 = vmatprep.subr.mxu0 0.0
    %1128 = vmatpush1.msra.mxu0 0.0
    %1129 = vmatprep.subr.mxu0 0.0
    %1130 = vmatpush1.msra.mxu0 0.0
    %1131 = vmatprep.subr.mxu0 0.0
    %1132 = vmatpush1.msra.mxu0 0.0
    %1133 = vmatprep.subr.mxu0 0.0
    %1134 = vmatpush1.msra.mxu0 0.0
    %1135 = vmatprep.subr.mxu0 0.0
    %1136 = vmatpush1.msra.mxu0 0.0
    %1137 = vmatprep.mubr.f32.mxu0 0.0
    %v1138 = vand.u32 %v602, 4294901760
    %1139 = vmatmul.mubr.f32.gmra.mrb[0].mxu0 %v1138
    %v1140 = vpop.f32.mrb[0].mxu0
    %v1141 = vadd.f32 %v1026, %v1140
    %v1142 = vpop.f32.mrb[0].mxu0
    %1143 = vmatprep.mubr.f32.mxu0 0.0
    %v1144 = vand.u32 %v605, 4294901760
    %1145 = vmatmul.mubr.f32.gmra.mrb[0].mxu0 %v1144
    %v1146 = vpop.f32.mrb[0].mxu0
    %v1147 = vadd.f32 %v1034, %v1146
    %v1148 = vpop.f32.mrb[0].mxu0
    %1149 = vdwg.mxu0
    %1150 = vmatprep.subr.mxu0 0.0
    %v1151 = vand.u32 %v588, 4294901760
    %1152 = vmatpush1.msra.mxu0 %v1151
    %1153 = vmatprep.subr.mxu0 0.0
    %v1154 = vand.u32 %v589, 4294901760
    %1155 = vmatpush1.msra.mxu0 %v1154
    %1156 = vmatprep.subr.mxu0 0.0
    %v1157 = vand.u32 %v590, 4294901760
    %1158 = vmatpush1.msra.mxu0 %v1157
    %1159 = vmatprep.subr.mxu0 0.0
    %v1160 = vand.u32 %v591, 4294901760
    %1161 = vmatpush1.msra.mxu0 %v1160
    %1162 = vmatprep.subr.mxu0 0.0
    %v1163 = vand.u32 %v592, 4294901760
    %1164 = vmatpush1.msra.mxu0 %v1163
    %1165 = vmatprep.subr.mxu0 0.0
    %v1166 = vand.u32 %v593, 4294901760
    %1167 = vmatpush1.msra.mxu0 %v1166
    %1168 = vmatprep.subr.mxu0 0.0
    %v1169 = vand.u32 %v594, 4294901760
    %1170 = vmatpush1.msra.mxu0 %v1169
    %1171 = vmatprep.subr.mxu0 0.0
    %v1172 = vand.u32 %v595, 4294901760
    %1173 = vmatpush1.msra.mxu0 %v1172
    %1174 = vmatprep.subr.mxu0 0.0
    %v1175 = vand.u32 %v596, 4294901760
    %1176 = vmatpush1.msra.mxu0 %v1175
    %1177 = vmatprep.subr.mxu0 0.0
    %v1178 = vand.u32 %v597, 4294901760
    %1179 = vmatpush1.msra.mxu0 %v1178
    %1180 = vmatprep.subr.mxu0 0.0
    %v1181 = vand.u32 %v598, 4294901760
    %1182 = vmatpush1.msra.mxu0 %v1181
    %1183 = vmatprep.subr.mxu0 0.0
    %v1184 = vand.u32 %v599, 4294901760
    %1185 = vmatpush1.msra.mxu0 %v1184
    %1186 = vmatprep.subr.mxu0 0.0
    %1187 = vmatpush1.msra.mxu0 0.0
    %1188 = vmatprep.subr.mxu0 0.0
    %1189 = vmatpush1.msra.mxu0 0.0
    %1190 = vmatprep.subr.mxu0 0.0
    %1191 = vmatpush1.msra.mxu0 0.0
    %1192 = vmatprep.subr.mxu0 0.0
    %1193 = vmatpush1.msra.mxu0 0.0
    %1194 = vmatprep.subr.mxu0 0.0
    %1195 = vmatpush1.msra.mxu0 0.0
    %1196 = vmatprep.subr.mxu0 0.0
    %1197 = vmatpush1.msra.mxu0 0.0
    %1198 = vmatprep.subr.mxu0 0.0
    %1199 = vmatpush1.msra.mxu0 0.0
    %1200 = vmatprep.subr.mxu0 0.0
    %1201 = vmatpush1.msra.mxu0 0.0
    %1202 = vmatprep.subr.mxu0 0.0
    %1203 = vmatpush1.msra.mxu0 0.0
    %1204 = vmatprep.subr.mxu0 0.0
    %1205 = vmatpush1.msra.mxu0 0.0
    %1206 = vmatprep.subr.mxu0 0.0
    %1207 = vmatpush1.msra.mxu0 0.0
    %1208 = vmatprep.subr.mxu0 0.0
    %1209 = vmatpush1.msra.mxu0 0.0
    %1210 = vmatprep.subr.mxu0 0.0
    %1211 = vmatpush1.msra.mxu0 0.0
    %1212 = vmatprep.subr.mxu0 0.0
    %1213 = vmatpush1.msra.mxu0 0.0
    %1214 = vmatprep.subr.mxu0 0.0
    %1215 = vmatpush1.msra.mxu0 0.0
    %1216 = vmatprep.subr.mxu0 0.0
    %1217 = vmatpush1.msra.mxu0 0.0
    %1218 = vmatprep.subr.mxu0 0.0
    %1219 = vmatpush1.msra.mxu0 0.0
    %1220 = vmatprep.subr.mxu0 0.0
    %1221 = vmatpush1.msra.mxu0 0.0
    %1222 = vmatprep.subr.mxu0 0.0
    %1223 = vmatpush1.msra.mxu0 0.0
    %1224 = vmatprep.subr.mxu0 0.0
    %1225 = vmatpush1.msra.mxu0 0.0
    %1226 = vmatprep.mubr.f32.mxu0 0.0
    %v1227 = vand.u32 %v602, 4294901760
    %1228 = vmatmul.mubr.f32.gmra.mrb[0].mxu0 %v1227
    %v1229 = vpop.f32.mrb[0].mxu0
    %v1230 = vadd.f32 %v1141, %v1229
    %v1231 = vpop.f32.mrb[0].mxu0
    %1232 = vmatprep.mubr.f32.mxu0 0.0
    %v1233 = vand.u32 %v605, 4294901760
    %1234 = vmatmul.mubr.f32.gmra.mrb[0].mxu0 %v1233
    %v1235 = vpop.f32.mrb[0].mxu0
    %v1236 = vadd.f32 %v1147, %v1235
    %v1237 = vpop.f32.mrb[0].mxu0
    %1238 = vdwg.mxu0
    %1239 = vmatprep.subr.mxu0 0.0
    %v1240 = vand.u32 %v75, 4294901760
    %1241 = vmatpush1.msra.mxu0 %v1240
    %1242 = vmatprep.subr.mxu0 0.0
    %v1243 = vand.u32 %v76, 4294901760
    %1244 = vmatpush1.msra.mxu0 %v1243
    %1245 = vmatprep.subr.mxu0 0.0
    %1246 = vmatpush1.msra.mxu0 0.0
    %1247 = vmatprep.subr.mxu0 0.0
    %1248 = vmatpush1.msra.mxu0 0.0
    %1249 = vmatprep.subr.mxu0 0.0
    %1250 = vmatpush1.msra.mxu0 0.0
    %1251 = vmatprep.subr.mxu0 0.0
    %1252 = vmatpush1.msra.mxu0 0.0
    %1253 = vmatprep.subr.mxu0 0.0
    %1254 = vmatpush1.msra.mxu0 0.0
    %1255 = vmatprep.subr.mxu0 0.0
    %1256 = vmatpush1.msra.mxu0 0.0
    %1257 = vmatprep.subr.mxu0 0.0
    %1258 = vmatpush1.msra.mxu0 0.0
    %1259 = vmatprep.subr.mxu0 0.0
    %1260 = vmatpush1.msra.mxu0 0.0
    %1261 = vmatprep.subr.mxu0 0.0
    %1262 = vmatpush1.msra.mxu0 0.0
    %1263 = vmatprep.subr.mxu0 0.0
    %1264 = vmatpush1.msra.mxu0 0.0
    %1265 = vmatprep.subr.mxu0 0.0
    %1266 = vmatpush1.msra.mxu0 0.0
    %1267 = vmatprep.subr.mxu0 0.0
    %1268 = vmatpush1.msra.mxu0 0.0
    %1269 = vmatprep.subr.mxu0 0.0
    %1270 = vmatpush1.msra.mxu0 0.0
    %1271 = vmatprep.subr.mxu0 0.0
    %1272 = vmatpush1.msra.mxu0 0.0
    %1273 = vmatprep.subr.mxu0 0.0
    %1274 = vmatpush1.msra.mxu0 0.0
    %1275 = vmatprep.subr.mxu0 0.0
    %1276 = vmatpush1.msra.mxu0 0.0
    %1277 = vmatprep.subr.mxu0 0.0
    %1278 = vmatpush1.msra.mxu0 0.0
    %1279 = vmatprep.subr.mxu0 0.0
    %1280 = vmatpush1.msra.mxu0 0.0
    %1281 = vmatprep.subr.mxu0 0.0
    %1282 = vmatpush1.msra.mxu0 0.0
    %1283 = vmatprep.subr.mxu0 0.0
    %1284 = vmatpush1.msra.mxu0 0.0
    %1285 = vmatprep.subr.mxu0 0.0
    %1286 = vmatpush1.msra.mxu0 0.0
    %1287 = vmatprep.subr.mxu0 0.0
    %1288 = vmatpush1.msra.mxu0 0.0
    %1289 = vmatprep.subr.mxu0 0.0
    %1290 = vmatpush1.msra.mxu0 0.0
    %1291 = vmatprep.subr.mxu0 0.0
    %1292 = vmatpush1.msra.mxu0 0.0
    %1293 = vmatprep.subr.mxu0 0.0
    %1294 = vmatpush1.msra.mxu0 0.0
    %1295 = vmatprep.subr.mxu0 0.0
    %1296 = vmatpush1.msra.mxu0 0.0
    %1297 = vmatprep.subr.mxu0 0.0
    %1298 = vmatpush1.msra.mxu0 0.0
    %1299 = vmatprep.subr.mxu0 0.0
    %1300 = vmatpush1.msra.mxu0 0.0
    %1301 = vmatprep.subr.mxu0 0.0
    %1302 = vmatpush1.msra.mxu0 0.0
    %1303 = vmatprep.subr.mxu0 0.0
    %1304 = vmatpush1.msra.mxu0 0.0
    %1305 = vmatprep.mubr.f32.mxu0 0.0
    %v1306 = vand.u32 %v81, 4294901760
    %v1307 = vsub.f32 %v81, %v1306
    %v1308 = vand.u32 %v1307, 4294901760
    %v1309 = vsub.f32 %v1307, %v1308
    %v1310 = vand.u32 %v1309, 4294901760
    %1311 = vmatmul.mubr.f32.gmra.mrb[0].mxu0 %v1310
    %v1312 = vpop.f32.mrb[0].mxu0
    %v1313 = vadd.f32 0.0, %v1312
    %v1314 = vpop.f32.mrb[0].mxu0
    %1315 = vmatprep.mubr.f32.mxu0 0.0
    %v1316 = vand.u32 %v84, 4294901760
    %v1317 = vsub.f32 %v84, %v1316
    %v1318 = vand.u32 %v1317, 4294901760
    %v1319 = vsub.f32 %v1317, %v1318
    %v1320 = vand.u32 %v1319, 4294901760
    %1321 = vmatmul.mubr.f32.gmra.mrb[0].mxu0 %v1320
    %v1322 = vpop.f32.mrb[0].mxu0
    %v1323 = vadd.f32 0.0, %v1322
    %v1324 = vpop.f32.mrb[0].mxu0
    %1325 = vdwg.mxu0
    %1326 = vmatprep.subr.mxu0 0.0
    %v1327 = vand.u32 %v75, 4294901760
    %v1328 = vsub.f32 %v75, %v1327
    %v1329 = vand.u32 %v1328, 4294901760
    %v1330 = vsub.f32 %v1328, %v1329
    %v1331 = vand.u32 %v1330, 4294901760
    %1332 = vmatpush1.msra.mxu0 %v1331
    %1333 = vmatprep.subr.mxu0 0.0
    %v1334 = vand.u32 %v76, 4294901760
    %v1335 = vsub.f32 %v76, %v1334
    %v1336 = vand.u32 %v1335, 4294901760
    %v1337 = vsub.f32 %v1335, %v1336
    %v1338 = vand.u32 %v1337, 4294901760
    %1339 = vmatpush1.msra.mxu0 %v1338
    %1340 = vmatprep.subr.mxu0 0.0
    %1341 = vmatpush1.msra.mxu0 0.0
    %1342 = vmatprep.subr.mxu0 0.0
    %1343 = vmatpush1.msra.mxu0 0.0
    %1344 = vmatprep.subr.mxu0 0.0
    %1345 = vmatpush1.msra.mxu0 0.0
    %1346 = vmatprep.subr.mxu0 0.0
    %1347 = vmatpush1.msra.mxu0 0.0
    %1348 = vmatprep.subr.mxu0 0.0
    %1349 = vmatpush1.msra.mxu0 0.0
    %1350 = vmatprep.subr.mxu0 0.0
    %1351 = vmatpush1.msra.mxu0 0.0
    %1352 = vmatprep.subr.mxu0 0.0
    %1353 = vmatpush1.msra.mxu0 0.0
    %1354 = vmatprep.subr.mxu0 0.0
    %1355 = vmatpush1.msra.mxu0 0.0
    %1356 = vmatprep.subr.mxu0 0.0
    %1357 = vmatpush1.msra.mxu0 0.0
    %1358 = vmatprep.subr.mxu0 0.0
    %1359 = vmatpush1.msra.mxu0 0.0
    %1360 = vmatprep.subr.mxu0 0.0
    %1361 = vmatpush1.msra.mxu0 0.0
    %1362 = vmatprep.subr.mxu0 0.0
    %1363 = vmatpush1.msra.mxu0 0.0
    %1364 = vmatprep.subr.mxu0 0.0
    %1365 = vmatpush1.msra.mxu0 0.0
    %1366 = vmatprep.subr.mxu0 0.0
    %1367 = vmatpush1.msra.mxu0 0.0
    %1368 = vmatprep.subr.mxu0 0.0
    %1369 = vmatpush1.msra.mxu0 0.0
    %1370 = vmatprep.subr.mxu0 0.0
    %1371 = vmatpush1.msra.mxu0 0.0
    %1372 = vmatprep.subr.mxu0 0.0
    %1373 = vmatpush1.msra.mxu0 0.0
    %1374 = vmatprep.subr.mxu0 0.0
    %1375 = vmatpush1.msra.mxu0 0.0
    %1376 = vmatprep.subr.mxu0 0.0
    %1377 = vmatpush1.msra.mxu0 0.0
    %1378 = vmatprep.subr.mxu0 0.0
    %1379 = vmatpush1.msra.mxu0 0.0
    %1380 = vmatprep.subr.mxu0 0.0
    %1381 = vmatpush1.msra.mxu0 0.0
    %1382 = vmatprep.subr.mxu0 0.0
    %1383 = vmatpush1.msra.mxu0 0.0
    %1384 = vmatprep.subr.mxu0 0.0
    %1385 = vmatpush1.msra.mxu0 0.0
    %1386 = vmatprep.subr.mxu0 0.0
    %1387 = vmatpush1.msra.mxu0 0.0
    %1388 = vmatprep.subr.mxu0 0.0
    %1389 = vmatpush1.msra.mxu0 0.0
    %1390 = vmatprep.subr.mxu0 0.0
    %1391 = vmatpush1.msra.mxu0 0.0
    %1392 = vmatprep.subr.mxu0 0.0
    %1393 = vmatpush1.msra.mxu0 0.0
    %1394 = vmatprep.subr.mxu0 0.0
    %1395 = vmatpush1.msra.mxu0 0.0
    %1396 = vmatprep.subr.mxu0 0.0
    %1397 = vmatpush1.msra.mxu0 0.0
    %1398 = vmatprep.subr.mxu0 0.0
    %1399 = vmatpush1.msra.mxu0 0.0
    %1400 = vmatprep.mubr.f32.mxu0 0.0
    %v1401 = vand.u32 %v81, 4294901760
    %1402 = vmatmul.mubr.f32.gmra.mrb[0].mxu0 %v1401
    %v1403 = vpop.f32.mrb[0].mxu0
    %v1404 = vadd.f32 %v1313, %v1403
    %v1405 = vpop.f32.mrb[0].mxu0
    %1406 = vmatprep.mubr.f32.mxu0 0.0
    %v1407 = vand.u32 %v84, 4294901760
    %1408 = vmatmul.mubr.f32.gmra.mrb[0].mxu0 %v1407
    %v1409 = vpop.f32.mrb[0].mxu0
    %v1410 = vadd.f32 %v1323, %v1409
    %v1411 = vpop.f32.mrb[0].mxu0
    %1412 = vdwg.mxu0
    %1413 = vmatprep.subr.mxu0 0.0
    %v1414 = vand.u32 %v75, 4294901760
    %v1415 = vsub.f32 %v75, %v1414
    %1416 = vmatpush1.msra.mxu0 %v1415
    %1417 = vmatprep.subr.mxu0 0.0
    %v1418 = vand.u32 %v76, 4294901760
    %v1419 = vsub.f32 %v76, %v1418
    %1420 = vmatpush1.msra.mxu0 %v1419
    %1421 = vmatprep.subr.mxu0 0.0
    %1422 = vmatpush1.msra.mxu0 0.0
    %1423 = vmatprep.subr.mxu0 0.0
    %1424 = vmatpush1.msra.mxu0 0.0
    %1425 = vmatprep.subr.mxu0 0.0
    %1426 = vmatpush1.msra.mxu0 0.0
    %1427 = vmatprep.subr.mxu0 0.0
    %1428 = vmatpush1.msra.mxu0 0.0
    %1429 = vmatprep.subr.mxu0 0.0
    %1430 = vmatpush1.msra.mxu0 0.0
    %1431 = vmatprep.subr.mxu0 0.0
    %1432 = vmatpush1.msra.mxu0 0.0
    %1433 = vmatprep.subr.mxu0 0.0
    %1434 = vmatpush1.msra.mxu0 0.0
    %1435 = vmatprep.subr.mxu0 0.0
    %1436 = vmatpush1.msra.mxu0 0.0
    %1437 = vmatprep.subr.mxu0 0.0
    %1438 = vmatpush1.msra.mxu0 0.0
    %1439 = vmatprep.subr.mxu0 0.0
    %1440 = vmatpush1.msra.mxu0 0.0
    %1441 = vmatprep.subr.mxu0 0.0
    %1442 = vmatpush1.msra.mxu0 0.0
    %1443 = vmatprep.subr.mxu0 0.0
    %1444 = vmatpush1.msra.mxu0 0.0
    %1445 = vmatprep.subr.mxu0 0.0
    %1446 = vmatpush1.msra.mxu0 0.0
    %1447 = vmatprep.subr.mxu0 0.0
    %1448 = vmatpush1.msra.mxu0 0.0
    %1449 = vmatprep.subr.mxu0 0.0
    %1450 = vmatpush1.msra.mxu0 0.0
    %1451 = vmatprep.subr.mxu0 0.0
    %1452 = vmatpush1.msra.mxu0 0.0
    %1453 = vmatprep.subr.mxu0 0.0
    %1454 = vmatpush1.msra.mxu0 0.0
    %1455 = vmatprep.subr.mxu0 0.0
    %1456 = vmatpush1.msra.mxu0 0.0
    %1457 = vmatprep.subr.mxu0 0.0
    %1458 = vmatpush1.msra.mxu0 0.0
    %1459 = vmatprep.subr.mxu0 0.0
    %1460 = vmatpush1.msra.mxu0 0.0
    %1461 = vmatprep.subr.mxu0 0.0
    %1462 = vmatpush1.msra.mxu0 0.0
    %1463 = vmatprep.subr.mxu0 0.0
    %1464 = vmatpush1.msra.mxu0 0.0
    %1465 = vmatprep.subr.mxu0 0.0
    %1466 = vmatpush1.msra.mxu0 0.0
    %1467 = vmatprep.subr.mxu0 0.0
    %1468 = vmatpush1.msra.mxu0 0.0
    %1469 = vmatprep.subr.mxu0 0.0
    %1470 = vmatpush1.msra.mxu0 0.0
    %1471 = vmatprep.subr.mxu0 0.0
    %1472 = vmatpush1.msra.mxu0 0.0
    %1473 = vmatprep.subr.mxu0 0.0
    %1474 = vmatpush1.msra.mxu0 0.0
    %1475 = vmatprep.subr.mxu0 0.0
    %1476 = vmatpush1.msra.mxu0 0.0
    %1477 = vmatprep.subr.mxu0 0.0
    %1478 = vmatpush1.msra.mxu0 0.0
    %1479 = vmatprep.subr.mxu0 0.0
    %1480 = vmatpush1.msra.mxu0 0.0
    %1481 = vmatprep.mubr.f32.mxu0 0.0
    %v1482 = vand.u32 %v81, 4294901760
    %v1483 = vsub.f32 %v81, %v1482
    %1484 = vmatmul.mubr.f32.gmra.mrb[0].mxu0 %v1483
    %v1485 = vpop.f32.mrb[0].mxu0
    %v1486 = vadd.f32 %v1404, %v1485
    %v1487 = vpop.f32.mrb[0].mxu0
    %1488 = vmatprep.mubr.f32.mxu0 0.0
    %v1489 = vand.u32 %v84, 4294901760
    %v1490 = vsub.f32 %v84, %v1489
    %1491 = vmatmul.mubr.f32.gmra.mrb[0].mxu0 %v1490
    %v1492 = vpop.f32.mrb[0].mxu0
    %v1493 = vadd.f32 %v1410, %v1492
    %v1494 = vpop.f32.mrb[0].mxu0
    %1495 = vdwg.mxu0
    %1496 = vmatprep.subr.mxu0 0.0
    %v1497 = vand.u32 %v75, 4294901760
    %1498 = vmatpush1.msra.mxu0 %v1497
    %1499 = vmatprep.subr.mxu0 0.0
    %v1500 = vand.u32 %v76, 4294901760
    %1501 = vmatpush1.msra.mxu0 %v1500
    %1502 = vmatprep.subr.mxu0 0.0
    %1503 = vmatpush1.msra.mxu0 0.0
    %1504 = vmatprep.subr.mxu0 0.0
    %1505 = vmatpush1.msra.mxu0 0.0
    %1506 = vmatprep.subr.mxu0 0.0
    %1507 = vmatpush1.msra.mxu0 0.0
    %1508 = vmatprep.subr.mxu0 0.0
    %1509 = vmatpush1.msra.mxu0 0.0
    %1510 = vmatprep.subr.mxu0 0.0
    %1511 = vmatpush1.msra.mxu0 0.0
    %1512 = vmatprep.subr.mxu0 0.0
    %1513 = vmatpush1.msra.mxu0 0.0
    %1514 = vmatprep.subr.mxu0 0.0
    %1515 = vmatpush1.msra.mxu0 0.0
    %1516 = vmatprep.subr.mxu0 0.0
    %1517 = vmatpush1.msra.mxu0 0.0
    %1518 = vmatprep.subr.mxu0 0.0
    %1519 = vmatpush1.msra.mxu0 0.0
    %1520 = vmatprep.subr.mxu0 0.0
    %1521 = vmatpush1.msra.mxu0 0.0
    %1522 = vmatprep.subr.mxu0 0.0
    %1523 = vmatpush1.msra.mxu0 0.0
    %1524 = vmatprep.subr.mxu0 0.0
    %1525 = vmatpush1.msra.mxu0 0.0
    %1526 = vmatprep.subr.mxu0 0.0
    %1527 = vmatpush1.msra.mxu0 0.0
    %1528 = vmatprep.subr.mxu0 0.0
    %1529 = vmatpush1.msra.mxu0 0.0
    %1530 = vmatprep.subr.mxu0 0.0
    %1531 = vmatpush1.msra.mxu0 0.0
    %1532 = vmatprep.subr.mxu0 0.0
    %1533 = vmatpush1.msra.mxu0 0.0
    %1534 = vmatprep.subr.mxu0 0.0
    %1535 = vmatpush1.msra.mxu0 0.0
    %1536 = vmatprep.subr.mxu0 0.0
    %1537 = vmatpush1.msra.mxu0 0.0
    %1538 = vmatprep.subr.mxu0 0.0
    %1539 = vmatpush1.msra.mxu0 0.0
    %1540 = vmatprep.subr.mxu0 0.0
    %1541 = vmatpush1.msra.mxu0 0.0
    %1542 = vmatprep.subr.mxu0 0.0
    %1543 = vmatpush1.msra.mxu0 0.0
    %1544 = vmatprep.subr.mxu0 0.0
    %1545 = vmatpush1.msra.mxu0 0.0
    %1546 = vmatprep.subr.mxu0 0.0
    %1547 = vmatpush1.msra.mxu0 0.0
    %1548 = vmatprep.subr.mxu0 0.0
    %1549 = vmatpush1.msra.mxu0 0.0
    %1550 = vmatprep.subr.mxu0 0.0
    %1551 = vmatpush1.msra.mxu0 0.0
    %1552 = vmatprep.subr.mxu0 0.0
    %1553 = vmatpush1.msra.mxu0 0.0
    %1554 = vmatprep.subr.mxu0 0.0
    %1555 = vmatpush1.msra.mxu0 0.0
    %1556 = vmatprep.subr.mxu0 0.0
    %1557 = vmatpush1.msra.mxu0 0.0
    %1558 = vmatprep.subr.mxu0 0.0
    %1559 = vmatpush1.msra.mxu0 0.0
    %1560 = vmatprep.subr.mxu0 0.0
    %1561 = vmatpush1.msra.mxu0 0.0
    %1562 = vmatprep.mubr.f32.mxu0 0.0
    %v1563 = vand.u32 %v81, 4294901760
    %v1564 = vsub.f32 %v81, %v1563
    %v1565 = vand.u32 %v1564, 4294901760
    %1566 = vmatmul.mubr.f32.gmra.mrb[0].mxu0 %v1565
    %v1567 = vpop.f32.mrb[0].mxu0
    %v1568 = vadd.f32 %v1486, %v1567
    %v1569 = vpop.f32.mrb[0].mxu0
    %1570 = vmatprep.mubr.f32.mxu0 0.0
    %v1571 = vand.u32 %v84, 4294901760
    %v1572 = vsub.f32 %v84, %v1571
    %v1573 = vand.u32 %v1572, 4294901760
    %1574 = vmatmul.mubr.f32.gmra.mrb[0].mxu0 %v1573
    %v1575 = vpop.f32.mrb[0].mxu0
    %v1576 = vadd.f32 %v1493, %v1575
    %v1577 = vpop.f32.mrb[0].mxu0
    %1578 = vdwg.mxu0
    %1579 = vmatprep.subr.mxu0 0.0
    %v1580 = vand.u32 %v75, 4294901760
    %v1581 = vsub.f32 %v75, %v1580
    %v1582 = vand.u32 %v1581, 4294901760
    %1583 = vmatpush1.msra.mxu0 %v1582
    %1584 = vmatprep.subr.mxu0 0.0
    %v1585 = vand.u32 %v76, 4294901760
    %v1586 = vsub.f32 %v76, %v1585
    %v1587 = vand.u32 %v1586, 4294901760
    %1588 = vmatpush1.msra.mxu0 %v1587
    %1589 = vmatprep.subr.mxu0 0.0
    %1590 = vmatpush1.msra.mxu0 0.0
    %1591 = vmatprep.subr.mxu0 0.0
    %1592 = vmatpush1.msra.mxu0 0.0
    %1593 = vmatprep.subr.mxu0 0.0
    %1594 = vmatpush1.msra.mxu0 0.0
    %1595 = vmatprep.subr.mxu0 0.0
    %1596 = vmatpush1.msra.mxu0 0.0
    %1597 = vmatprep.subr.mxu0 0.0
    %1598 = vmatpush1.msra.mxu0 0.0
    %1599 = vmatprep.subr.mxu0 0.0
    %1600 = vmatpush1.msra.mxu0 0.0
    %1601 = vmatprep.subr.mxu0 0.0
    %1602 = vmatpush1.msra.mxu0 0.0
    %1603 = vmatprep.subr.mxu0 0.0
    %1604 = vmatpush1.msra.mxu0 0.0
    %1605 = vmatprep.subr.mxu0 0.0
    %1606 = vmatpush1.msra.mxu0 0.0
    %1607 = vmatprep.subr.mxu0 0.0
    %1608 = vmatpush1.msra.mxu0 0.0
    %1609 = vmatprep.subr.mxu0 0.0
    %1610 = vmatpush1.msra.mxu0 0.0
    %1611 = vmatprep.subr.mxu0 0.0
    %1612 = vmatpush1.msra.mxu0 0.0
    %1613 = vmatprep.subr.mxu0 0.0
    %1614 = vmatpush1.msra.mxu0 0.0
    %1615 = vmatprep.subr.mxu0 0.0
    %1616 = vmatpush1.msra.mxu0 0.0
    %1617 = vmatprep.subr.mxu0 0.0
    %1618 = vmatpush1.msra.mxu0 0.0
    %1619 = vmatprep.subr.mxu0 0.0
    %1620 = vmatpush1.msra.mxu0 0.0
    %1621 = vmatprep.subr.mxu0 0.0
    %1622 = vmatpush1.msra.mxu0 0.0
    %1623 = vmatprep.subr.mxu0 0.0
    %1624 = vmatpush1.msra.mxu0 0.0
    %1625 = vmatprep.subr.mxu0 0.0
    %1626 = vmatpush1.msra.mxu0 0.0
    %1627 = vmatprep.subr.mxu0 0.0
    %1628 = vmatpush1.msra.mxu0 0.0
    %1629 = vmatprep.subr.mxu0 0.0
    %1630 = vmatpush1.msra.mxu0 0.0
    %1631 = vmatprep.subr.mxu0 0.0
    %1632 = vmatpush1.msra.mxu0 0.0
    %1633 = vmatprep.subr.mxu0 0.0
    %1634 = vmatpush1.msra.mxu0 0.0
    %1635 = vmatprep.subr.mxu0 0.0
    %1636 = vmatpush1.msra.mxu0 0.0
    %1637 = vmatprep.subr.mxu0 0.0
    %1638 = vmatpush1.msra.mxu0 0.0
    %1639 = vmatprep.subr.mxu0 0.0
    %1640 = vmatpush1.msra.mxu0 0.0
    %1641 = vmatprep.subr.mxu0 0.0
    %1642 = vmatpush1.msra.mxu0 0.0
    %1643 = vmatprep.subr.mxu0 0.0
    %1644 = vmatpush1.msra.mxu0 0.0
    %1645 = vmatprep.subr.mxu0 0.0
    %1646 = vmatpush1.msra.mxu0 0.0
    %1647 = vmatprep.subr.mxu0 0.0
    %1648 = vmatpush1.msra.mxu0 0.0
    %1649 = vmatprep.mubr.f32.mxu0 0.0
    %v1650 = vand.u32 %v81, 4294901760
    %1651 = vmatmul.mubr.f32.gmra.mrb[0].mxu0 %v1650
    %v1652 = vpop.f32.mrb[0].mxu0
    %v1653 = vadd.f32 %v1568, %v1652
    %v1654 = vpop.f32.mrb[0].mxu0
    %1655 = vmatprep.mubr.f32.mxu0 0.0
    %v1656 = vand.u32 %v84, 4294901760
    %1657 = vmatmul.mubr.f32.gmra.mrb[0].mxu0 %v1656
    %v1658 = vpop.f32.mrb[0].mxu0
    %v1659 = vadd.f32 %v1576, %v1658
    %v1660 = vpop.f32.mrb[0].mxu0
    %1661 = vdwg.mxu0
    %1662 = vmatprep.subr.mxu0 0.0
    %v1663 = vand.u32 %v75, 4294901760
    %1664 = vmatpush1.msra.mxu0 %v1663
    %1665 = vmatprep.subr.mxu0 0.0
    %v1666 = vand.u32 %v76, 4294901760
    %1667 = vmatpush1.msra.mxu0 %v1666
    %1668 = vmatprep.subr.mxu0 0.0
    %1669 = vmatpush1.msra.mxu0 0.0
    %1670 = vmatprep.subr.mxu0 0.0
    %1671 = vmatpush1.msra.mxu0 0.0
    %1672 = vmatprep.subr.mxu0 0.0
    %1673 = vmatpush1.msra.mxu0 0.0
    %1674 = vmatprep.subr.mxu0 0.0
    %1675 = vmatpush1.msra.mxu0 0.0
    %1676 = vmatprep.subr.mxu0 0.0
    %1677 = vmatpush1.msra.mxu0 0.0
    %1678 = vmatprep.subr.mxu0 0.0
    %1679 = vmatpush1.msra.mxu0 0.0
    %1680 = vmatprep.subr.mxu0 0.0
    %1681 = vmatpush1.msra.mxu0 0.0
    %1682 = vmatprep.subr.mxu0 0.0
    %1683 = vmatpush1.msra.mxu0 0.0
    %1684 = vmatprep.subr.mxu0 0.0
    %1685 = vmatpush1.msra.mxu0 0.0
    %1686 = vmatprep.subr.mxu0 0.0
    %1687 = vmatpush1.msra.mxu0 0.0
    %1688 = vmatprep.subr.mxu0 0.0
    %1689 = vmatpush1.msra.mxu0 0.0
    %1690 = vmatprep.subr.mxu0 0.0
    %1691 = vmatpush1.msra.mxu0 0.0
    %1692 = vmatprep.subr.mxu0 0.0
    %1693 = vmatpush1.msra.mxu0 0.0
    %1694 = vmatprep.subr.mxu0 0.0
    %1695 = vmatpush1.msra.mxu0 0.0
    %1696 = vmatprep.subr.mxu0 0.0
    %1697 = vmatpush1.msra.mxu0 0.0
    %1698 = vmatprep.subr.mxu0 0.0
    %1699 = vmatpush1.msra.mxu0 0.0
    %1700 = vmatprep.subr.mxu0 0.0
    %1701 = vmatpush1.msra.mxu0 0.0
    %1702 = vmatprep.subr.mxu0 0.0
    %1703 = vmatpush1.msra.mxu0 0.0
    %1704 = vmatprep.subr.mxu0 0.0
    %1705 = vmatpush1.msra.mxu0 0.0
    %1706 = vmatprep.subr.mxu0 0.0
    %1707 = vmatpush1.msra.mxu0 0.0
    %1708 = vmatprep.subr.mxu0 0.0
    %1709 = vmatpush1.msra.mxu0 0.0
    %1710 = vmatprep.subr.mxu0 0.0
    %1711 = vmatpush1.msra.mxu0 0.0
    %1712 = vmatprep.subr.mxu0 0.0
    %1713 = vmatpush1.msra.mxu0 0.0
    %1714 = vmatprep.subr.mxu0 0.0
    %1715 = vmatpush1.msra.mxu0 0.0
    %1716 = vmatprep.subr.mxu0 0.0
    %1717 = vmatpush1.msra.mxu0 0.0
    %1718 = vmatprep.subr.mxu0 0.0
    %1719 = vmatpush1.msra.mxu0 0.0
    %1720 = vmatprep.subr.mxu0 0.0
    %1721 = vmatpush1.msra.mxu0 0.0
    %1722 = vmatprep.subr.mxu0 0.0
    %1723 = vmatpush1.msra.mxu0 0.0
    %1724 = vmatprep.subr.mxu0 0.0
    %1725 = vmatpush1.msra.mxu0 0.0
    %1726 = vmatprep.subr.mxu0 0.0
    %1727 = vmatpush1.msra.mxu0 0.0
    %1728 = vmatprep.mubr.f32.mxu0 0.0
    %v1729 = vand.u32 %v81, 4294901760
    %1730 = vmatmul.mubr.f32.gmra.mrb[0].mxu0 %v1729
    %v1731 = vpop.f32.mrb[0].mxu0
    %v1732 = vadd.f32 %v1653, %v1731
    %v1733 = vpop.f32.mrb[0].mxu0
    %1734 = vmatprep.mubr.f32.mxu0 0.0
    %v1735 = vand.u32 %v84, 4294901760
    %1736 = vmatmul.mubr.f32.gmra.mrb[0].mxu0 %v1735
    %v1737 = vpop.f32.mrb[0].mxu0
    %v1738 = vadd.f32 %v1659, %v1737
    %v1739 = vpop.f32.mrb[0].mxu0
    %1740 = vdwg.mxu0
    %v1742 = vsel %vm600, %v1732, 0
    %v1745 = vsel %vm600, %v1738, 0
    %1747 = vmatprep.subr.mxu0 0.0
    %v1748 = vand.u32 %v588, 4294901760
    %1749 = vmatpush1.msra.mxu0 %v1748
    %1750 = vmatprep.subr.mxu0 0.0
    %v1751 = vand.u32 %v589, 4294901760
    %1752 = vmatpush1.msra.mxu0 %v1751
    %1753 = vmatprep.subr.mxu0 0.0
    %v1754 = vand.u32 %v590, 4294901760
    %1755 = vmatpush1.msra.mxu0 %v1754
    %1756 = vmatprep.subr.mxu0 0.0
    %v1757 = vand.u32 %v591, 4294901760
    %1758 = vmatpush1.msra.mxu0 %v1757
    %1759 = vmatprep.subr.mxu0 0.0
    %v1760 = vand.u32 %v592, 4294901760
    %1761 = vmatpush1.msra.mxu0 %v1760
    %1762 = vmatprep.subr.mxu0 0.0
    %v1763 = vand.u32 %v593, 4294901760
    %1764 = vmatpush1.msra.mxu0 %v1763
    %1765 = vmatprep.subr.mxu0 0.0
    %v1766 = vand.u32 %v594, 4294901760
    %1767 = vmatpush1.msra.mxu0 %v1766
    %1768 = vmatprep.subr.mxu0 0.0
    %v1769 = vand.u32 %v595, 4294901760
    %1770 = vmatpush1.msra.mxu0 %v1769
    %1771 = vmatprep.subr.mxu0 0.0
    %v1772 = vand.u32 %v596, 4294901760
    %1773 = vmatpush1.msra.mxu0 %v1772
    %1774 = vmatprep.subr.mxu0 0.0
    %v1775 = vand.u32 %v597, 4294901760
    %1776 = vmatpush1.msra.mxu0 %v1775
    %1777 = vmatprep.subr.mxu0 0.0
    %v1778 = vand.u32 %v598, 4294901760
    %1779 = vmatpush1.msra.mxu0 %v1778
    %1780 = vmatprep.subr.mxu0 0.0
    %v1781 = vand.u32 %v599, 4294901760
    %1782 = vmatpush1.msra.mxu0 %v1781
    %1783 = vmatprep.subr.mxu0 0.0
    %1784 = vmatpush1.msra.mxu0 0.0
    %1785 = vmatprep.subr.mxu0 0.0
    %1786 = vmatpush1.msra.mxu0 0.0
    %1787 = vmatprep.subr.mxu0 0.0
    %1788 = vmatpush1.msra.mxu0 0.0
    %1789 = vmatprep.subr.mxu0 0.0
    %1790 = vmatpush1.msra.mxu0 0.0
    %1791 = vmatprep.subr.mxu0 0.0
    %1792 = vmatpush1.msra.mxu0 0.0
    %1793 = vmatprep.subr.mxu0 0.0
    %1794 = vmatpush1.msra.mxu0 0.0
    %1795 = vmatprep.subr.mxu0 0.0
    %1796 = vmatpush1.msra.mxu0 0.0
    %1797 = vmatprep.subr.mxu0 0.0
    %1798 = vmatpush1.msra.mxu0 0.0
    %1799 = vmatprep.subr.mxu0 0.0
    %1800 = vmatpush1.msra.mxu0 0.0
    %1801 = vmatprep.subr.mxu0 0.0
    %1802 = vmatpush1.msra.mxu0 0.0
    %1803 = vmatprep.subr.mxu0 0.0
    %1804 = vmatpush1.msra.mxu0 0.0
    %1805 = vmatprep.subr.mxu0 0.0
    %1806 = vmatpush1.msra.mxu0 0.0
    %1807 = vmatprep.subr.mxu0 0.0
    %1808 = vmatpush1.msra.mxu0 0.0
    %1809 = vmatprep.subr.mxu0 0.0
    %1810 = vmatpush1.msra.mxu0 0.0
    %1811 = vmatprep.subr.mxu0 0.0
    %1812 = vmatpush1.msra.mxu0 0.0
    %1813 = vmatprep.subr.mxu0 0.0
    %1814 = vmatpush1.msra.mxu0 0.0
    %1815 = vmatprep.subr.mxu0 0.0
    %1816 = vmatpush1.msra.mxu0 0.0
    %1817 = vmatprep.subr.mxu0 0.0
    %1818 = vmatpush1.msra.mxu0 0.0
    %1819 = vmatprep.subr.mxu0 0.0
    %1820 = vmatpush1.msra.mxu0 0.0
    %1821 = vmatprep.subr.mxu0 0.0
    %1822 = vmatpush1.msra.mxu0 0.0
    %1823 = vmatprep.mubr.f32.mxu0 0.0
    %v1824 = vand.u32 %v1742, 4294901760
    %v1825 = vsub.f32 %v1742, %v1824
    %v1826 = vand.u32 %v1825, 4294901760
    %v1827 = vsub.f32 %v1825, %v1826
    %v1828 = vand.u32 %v1827, 4294901760
    %1829 = vmatmul.mubr.f32.gmra.mrb[0].mxu0 %v1828
    %v1830 = vpop.f32.mrb[0].mxu0
    %v1831 = vadd.f32 0.0, %v1830
    %v1832 = vpop.f32.mrb[0].mxu0
    %1833 = vmatprep.mubr.f32.mxu0 0.0
    %v1834 = vand.u32 %v1745, 4294901760
    %v1835 = vsub.f32 %v1745, %v1834
    %v1836 = vand.u32 %v1835, 4294901760
    %v1837 = vsub.f32 %v1835, %v1836
    %v1838 = vand.u32 %v1837, 4294901760
    %1839 = vmatmul.mubr.f32.gmra.mrb[0].mxu0 %v1838
    %v1840 = vpop.f32.mrb[0].mxu0
    %v1841 = vadd.f32 0.0, %v1840
    %v1842 = vpop.f32.mrb[0].mxu0
    %1843 = vdwg.mxu0
    %1844 = vmatprep.subr.mxu0 0.0
    %v1845 = vand.u32 %v588, 4294901760
    %v1846 = vsub.f32 %v588, %v1845
    %v1847 = vand.u32 %v1846, 4294901760
    %v1848 = vsub.f32 %v1846, %v1847
    %v1849 = vand.u32 %v1848, 4294901760
    %1850 = vmatpush1.msra.mxu0 %v1849
    %1851 = vmatprep.subr.mxu0 0.0
    %v1852 = vand.u32 %v589, 4294901760
    %v1853 = vsub.f32 %v589, %v1852
    %v1854 = vand.u32 %v1853, 4294901760
    %v1855 = vsub.f32 %v1853, %v1854
    %v1856 = vand.u32 %v1855, 4294901760
    %1857 = vmatpush1.msra.mxu0 %v1856
    %1858 = vmatprep.subr.mxu0 0.0
    %v1859 = vand.u32 %v590, 4294901760
    %v1860 = vsub.f32 %v590, %v1859
    %v1861 = vand.u32 %v1860, 4294901760
    %v1862 = vsub.f32 %v1860, %v1861
    %v1863 = vand.u32 %v1862, 4294901760
    %1864 = vmatpush1.msra.mxu0 %v1863
    %1865 = vmatprep.subr.mxu0 0.0
    %v1866 = vand.u32 %v591, 4294901760
    %v1867 = vsub.f32 %v591, %v1866
    %v1868 = vand.u32 %v1867, 4294901760
    %v1869 = vsub.f32 %v1867, %v1868
    %v1870 = vand.u32 %v1869, 4294901760
    %1871 = vmatpush1.msra.mxu0 %v1870
    %1872 = vmatprep.subr.mxu0 0.0
    %v1873 = vand.u32 %v592, 4294901760
    %v1874 = vsub.f32 %v592, %v1873
    %v1875 = vand.u32 %v1874, 4294901760
    %v1876 = vsub.f32 %v1874, %v1875
    %v1877 = vand.u32 %v1876, 4294901760
    %1878 = vmatpush1.msra.mxu0 %v1877
    %1879 = vmatprep.subr.mxu0 0.0
    %v1880 = vand.u32 %v593, 4294901760
    %v1881 = vsub.f32 %v593, %v1880
    %v1882 = vand.u32 %v1881, 4294901760
    %v1883 = vsub.f32 %v1881, %v1882
    %v1884 = vand.u32 %v1883, 4294901760
    %1885 = vmatpush1.msra.mxu0 %v1884
    %1886 = vmatprep.subr.mxu0 0.0
    %v1887 = vand.u32 %v594, 4294901760
    %v1888 = vsub.f32 %v594, %v1887
    %v1889 = vand.u32 %v1888, 4294901760
    %v1890 = vsub.f32 %v1888, %v1889
    %v1891 = vand.u32 %v1890, 4294901760
    %1892 = vmatpush1.msra.mxu0 %v1891
    %1893 = vmatprep.subr.mxu0 0.0
    %v1894 = vand.u32 %v595, 4294901760
    %v1895 = vsub.f32 %v595, %v1894
    %v1896 = vand.u32 %v1895, 4294901760
    %v1897 = vsub.f32 %v1895, %v1896
    %v1898 = vand.u32 %v1897, 4294901760
    %1899 = vmatpush1.msra.mxu0 %v1898
    %1900 = vmatprep.subr.mxu0 0.0
    %v1901 = vand.u32 %v596, 4294901760
    %v1902 = vsub.f32 %v596, %v1901
    %v1903 = vand.u32 %v1902, 4294901760
    %v1904 = vsub.f32 %v1902, %v1903
    %v1905 = vand.u32 %v1904, 4294901760
    %1906 = vmatpush1.msra.mxu0 %v1905
    %1907 = vmatprep.subr.mxu0 0.0
    %v1908 = vand.u32 %v597, 4294901760
    %v1909 = vsub.f32 %v597, %v1908
    %v1910 = vand.u32 %v1909, 4294901760
    %v1911 = vsub.f32 %v1909, %v1910
    %v1912 = vand.u32 %v1911, 4294901760
    %1913 = vmatpush1.msra.mxu0 %v1912
    %1914 = vmatprep.subr.mxu0 0.0
    %v1915 = vand.u32 %v598, 4294901760
    %v1916 = vsub.f32 %v598, %v1915
    %v1917 = vand.u32 %v1916, 4294901760
    %v1918 = vsub.f32 %v1916, %v1917
    %v1919 = vand.u32 %v1918, 4294901760
    %1920 = vmatpush1.msra.mxu0 %v1919
    %1921 = vmatprep.subr.mxu0 0.0
    %v1922 = vand.u32 %v599, 4294901760
    %v1923 = vsub.f32 %v599, %v1922
    %v1924 = vand.u32 %v1923, 4294901760
    %v1925 = vsub.f32 %v1923, %v1924
    %v1926 = vand.u32 %v1925, 4294901760
    %1927 = vmatpush1.msra.mxu0 %v1926
    %1928 = vmatprep.subr.mxu0 0.0
    %1929 = vmatpush1.msra.mxu0 0.0
    %1930 = vmatprep.subr.mxu0 0.0
    %1931 = vmatpush1.msra.mxu0 0.0
    %1932 = vmatprep.subr.mxu0 0.0
    %1933 = vmatpush1.msra.mxu0 0.0
    %1934 = vmatprep.subr.mxu0 0.0
    %1935 = vmatpush1.msra.mxu0 0.0
    %1936 = vmatprep.subr.mxu0 0.0
    %1937 = vmatpush1.msra.mxu0 0.0
    %1938 = vmatprep.subr.mxu0 0.0
    %1939 = vmatpush1.msra.mxu0 0.0
    %1940 = vmatprep.subr.mxu0 0.0
    %1941 = vmatpush1.msra.mxu0 0.0
    %1942 = vmatprep.subr.mxu0 0.0
    %1943 = vmatpush1.msra.mxu0 0.0
    %1944 = vmatprep.subr.mxu0 0.0
    %1945 = vmatpush1.msra.mxu0 0.0
    %1946 = vmatprep.subr.mxu0 0.0
    %1947 = vmatpush1.msra.mxu0 0.0
    %1948 = vmatprep.subr.mxu0 0.0
    %1949 = vmatpush1.msra.mxu0 0.0
    %1950 = vmatprep.subr.mxu0 0.0
    %1951 = vmatpush1.msra.mxu0 0.0
    %1952 = vmatprep.subr.mxu0 0.0
    %1953 = vmatpush1.msra.mxu0 0.0
    %1954 = vmatprep.subr.mxu0 0.0
    %1955 = vmatpush1.msra.mxu0 0.0
    %1956 = vmatprep.subr.mxu0 0.0
    %1957 = vmatpush1.msra.mxu0 0.0
    %1958 = vmatprep.subr.mxu0 0.0
    %1959 = vmatpush1.msra.mxu0 0.0
    %1960 = vmatprep.subr.mxu0 0.0
    %1961 = vmatpush1.msra.mxu0 0.0
    %1962 = vmatprep.subr.mxu0 0.0
    %1963 = vmatpush1.msra.mxu0 0.0
    %1964 = vmatprep.subr.mxu0 0.0
    %1965 = vmatpush1.msra.mxu0 0.0
    %1966 = vmatprep.subr.mxu0 0.0
    %1967 = vmatpush1.msra.mxu0 0.0
    %1968 = vmatprep.mubr.f32.mxu0 0.0
    %v1969 = vand.u32 %v1742, 4294901760
    %1970 = vmatmul.mubr.f32.gmra.mrb[0].mxu0 %v1969
    %v1971 = vpop.f32.mrb[0].mxu0
    %v1972 = vadd.f32 %v1831, %v1971
    %v1973 = vpop.f32.mrb[0].mxu0
    %1974 = vmatprep.mubr.f32.mxu0 0.0
    %v1975 = vand.u32 %v1745, 4294901760
    %1976 = vmatmul.mubr.f32.gmra.mrb[0].mxu0 %v1975
    %v1977 = vpop.f32.mrb[0].mxu0
    %v1978 = vadd.f32 %v1841, %v1977
    %v1979 = vpop.f32.mrb[0].mxu0
    %1980 = vdwg.mxu0
    %1981 = vmatprep.subr.mxu0 0.0
    %v1982 = vand.u32 %v588, 4294901760
    %v1983 = vsub.f32 %v588, %v1982
    %1984 = vmatpush1.msra.mxu0 %v1983
    %1985 = vmatprep.subr.mxu0 0.0
    %v1986 = vand.u32 %v589, 4294901760
    %v1987 = vsub.f32 %v589, %v1986
    %1988 = vmatpush1.msra.mxu0 %v1987
    %1989 = vmatprep.subr.mxu0 0.0
    %v1990 = vand.u32 %v590, 4294901760
    %v1991 = vsub.f32 %v590, %v1990
    %1992 = vmatpush1.msra.mxu0 %v1991
    %1993 = vmatprep.subr.mxu0 0.0
    %v1994 = vand.u32 %v591, 4294901760
    %v1995 = vsub.f32 %v591, %v1994
    %1996 = vmatpush1.msra.mxu0 %v1995
    %1997 = vmatprep.subr.mxu0 0.0
    %v1998 = vand.u32 %v592, 4294901760
    %v1999 = vsub.f32 %v592, %v1998
    %2000 = vmatpush1.msra.mxu0 %v1999
    %2001 = vmatprep.subr.mxu0 0.0
    %v2002 = vand.u32 %v593, 4294901760
    %v2003 = vsub.f32 %v593, %v2002
    %2004 = vmatpush1.msra.mxu0 %v2003
    %2005 = vmatprep.subr.mxu0 0.0
    %v2006 = vand.u32 %v594, 4294901760
    %v2007 = vsub.f32 %v594, %v2006
    %2008 = vmatpush1.msra.mxu0 %v2007
    %2009 = vmatprep.subr.mxu0 0.0
    %v2010 = vand.u32 %v595, 4294901760
    %v2011 = vsub.f32 %v595, %v2010
    %2012 = vmatpush1.msra.mxu0 %v2011
    %2013 = vmatprep.subr.mxu0 0.0
    %v2014 = vand.u32 %v596, 4294901760
    %v2015 = vsub.f32 %v596, %v2014
    %2016 = vmatpush1.msra.mxu0 %v2015
    %2017 = vmatprep.subr.mxu0 0.0
    %v2018 = vand.u32 %v597, 4294901760
    %v2019 = vsub.f32 %v597, %v2018
    %2020 = vmatpush1.msra.mxu0 %v2019
    %2021 = vmatprep.subr.mxu0 0.0
    %v2022 = vand.u32 %v598, 4294901760
    %v2023 = vsub.f32 %v598, %v2022
    %2024 = vmatpush1.msra.mxu0 %v2023
    %2025 = vmatprep.subr.mxu0 0.0
    %v2026 = vand.u32 %v599, 4294901760
    %v2027 = vsub.f32 %v599, %v2026
    %2028 = vmatpush1.msra.mxu0 %v2027
    %2029 = vmatprep.subr.mxu0 0.0
    %2030 = vmatpush1.msra.mxu0 0.0
    %2031 = vmatprep.subr.mxu0 0.0
    %2032 = vmatpush1.msra.mxu0 0.0
    %2033 = vmatprep.subr.mxu0 0.0
    %2034 = vmatpush1.msra.mxu0 0.0
    %2035 = vmatprep.subr.mxu0 0.0
    %2036 = vmatpush1.msra.mxu0 0.0
    %2037 = vmatprep.subr.mxu0 0.0
    %2038 = vmatpush1.msra.mxu0 0.0
    %2039 = vmatprep.subr.mxu0 0.0
    %2040 = vmatpush1.msra.mxu0 0.0
    %2041 = vmatprep.subr.mxu0 0.0
    %2042 = vmatpush1.msra.mxu0 0.0
    %2043 = vmatprep.subr.mxu0 0.0
    %2044 = vmatpush1.msra.mxu0 0.0
    %2045 = vmatprep.subr.mxu0 0.0
    %2046 = vmatpush1.msra.mxu0 0.0
    %2047 = vmatprep.subr.mxu0 0.0
    %2048 = vmatpush1.msra.mxu0 0.0
    %2049 = vmatprep.subr.mxu0 0.0
    %2050 = vmatpush1.msra.mxu0 0.0
    %2051 = vmatprep.subr.mxu0 0.0
    %2052 = vmatpush1.msra.mxu0 0.0
    %2053 = vmatprep.subr.mxu0 0.0
    %2054 = vmatpush1.msra.mxu0 0.0
    %2055 = vmatprep.subr.mxu0 0.0
    %2056 = vmatpush1.msra.mxu0 0.0
    %2057 = vmatprep.subr.mxu0 0.0
    %2058 = vmatpush1.msra.mxu0 0.0
    %2059 = vmatprep.subr.mxu0 0.0
    %2060 = vmatpush1.msra.mxu0 0.0
    %2061 = vmatprep.subr.mxu0 0.0
    %2062 = vmatpush1.msra.mxu0 0.0
    %2063 = vmatprep.subr.mxu0 0.0
    %2064 = vmatpush1.msra.mxu0 0.0
    %2065 = vmatprep.subr.mxu0 0.0
    %2066 = vmatpush1.msra.mxu0 0.0
    %2067 = vmatprep.subr.mxu0 0.0
    %2068 = vmatpush1.msra.mxu0 0.0
    %2069 = vmatprep.mubr.f32.mxu0 0.0
    %v2070 = vand.u32 %v1742, 4294901760
    %v2071 = vsub.f32 %v1742, %v2070
    %2072 = vmatmul.mubr.f32.gmra.mrb[0].mxu0 %v2071
    %v2073 = vpop.f32.mrb[0].mxu0
    %v2074 = vadd.f32 %v1972, %v2073
    %v2075 = vpop.f32.mrb[0].mxu0
    %2076 = vmatprep.mubr.f32.mxu0 0.0
    %v2077 = vand.u32 %v1745, 4294901760
    %v2078 = vsub.f32 %v1745, %v2077
    %2079 = vmatmul.mubr.f32.gmra.mrb[0].mxu0 %v2078
    %v2080 = vpop.f32.mrb[0].mxu0
    %v2081 = vadd.f32 %v1978, %v2080
    %v2082 = vpop.f32.mrb[0].mxu0
    %2083 = vdwg.mxu0
    %2084 = vmatprep.subr.mxu0 0.0
    %v2085 = vand.u32 %v588, 4294901760
    %2086 = vmatpush1.msra.mxu0 %v2085
    %2087 = vmatprep.subr.mxu0 0.0
    %v2088 = vand.u32 %v589, 4294901760
    %2089 = vmatpush1.msra.mxu0 %v2088
    %2090 = vmatprep.subr.mxu0 0.0
    %v2091 = vand.u32 %v590, 4294901760
    %2092 = vmatpush1.msra.mxu0 %v2091
    %2093 = vmatprep.subr.mxu0 0.0
    %v2094 = vand.u32 %v591, 4294901760
    %2095 = vmatpush1.msra.mxu0 %v2094
    %2096 = vmatprep.subr.mxu0 0.0
    %v2097 = vand.u32 %v592, 4294901760
    %2098 = vmatpush1.msra.mxu0 %v2097
    %2099 = vmatprep.subr.mxu0 0.0
    %v2100 = vand.u32 %v593, 4294901760
    %2101 = vmatpush1.msra.mxu0 %v2100
    %2102 = vmatprep.subr.mxu0 0.0
    %v2103 = vand.u32 %v594, 4294901760
    %2104 = vmatpush1.msra.mxu0 %v2103
    %2105 = vmatprep.subr.mxu0 0.0
    %v2106 = vand.u32 %v595, 4294901760
    %2107 = vmatpush1.msra.mxu0 %v2106
    %2108 = vmatprep.subr.mxu0 0.0
    %v2109 = vand.u32 %v596, 4294901760
    %2110 = vmatpush1.msra.mxu0 %v2109
    %2111 = vmatprep.subr.mxu0 0.0
    %v2112 = vand.u32 %v597, 4294901760
    %2113 = vmatpush1.msra.mxu0 %v2112
    %2114 = vmatprep.subr.mxu0 0.0
    %v2115 = vand.u32 %v598, 4294901760
    %2116 = vmatpush1.msra.mxu0 %v2115
    %2117 = vmatprep.subr.mxu0 0.0
    %v2118 = vand.u32 %v599, 4294901760
    %2119 = vmatpush1.msra.mxu0 %v2118
    %2120 = vmatprep.subr.mxu0 0.0
    %2121 = vmatpush1.msra.mxu0 0.0
    %2122 = vmatprep.subr.mxu0 0.0
    %2123 = vmatpush1.msra.mxu0 0.0
    %2124 = vmatprep.subr.mxu0 0.0
    %2125 = vmatpush1.msra.mxu0 0.0
    %2126 = vmatprep.subr.mxu0 0.0
    %2127 = vmatpush1.msra.mxu0 0.0
    %2128 = vmatprep.subr.mxu0 0.0
    %2129 = vmatpush1.msra.mxu0 0.0
    %2130 = vmatprep.subr.mxu0 0.0
    %2131 = vmatpush1.msra.mxu0 0.0
    %2132 = vmatprep.subr.mxu0 0.0
    %2133 = vmatpush1.msra.mxu0 0.0
    %2134 = vmatprep.subr.mxu0 0.0
    %2135 = vmatpush1.msra.mxu0 0.0
    %2136 = vmatprep.subr.mxu0 0.0
    %2137 = vmatpush1.msra.mxu0 0.0
    %2138 = vmatprep.subr.mxu0 0.0
    %2139 = vmatpush1.msra.mxu0 0.0
    %2140 = vmatprep.subr.mxu0 0.0
    %2141 = vmatpush1.msra.mxu0 0.0
    %2142 = vmatprep.subr.mxu0 0.0
    %2143 = vmatpush1.msra.mxu0 0.0
    %2144 = vmatprep.subr.mxu0 0.0
    %2145 = vmatpush1.msra.mxu0 0.0
    %2146 = vmatprep.subr.mxu0 0.0
    %2147 = vmatpush1.msra.mxu0 0.0
    %2148 = vmatprep.subr.mxu0 0.0
    %2149 = vmatpush1.msra.mxu0 0.0
    %2150 = vmatprep.subr.mxu0 0.0
    %2151 = vmatpush1.msra.mxu0 0.0
    %2152 = vmatprep.subr.mxu0 0.0
    %2153 = vmatpush1.msra.mxu0 0.0
    %2154 = vmatprep.subr.mxu0 0.0
    %2155 = vmatpush1.msra.mxu0 0.0
    %2156 = vmatprep.subr.mxu0 0.0
    %2157 = vmatpush1.msra.mxu0 0.0
    %2158 = vmatprep.subr.mxu0 0.0
    %2159 = vmatpush1.msra.mxu0 0.0
    %2160 = vmatprep.mubr.f32.mxu0 0.0
    %v2161 = vand.u32 %v1742, 4294901760
    %v2162 = vsub.f32 %v1742, %v2161
    %v2163 = vand.u32 %v2162, 4294901760
    %2164 = vmatmul.mubr.f32.gmra.mrb[0].mxu0 %v2163
    %v2165 = vpop.f32.mrb[0].mxu0
    %v2166 = vadd.f32 %v2074, %v2165
    %v2167 = vpop.f32.mrb[0].mxu0
    %2168 = vmatprep.mubr.f32.mxu0 0.0
    %v2169 = vand.u32 %v1745, 4294901760
    %v2170 = vsub.f32 %v1745, %v2169
    %v2171 = vand.u32 %v2170, 4294901760
    %2172 = vmatmul.mubr.f32.gmra.mrb[0].mxu0 %v2171
    %v2173 = vpop.f32.mrb[0].mxu0
    %v2174 = vadd.f32 %v2081, %v2173
    %v2175 = vpop.f32.mrb[0].mxu0
    %2176 = vdwg.mxu0
    %2177 = vmatprep.subr.mxu0 0.0
    %v2178 = vand.u32 %v588, 4294901760
    %v2179 = vsub.f32 %v588, %v2178
    %v2180 = vand.u32 %v2179, 4294901760
    %2181 = vmatpush1.msra.mxu0 %v2180
    %2182 = vmatprep.subr.mxu0 0.0
    %v2183 = vand.u32 %v589, 4294901760
    %v2184 = vsub.f32 %v589, %v2183
    %v2185 = vand.u32 %v2184, 4294901760
    %2186 = vmatpush1.msra.mxu0 %v2185
    %2187 = vmatprep.subr.mxu0 0.0
    %v2188 = vand.u32 %v590, 4294901760
    %v2189 = vsub.f32 %v590, %v2188
    %v2190 = vand.u32 %v2189, 4294901760
    %2191 = vmatpush1.msra.mxu0 %v2190
    %2192 = vmatprep.subr.mxu0 0.0
    %v2193 = vand.u32 %v591, 4294901760
    %v2194 = vsub.f32 %v591, %v2193
    %v2195 = vand.u32 %v2194, 4294901760
    %2196 = vmatpush1.msra.mxu0 %v2195
    %2197 = vmatprep.subr.mxu0 0.0
    %v2198 = vand.u32 %v592, 4294901760
    %v2199 = vsub.f32 %v592, %v2198
    %v2200 = vand.u32 %v2199, 4294901760
    %2201 = vmatpush1.msra.mxu0 %v2200
    %2202 = vmatprep.subr.mxu0 0.0
    %v2203 = vand.u32 %v593, 4294901760
    %v2204 = vsub.f32 %v593, %v2203
    %v2205 = vand.u32 %v2204, 4294901760
    %2206 = vmatpush1.msra.mxu0 %v2205
    %2207 = vmatprep.subr.mxu0 0.0
    %v2208 = vand.u32 %v594, 4294901760
    %v2209 = vsub.f32 %v594, %v2208
    %v2210 = vand.u32 %v2209, 4294901760
    %2211 = vmatpush1.msra.mxu0 %v2210
    %2212 = vmatprep.subr.mxu0 0.0
    %v2213 = vand.u32 %v595, 4294901760
    %v2214 = vsub.f32 %v595, %v2213
    %v2215 = vand.u32 %v2214, 4294901760
    %2216 = vmatpush1.msra.mxu0 %v2215
    %2217 = vmatprep.subr.mxu0 0.0
    %v2218 = vand.u32 %v596, 4294901760
    %v2219 = vsub.f32 %v596, %v2218
    %v2220 = vand.u32 %v2219, 4294901760
    %2221 = vmatpush1.msra.mxu0 %v2220
    %2222 = vmatprep.subr.mxu0 0.0
    %v2223 = vand.u32 %v597, 4294901760
    %v2224 = vsub.f32 %v597, %v2223
    %v2225 = vand.u32 %v2224, 4294901760
    %2226 = vmatpush1.msra.mxu0 %v2225
    %2227 = vmatprep.subr.mxu0 0.0
    %v2228 = vand.u32 %v598, 4294901760
    %v2229 = vsub.f32 %v598, %v2228
    %v2230 = vand.u32 %v2229, 4294901760
    %2231 = vmatpush1.msra.mxu0 %v2230
    %2232 = vmatprep.subr.mxu0 0.0
    %v2233 = vand.u32 %v599, 4294901760
    %v2234 = vsub.f32 %v599, %v2233
    %v2235 = vand.u32 %v2234, 4294901760
    %2236 = vmatpush1.msra.mxu0 %v2235
    %2237 = vmatprep.subr.mxu0 0.0
    %2238 = vmatpush1.msra.mxu0 0.0
    %2239 = vmatprep.subr.mxu0 0.0
    %2240 = vmatpush1.msra.mxu0 0.0
    %2241 = vmatprep.subr.mxu0 0.0
    %2242 = vmatpush1.msra.mxu0 0.0
    %2243 = vmatprep.subr.mxu0 0.0
    %2244 = vmatpush1.msra.mxu0 0.0
    %2245 = vmatprep.subr.mxu0 0.0
    %2246 = vmatpush1.msra.mxu0 0.0
    %2247 = vmatprep.subr.mxu0 0.0
    %2248 = vmatpush1.msra.mxu0 0.0
    %2249 = vmatprep.subr.mxu0 0.0
    %2250 = vmatpush1.msra.mxu0 0.0
    %2251 = vmatprep.subr.mxu0 0.0
    %2252 = vmatpush1.msra.mxu0 0.0
    %2253 = vmatprep.subr.mxu0 0.0
    %2254 = vmatpush1.msra.mxu0 0.0
    %2255 = vmatprep.subr.mxu0 0.0
    %2256 = vmatpush1.msra.mxu0 0.0
    %2257 = vmatprep.subr.mxu0 0.0
    %2258 = vmatpush1.msra.mxu0 0.0
    %2259 = vmatprep.subr.mxu0 0.0
    %2260 = vmatpush1.msra.mxu0 0.0
    %2261 = vmatprep.subr.mxu0 0.0
    %2262 = vmatpush1.msra.mxu0 0.0
    %2263 = vmatprep.subr.mxu0 0.0
    %2264 = vmatpush1.msra.mxu0 0.0
    %2265 = vmatprep.subr.mxu0 0.0
    %2266 = vmatpush1.msra.mxu0 0.0
    %2267 = vmatprep.subr.mxu0 0.0
    %2268 = vmatpush1.msra.mxu0 0.0
    %2269 = vmatprep.subr.mxu0 0.0
    %2270 = vmatpush1.msra.mxu0 0.0
    %2271 = vmatprep.subr.mxu0 0.0
    %2272 = vmatpush1.msra.mxu0 0.0
    %2273 = vmatprep.subr.mxu0 0.0
    %2274 = vmatpush1.msra.mxu0 0.0
    %2275 = vmatprep.subr.mxu0 0.0
    %2276 = vmatpush1.msra.mxu0 0.0
    %2277 = vmatprep.mubr.f32.mxu0 0.0
    %v2278 = vand.u32 %v1742, 4294901760
    %2279 = vmatmul.mubr.f32.gmra.mrb[0].mxu0 %v2278
    %v2280 = vpop.f32.mrb[0].mxu0
    %v2281 = vadd.f32 %v2166, %v2280
    %v2282 = vpop.f32.mrb[0].mxu0
    %2283 = vmatprep.mubr.f32.mxu0 0.0
    %v2284 = vand.u32 %v1745, 4294901760
    %2285 = vmatmul.mubr.f32.gmra.mrb[0].mxu0 %v2284
    %v2286 = vpop.f32.mrb[0].mxu0
    %v2287 = vadd.f32 %v2174, %v2286
    %v2288 = vpop.f32.mrb[0].mxu0
    %2289 = vdwg.mxu0
    %2290 = vmatprep.subr.mxu0 0.0
    %v2291 = vand.u32 %v588, 4294901760
    %2292 = vmatpush1.msra.mxu0 %v2291
    %2293 = vmatprep.subr.mxu0 0.0
    %v2294 = vand.u32 %v589, 4294901760
    %2295 = vmatpush1.msra.mxu0 %v2294
    %2296 = vmatprep.subr.mxu0 0.0
    %v2297 = vand.u32 %v590, 4294901760
    %2298 = vmatpush1.msra.mxu0 %v2297
    %2299 = vmatprep.subr.mxu0 0.0
    %v2300 = vand.u32 %v591, 4294901760
    %2301 = vmatpush1.msra.mxu0 %v2300
    %2302 = vmatprep.subr.mxu0 0.0
    %v2303 = vand.u32 %v592, 4294901760
    %2304 = vmatpush1.msra.mxu0 %v2303
    %2305 = vmatprep.subr.mxu0 0.0
    %v2306 = vand.u32 %v593, 4294901760
    %2307 = vmatpush1.msra.mxu0 %v2306
    %2308 = vmatprep.subr.mxu0 0.0
    %v2309 = vand.u32 %v594, 4294901760
    %2310 = vmatpush1.msra.mxu0 %v2309
    %2311 = vmatprep.subr.mxu0 0.0
    %v2312 = vand.u32 %v595, 4294901760
    %2313 = vmatpush1.msra.mxu0 %v2312
    %2314 = vmatprep.subr.mxu0 0.0
    %v2315 = vand.u32 %v596, 4294901760
    %2316 = vmatpush1.msra.mxu0 %v2315
    %2317 = vmatprep.subr.mxu0 0.0
    %v2318 = vand.u32 %v597, 4294901760
    %2319 = vmatpush1.msra.mxu0 %v2318
    %2320 = vmatprep.subr.mxu0 0.0
    %v2321 = vand.u32 %v598, 4294901760
    %2322 = vmatpush1.msra.mxu0 %v2321
    %2323 = vmatprep.subr.mxu0 0.0
    %v2324 = vand.u32 %v599, 4294901760
    %2325 = vmatpush1.msra.mxu0 %v2324
    %2326 = vmatprep.subr.mxu0 0.0
    %2327 = vmatpush1.msra.mxu0 0.0
    %2328 = vmatprep.subr.mxu0 0.0
    %2329 = vmatpush1.msra.mxu0 0.0
    %2330 = vmatprep.subr.mxu0 0.0
    %2331 = vmatpush1.msra.mxu0 0.0
    %2332 = vmatprep.subr.mxu0 0.0
    %2333 = vmatpush1.msra.mxu0 0.0
    %2334 = vmatprep.subr.mxu0 0.0
    %2335 = vmatpush1.msra.mxu0 0.0
    %2336 = vmatprep.subr.mxu0 0.0
    %2337 = vmatpush1.msra.mxu0 0.0
    %2338 = vmatprep.subr.mxu0 0.0
    %2339 = vmatpush1.msra.mxu0 0.0
    %2340 = vmatprep.subr.mxu0 0.0
    %2341 = vmatpush1.msra.mxu0 0.0
    %2342 = vmatprep.subr.mxu0 0.0
    %2343 = vmatpush1.msra.mxu0 0.0
    %2344 = vmatprep.subr.mxu0 0.0
    %2345 = vmatpush1.msra.mxu0 0.0
    %2346 = vmatprep.subr.mxu0 0.0
    %2347 = vmatpush1.msra.mxu0 0.0
    %2348 = vmatprep.subr.mxu0 0.0
    %2349 = vmatpush1.msra.mxu0 0.0
    %2350 = vmatprep.subr.mxu0 0.0
    %2351 = vmatpush1.msra.mxu0 0.0
    %2352 = vmatprep.subr.mxu0 0.0
    %2353 = vmatpush1.msra.mxu0 0.0
    %2354 = vmatprep.subr.mxu0 0.0
    %2355 = vmatpush1.msra.mxu0 0.0
    %2356 = vmatprep.subr.mxu0 0.0
    %2357 = vmatpush1.msra.mxu0 0.0
    %2358 = vmatprep.subr.mxu0 0.0
    %2359 = vmatpush1.msra.mxu0 0.0
    %2360 = vmatprep.subr.mxu0 0.0
    %2361 = vmatpush1.msra.mxu0 0.0
    %2362 = vmatprep.subr.mxu0 0.0
    %2363 = vmatpush1.msra.mxu0 0.0
    %2364 = vmatprep.subr.mxu0 0.0
    %2365 = vmatpush1.msra.mxu0 0.0
    %2366 = vmatprep.mubr.f32.mxu0 0.0
    %v2367 = vand.u32 %v1742, 4294901760
    %2368 = vmatmul.mubr.f32.gmra.mrb[0].mxu0 %v2367
    %v2369 = vpop.f32.mrb[0].mxu0
    %v2370 = vadd.f32 %v2281, %v2369
    %v2371 = vpop.f32.mrb[0].mxu0
    %2372 = vmatprep.mubr.f32.mxu0 0.0
    %v2373 = vand.u32 %v1745, 4294901760
    %2374 = vmatmul.mubr.f32.gmra.mrb[0].mxu0 %v2373
    %v2375 = vpop.f32.mrb[0].mxu0
    %v2376 = vadd.f32 %v2287, %v2375
    %v2377 = vpop.f32.mrb[0].mxu0
    %2378 = vdwg.mxu0
    %v2379 = vmul.f32 %v1230, %v1230
    %v2380 = vmul.f32 %v1236, %v1236
    %v2381 = vmul.f32 %v2370, %v2370
    %v2382 = vmul.f32 %v2376, %v2376
    %v2383 = vmul.f32 %v1230, %v2370
    %v2384 = vmul.f32 %v1236, %v2376
    %v2385 = vmul.f32 %v73, %v73
    %v2386 = vmul.f32 %v74, %v74
    %2387 = vmatprep.subr.mxu0 0.0
    %v2388 = vand.u32 %v2385, 4294901760
    %2389 = vmatpush1.msra.mxu0 %v2388
    %2390 = vmatprep.subr.mxu0 0.0
    %v2391 = vand.u32 %v2386, 4294901760
    %2392 = vmatpush1.msra.mxu0 %v2391
    %2393 = vmatprep.subr.mxu0 0.0
    %2394 = vmatpush1.msra.mxu0 0.0
    %2395 = vmatprep.subr.mxu0 0.0
    %2396 = vmatpush1.msra.mxu0 0.0
    %2397 = vmatprep.subr.mxu0 0.0
    %2398 = vmatpush1.msra.mxu0 0.0
    %2399 = vmatprep.subr.mxu0 0.0
    %2400 = vmatpush1.msra.mxu0 0.0
    %2401 = vmatprep.subr.mxu0 0.0
    %2402 = vmatpush1.msra.mxu0 0.0
    %2403 = vmatprep.subr.mxu0 0.0
    %2404 = vmatpush1.msra.mxu0 0.0
    %2405 = vmatprep.subr.mxu0 0.0
    %2406 = vmatpush1.msra.mxu0 0.0
    %2407 = vmatprep.subr.mxu0 0.0
    %2408 = vmatpush1.msra.mxu0 0.0
    %2409 = vmatprep.subr.mxu0 0.0
    %2410 = vmatpush1.msra.mxu0 0.0
    %2411 = vmatprep.subr.mxu0 0.0
    %2412 = vmatpush1.msra.mxu0 0.0
    %2413 = vmatprep.subr.mxu0 0.0
    %2414 = vmatpush1.msra.mxu0 0.0
    %2415 = vmatprep.subr.mxu0 0.0
    %2416 = vmatpush1.msra.mxu0 0.0
    %2417 = vmatprep.subr.mxu0 0.0
    %2418 = vmatpush1.msra.mxu0 0.0
    %2419 = vmatprep.subr.mxu0 0.0
    %2420 = vmatpush1.msra.mxu0 0.0
    %2421 = vmatprep.subr.mxu0 0.0
    %2422 = vmatpush1.msra.mxu0 0.0
    %2423 = vmatprep.subr.mxu0 0.0
    %2424 = vmatpush1.msra.mxu0 0.0
    %2425 = vmatprep.subr.mxu0 0.0
    %2426 = vmatpush1.msra.mxu0 0.0
    %2427 = vmatprep.subr.mxu0 0.0
    %2428 = vmatpush1.msra.mxu0 0.0
    %2429 = vmatprep.subr.mxu0 0.0
    %2430 = vmatpush1.msra.mxu0 0.0
    %2431 = vmatprep.subr.mxu0 0.0
    %2432 = vmatpush1.msra.mxu0 0.0
    %2433 = vmatprep.subr.mxu0 0.0
    %2434 = vmatpush1.msra.mxu0 0.0
    %2435 = vmatprep.subr.mxu0 0.0
    %2436 = vmatpush1.msra.mxu0 0.0
    %2437 = vmatprep.subr.mxu0 0.0
    %2438 = vmatpush1.msra.mxu0 0.0
    %2439 = vmatprep.subr.mxu0 0.0
    %2440 = vmatpush1.msra.mxu0 0.0
    %2441 = vmatprep.subr.mxu0 0.0
    %2442 = vmatpush1.msra.mxu0 0.0
    %2443 = vmatprep.subr.mxu0 0.0
    %2444 = vmatpush1.msra.mxu0 0.0
    %2445 = vmatprep.subr.mxu0 0.0
    %2446 = vmatpush1.msra.mxu0 0.0
    %2447 = vmatprep.subr.mxu0 0.0
    %2448 = vmatpush1.msra.mxu0 0.0
    %2449 = vmatprep.subr.mxu0 0.0
    %2450 = vmatpush1.msra.mxu0 0.0
    %2451 = vmatprep.subr.mxu0 0.0
    %2452 = vmatpush1.msra.mxu0 0.0
    %2453 = vmatprep.mubr.f32.mxu0 0.0
    %v2454 = vand.u32 %v81, 4294901760
    %v2455 = vsub.f32 %v81, %v2454
    %v2456 = vand.u32 %v2455, 4294901760
    %v2457 = vsub.f32 %v2455, %v2456
    %v2458 = vand.u32 %v2457, 4294901760
    %2459 = vmatmul.mubr.f32.gmra.mrb[0].mxu0 %v2458
    %v2460 = vpop.f32.mrb[0].mxu0
    %v2461 = vadd.f32 0.0, %v2460
    %v2462 = vpop.f32.mrb[0].mxu0
    %2463 = vmatprep.mubr.f32.mxu0 0.0
    %v2464 = vand.u32 %v84, 4294901760
    %v2465 = vsub.f32 %v84, %v2464
    %v2466 = vand.u32 %v2465, 4294901760
    %v2467 = vsub.f32 %v2465, %v2466
    %v2468 = vand.u32 %v2467, 4294901760
    %2469 = vmatmul.mubr.f32.gmra.mrb[0].mxu0 %v2468
    %v2470 = vpop.f32.mrb[0].mxu0
    %v2471 = vadd.f32 0.0, %v2470
    %v2472 = vpop.f32.mrb[0].mxu0
    %2473 = vdwg.mxu0
    %2474 = vmatprep.subr.mxu0 0.0
    %v2475 = vand.u32 %v2385, 4294901760
    %v2476 = vsub.f32 %v2385, %v2475
    %v2477 = vand.u32 %v2476, 4294901760
    %v2478 = vsub.f32 %v2476, %v2477
    %v2479 = vand.u32 %v2478, 4294901760
    %2480 = vmatpush1.msra.mxu0 %v2479
    %2481 = vmatprep.subr.mxu0 0.0
    %v2482 = vand.u32 %v2386, 4294901760
    %v2483 = vsub.f32 %v2386, %v2482
    %v2484 = vand.u32 %v2483, 4294901760
    %v2485 = vsub.f32 %v2483, %v2484
    %v2486 = vand.u32 %v2485, 4294901760
    %2487 = vmatpush1.msra.mxu0 %v2486
    %2488 = vmatprep.subr.mxu0 0.0
    %2489 = vmatpush1.msra.mxu0 0.0
    %2490 = vmatprep.subr.mxu0 0.0
    %2491 = vmatpush1.msra.mxu0 0.0
    %2492 = vmatprep.subr.mxu0 0.0
    %2493 = vmatpush1.msra.mxu0 0.0
    %2494 = vmatprep.subr.mxu0 0.0
    %2495 = vmatpush1.msra.mxu0 0.0
    %2496 = vmatprep.subr.mxu0 0.0
    %2497 = vmatpush1.msra.mxu0 0.0
    %2498 = vmatprep.subr.mxu0 0.0
    %2499 = vmatpush1.msra.mxu0 0.0
    %2500 = vmatprep.subr.mxu0 0.0
    %2501 = vmatpush1.msra.mxu0 0.0
    %2502 = vmatprep.subr.mxu0 0.0
    %2503 = vmatpush1.msra.mxu0 0.0
    %2504 = vmatprep.subr.mxu0 0.0
    %2505 = vmatpush1.msra.mxu0 0.0
    %2506 = vmatprep.subr.mxu0 0.0
    %2507 = vmatpush1.msra.mxu0 0.0
    %2508 = vmatprep.subr.mxu0 0.0
    %2509 = vmatpush1.msra.mxu0 0.0
    %2510 = vmatprep.subr.mxu0 0.0
    %2511 = vmatpush1.msra.mxu0 0.0
    %2512 = vmatprep.subr.mxu0 0.0
    %2513 = vmatpush1.msra.mxu0 0.0
    %2514 = vmatprep.subr.mxu0 0.0
    %2515 = vmatpush1.msra.mxu0 0.0
    %2516 = vmatprep.subr.mxu0 0.0
    %2517 = vmatpush1.msra.mxu0 0.0
    %2518 = vmatprep.subr.mxu0 0.0
    %2519 = vmatpush1.msra.mxu0 0.0
    %2520 = vmatprep.subr.mxu0 0.0
    %2521 = vmatpush1.msra.mxu0 0.0
    %2522 = vmatprep.subr.mxu0 0.0
    %2523 = vmatpush1.msra.mxu0 0.0
    %2524 = vmatprep.subr.mxu0 0.0
    %2525 = vmatpush1.msra.mxu0 0.0
    %2526 = vmatprep.subr.mxu0 0.0
    %2527 = vmatpush1.msra.mxu0 0.0
    %2528 = vmatprep.subr.mxu0 0.0
    %2529 = vmatpush1.msra.mxu0 0.0
    %2530 = vmatprep.subr.mxu0 0.0
    %2531 = vmatpush1.msra.mxu0 0.0
    %2532 = vmatprep.subr.mxu0 0.0
    %2533 = vmatpush1.msra.mxu0 0.0
    %2534 = vmatprep.subr.mxu0 0.0
    %2535 = vmatpush1.msra.mxu0 0.0
    %2536 = vmatprep.subr.mxu0 0.0
    %2537 = vmatpush1.msra.mxu0 0.0
    %2538 = vmatprep.subr.mxu0 0.0
    %2539 = vmatpush1.msra.mxu0 0.0
    %2540 = vmatprep.subr.mxu0 0.0
    %2541 = vmatpush1.msra.mxu0 0.0
    %2542 = vmatprep.subr.mxu0 0.0
    %2543 = vmatpush1.msra.mxu0 0.0
    %2544 = vmatprep.subr.mxu0 0.0
    %2545 = vmatpush1.msra.mxu0 0.0
    %2546 = vmatprep.subr.mxu0 0.0
    %2547 = vmatpush1.msra.mxu0 0.0
    %2548 = vmatprep.mubr.f32.mxu0 0.0
    %v2549 = vand.u32 %v81, 4294901760
    %2550 = vmatmul.mubr.f32.gmra.mrb[0].mxu0 %v2549
    %v2551 = vpop.f32.mrb[0].mxu0
    %v2552 = vadd.f32 %v2461, %v2551
    %v2553 = vpop.f32.mrb[0].mxu0
    %2554 = vmatprep.mubr.f32.mxu0 0.0
    %v2555 = vand.u32 %v84, 4294901760
    %2556 = vmatmul.mubr.f32.gmra.mrb[0].mxu0 %v2555
    %v2557 = vpop.f32.mrb[0].mxu0
    %v2558 = vadd.f32 %v2471, %v2557
    %v2559 = vpop.f32.mrb[0].mxu0
    %2560 = vdwg.mxu0
    %2561 = vmatprep.subr.mxu0 0.0
    %v2562 = vand.u32 %v2385, 4294901760
    %v2563 = vsub.f32 %v2385, %v2562
    %2564 = vmatpush1.msra.mxu0 %v2563
    %2565 = vmatprep.subr.mxu0 0.0
    %v2566 = vand.u32 %v2386, 4294901760
    %v2567 = vsub.f32 %v2386, %v2566
    %2568 = vmatpush1.msra.mxu0 %v2567
    %2569 = vmatprep.subr.mxu0 0.0
    %2570 = vmatpush1.msra.mxu0 0.0
    %2571 = vmatprep.subr.mxu0 0.0
    %2572 = vmatpush1.msra.mxu0 0.0
    %2573 = vmatprep.subr.mxu0 0.0
    %2574 = vmatpush1.msra.mxu0 0.0
    %2575 = vmatprep.subr.mxu0 0.0
    %2576 = vmatpush1.msra.mxu0 0.0
    %2577 = vmatprep.subr.mxu0 0.0
    %2578 = vmatpush1.msra.mxu0 0.0
    %2579 = vmatprep.subr.mxu0 0.0
    %2580 = vmatpush1.msra.mxu0 0.0
    %2581 = vmatprep.subr.mxu0 0.0
    %2582 = vmatpush1.msra.mxu0 0.0
    %2583 = vmatprep.subr.mxu0 0.0
    %2584 = vmatpush1.msra.mxu0 0.0
    %2585 = vmatprep.subr.mxu0 0.0
    %2586 = vmatpush1.msra.mxu0 0.0
    %2587 = vmatprep.subr.mxu0 0.0
    %2588 = vmatpush1.msra.mxu0 0.0
    %2589 = vmatprep.subr.mxu0 0.0
    %2590 = vmatpush1.msra.mxu0 0.0
    %2591 = vmatprep.subr.mxu0 0.0
    %2592 = vmatpush1.msra.mxu0 0.0
    %2593 = vmatprep.subr.mxu0 0.0
    %2594 = vmatpush1.msra.mxu0 0.0
    %2595 = vmatprep.subr.mxu0 0.0
    %2596 = vmatpush1.msra.mxu0 0.0
    %2597 = vmatprep.subr.mxu0 0.0
    %2598 = vmatpush1.msra.mxu0 0.0
    %2599 = vmatprep.subr.mxu0 0.0
    %2600 = vmatpush1.msra.mxu0 0.0
    %2601 = vmatprep.subr.mxu0 0.0
    %2602 = vmatpush1.msra.mxu0 0.0
    %2603 = vmatprep.subr.mxu0 0.0
    %2604 = vmatpush1.msra.mxu0 0.0
    %2605 = vmatprep.subr.mxu0 0.0
    %2606 = vmatpush1.msra.mxu0 0.0
    %2607 = vmatprep.subr.mxu0 0.0
    %2608 = vmatpush1.msra.mxu0 0.0
    %2609 = vmatprep.subr.mxu0 0.0
    %2610 = vmatpush1.msra.mxu0 0.0
    %2611 = vmatprep.subr.mxu0 0.0
    %2612 = vmatpush1.msra.mxu0 0.0
    %2613 = vmatprep.subr.mxu0 0.0
    %2614 = vmatpush1.msra.mxu0 0.0
    %2615 = vmatprep.subr.mxu0 0.0
    %2616 = vmatpush1.msra.mxu0 0.0
    %2617 = vmatprep.subr.mxu0 0.0
    %2618 = vmatpush1.msra.mxu0 0.0
    %2619 = vmatprep.subr.mxu0 0.0
    %2620 = vmatpush1.msra.mxu0 0.0
    %2621 = vmatprep.subr.mxu0 0.0
    %2622 = vmatpush1.msra.mxu0 0.0
    %2623 = vmatprep.subr.mxu0 0.0
    %2624 = vmatpush1.msra.mxu0 0.0
    %2625 = vmatprep.subr.mxu0 0.0
    %2626 = vmatpush1.msra.mxu0 0.0
    %2627 = vmatprep.subr.mxu0 0.0
    %2628 = vmatpush1.msra.mxu0 0.0
    %2629 = vmatprep.mubr.f32.mxu0 0.0
    %v2630 = vand.u32 %v81, 4294901760
    %v2631 = vsub.f32 %v81, %v2630
    %2632 = vmatmul.mubr.f32.gmra.mrb[0].mxu0 %v2631
    %v2633 = vpop.f32.mrb[0].mxu0
    %v2634 = vadd.f32 %v2552, %v2633
    %v2635 = vpop.f32.mrb[0].mxu0
    %2636 = vmatprep.mubr.f32.mxu0 0.0
    %v2637 = vand.u32 %v84, 4294901760
    %v2638 = vsub.f32 %v84, %v2637
    %2639 = vmatmul.mubr.f32.gmra.mrb[0].mxu0 %v2638
    %v2640 = vpop.f32.mrb[0].mxu0
    %v2641 = vadd.f32 %v2558, %v2640
    %v2642 = vpop.f32.mrb[0].mxu0
    %2643 = vdwg.mxu0
    %2644 = vmatprep.subr.mxu0 0.0
    %v2645 = vand.u32 %v2385, 4294901760
    %2646 = vmatpush1.msra.mxu0 %v2645
    %2647 = vmatprep.subr.mxu0 0.0
    %v2648 = vand.u32 %v2386, 4294901760
    %2649 = vmatpush1.msra.mxu0 %v2648
    %2650 = vmatprep.subr.mxu0 0.0
    %2651 = vmatpush1.msra.mxu0 0.0
    %2652 = vmatprep.subr.mxu0 0.0
    %2653 = vmatpush1.msra.mxu0 0.0
    %2654 = vmatprep.subr.mxu0 0.0
    %2655 = vmatpush1.msra.mxu0 0.0
    %2656 = vmatprep.subr.mxu0 0.0
    %2657 = vmatpush1.msra.mxu0 0.0
    %2658 = vmatprep.subr.mxu0 0.0
    %2659 = vmatpush1.msra.mxu0 0.0
    %2660 = vmatprep.subr.mxu0 0.0
    %2661 = vmatpush1.msra.mxu0 0.0
    %2662 = vmatprep.subr.mxu0 0.0
    %2663 = vmatpush1.msra.mxu0 0.0
    %2664 = vmatprep.subr.mxu0 0.0
    %2665 = vmatpush1.msra.mxu0 0.0
    %2666 = vmatprep.subr.mxu0 0.0
    %2667 = vmatpush1.msra.mxu0 0.0
    %2668 = vmatprep.subr.mxu0 0.0
    %2669 = vmatpush1.msra.mxu0 0.0
    %2670 = vmatprep.subr.mxu0 0.0
    %2671 = vmatpush1.msra.mxu0 0.0
    %2672 = vmatprep.subr.mxu0 0.0
    %2673 = vmatpush1.msra.mxu0 0.0
    %2674 = vmatprep.subr.mxu0 0.0
    %2675 = vmatpush1.msra.mxu0 0.0
    %2676 = vmatprep.subr.mxu0 0.0
    %2677 = vmatpush1.msra.mxu0 0.0
    %2678 = vmatprep.subr.mxu0 0.0
    %2679 = vmatpush1.msra.mxu0 0.0
    %2680 = vmatprep.subr.mxu0 0.0
    %2681 = vmatpush1.msra.mxu0 0.0
    %2682 = vmatprep.subr.mxu0 0.0
    %2683 = vmatpush1.msra.mxu0 0.0
    %2684 = vmatprep.subr.mxu0 0.0
    %2685 = vmatpush1.msra.mxu0 0.0
    %2686 = vmatprep.subr.mxu0 0.0
    %2687 = vmatpush1.msra.mxu0 0.0
    %2688 = vmatprep.subr.mxu0 0.0
    %2689 = vmatpush1.msra.mxu0 0.0
    %2690 = vmatprep.subr.mxu0 0.0
    %2691 = vmatpush1.msra.mxu0 0.0
    %2692 = vmatprep.subr.mxu0 0.0
    %2693 = vmatpush1.msra.mxu0 0.0
    %2694 = vmatprep.subr.mxu0 0.0
    %2695 = vmatpush1.msra.mxu0 0.0
    %2696 = vmatprep.subr.mxu0 0.0
    %2697 = vmatpush1.msra.mxu0 0.0
    %2698 = vmatprep.subr.mxu0 0.0
    %2699 = vmatpush1.msra.mxu0 0.0
    %2700 = vmatprep.subr.mxu0 0.0
    %2701 = vmatpush1.msra.mxu0 0.0
    %2702 = vmatprep.subr.mxu0 0.0
    %2703 = vmatpush1.msra.mxu0 0.0
    %2704 = vmatprep.subr.mxu0 0.0
    %2705 = vmatpush1.msra.mxu0 0.0
    %2706 = vmatprep.subr.mxu0 0.0
    %2707 = vmatpush1.msra.mxu0 0.0
    %2708 = vmatprep.subr.mxu0 0.0
    %2709 = vmatpush1.msra.mxu0 0.0
    %2710 = vmatprep.mubr.f32.mxu0 0.0
    %v2711 = vand.u32 %v81, 4294901760
    %v2712 = vsub.f32 %v81, %v2711
    %v2713 = vand.u32 %v2712, 4294901760
    %2714 = vmatmul.mubr.f32.gmra.mrb[0].mxu0 %v2713
    %v2715 = vpop.f32.mrb[0].mxu0
    %v2716 = vadd.f32 %v2634, %v2715
    %v2717 = vpop.f32.mrb[0].mxu0
    %2718 = vmatprep.mubr.f32.mxu0 0.0
    %v2719 = vand.u32 %v84, 4294901760
    %v2720 = vsub.f32 %v84, %v2719
    %v2721 = vand.u32 %v2720, 4294901760
    %2722 = vmatmul.mubr.f32.gmra.mrb[0].mxu0 %v2721
    %v2723 = vpop.f32.mrb[0].mxu0
    %v2724 = vadd.f32 %v2641, %v2723
    %v2725 = vpop.f32.mrb[0].mxu0
    %2726 = vdwg.mxu0
    %2727 = vmatprep.subr.mxu0 0.0
    %v2728 = vand.u32 %v2385, 4294901760
    %v2729 = vsub.f32 %v2385, %v2728
    %v2730 = vand.u32 %v2729, 4294901760
    %2731 = vmatpush1.msra.mxu0 %v2730
    %2732 = vmatprep.subr.mxu0 0.0
    %v2733 = vand.u32 %v2386, 4294901760
    %v2734 = vsub.f32 %v2386, %v2733
    %v2735 = vand.u32 %v2734, 4294901760
    %2736 = vmatpush1.msra.mxu0 %v2735
    %2737 = vmatprep.subr.mxu0 0.0
    %2738 = vmatpush1.msra.mxu0 0.0
    %2739 = vmatprep.subr.mxu0 0.0
    %2740 = vmatpush1.msra.mxu0 0.0
    %2741 = vmatprep.subr.mxu0 0.0
    %2742 = vmatpush1.msra.mxu0 0.0
    %2743 = vmatprep.subr.mxu0 0.0
    %2744 = vmatpush1.msra.mxu0 0.0
    %2745 = vmatprep.subr.mxu0 0.0
    %2746 = vmatpush1.msra.mxu0 0.0
    %2747 = vmatprep.subr.mxu0 0.0
    %2748 = vmatpush1.msra.mxu0 0.0
    %2749 = vmatprep.subr.mxu0 0.0
    %2750 = vmatpush1.msra.mxu0 0.0
    %2751 = vmatprep.subr.mxu0 0.0
    %2752 = vmatpush1.msra.mxu0 0.0
    %2753 = vmatprep.subr.mxu0 0.0
    %2754 = vmatpush1.msra.mxu0 0.0
    %2755 = vmatprep.subr.mxu0 0.0
    %2756 = vmatpush1.msra.mxu0 0.0
    %2757 = vmatprep.subr.mxu0 0.0
    %2758 = vmatpush1.msra.mxu0 0.0
    %2759 = vmatprep.subr.mxu0 0.0
    %2760 = vmatpush1.msra.mxu0 0.0
    %2761 = vmatprep.subr.mxu0 0.0
    %2762 = vmatpush1.msra.mxu0 0.0
    %2763 = vmatprep.subr.mxu0 0.0
    %2764 = vmatpush1.msra.mxu0 0.0
    %2765 = vmatprep.subr.mxu0 0.0
    %2766 = vmatpush1.msra.mxu0 0.0
    %2767 = vmatprep.subr.mxu0 0.0
    %2768 = vmatpush1.msra.mxu0 0.0
    %2769 = vmatprep.subr.mxu0 0.0
    %2770 = vmatpush1.msra.mxu0 0.0
    %2771 = vmatprep.subr.mxu0 0.0
    %2772 = vmatpush1.msra.mxu0 0.0
    %2773 = vmatprep.subr.mxu0 0.0
    %2774 = vmatpush1.msra.mxu0 0.0
    %2775 = vmatprep.subr.mxu0 0.0
    %2776 = vmatpush1.msra.mxu0 0.0
    %2777 = vmatprep.subr.mxu0 0.0
    %2778 = vmatpush1.msra.mxu0 0.0
    %2779 = vmatprep.subr.mxu0 0.0
    %2780 = vmatpush1.msra.mxu0 0.0
    %2781 = vmatprep.subr.mxu0 0.0
    %2782 = vmatpush1.msra.mxu0 0.0
    %2783 = vmatprep.subr.mxu0 0.0
    %2784 = vmatpush1.msra.mxu0 0.0
    %2785 = vmatprep.subr.mxu0 0.0
    %2786 = vmatpush1.msra.mxu0 0.0
    %2787 = vmatprep.subr.mxu0 0.0
    %2788 = vmatpush1.msra.mxu0 0.0
    %2789 = vmatprep.subr.mxu0 0.0
    %2790 = vmatpush1.msra.mxu0 0.0
    %2791 = vmatprep.subr.mxu0 0.0
    %2792 = vmatpush1.msra.mxu0 0.0
    %2793 = vmatprep.subr.mxu0 0.0
    %2794 = vmatpush1.msra.mxu0 0.0
    %2795 = vmatprep.subr.mxu0 0.0
    %2796 = vmatpush1.msra.mxu0 0.0
    %2797 = vmatprep.mubr.f32.mxu0 0.0
    %v2798 = vand.u32 %v81, 4294901760
    %2799 = vmatmul.mubr.f32.gmra.mrb[0].mxu0 %v2798
    %v2800 = vpop.f32.mrb[0].mxu0
    %v2801 = vadd.f32 %v2716, %v2800
    %v2802 = vpop.f32.mrb[0].mxu0
    %2803 = vmatprep.mubr.f32.mxu0 0.0
    %v2804 = vand.u32 %v84, 4294901760
    %2805 = vmatmul.mubr.f32.gmra.mrb[0].mxu0 %v2804
    %v2806 = vpop.f32.mrb[0].mxu0
    %v2807 = vadd.f32 %v2724, %v2806
    %v2808 = vpop.f32.mrb[0].mxu0
    %2809 = vdwg.mxu0
    %2810 = vmatprep.subr.mxu0 0.0
    %v2811 = vand.u32 %v2385, 4294901760
    %2812 = vmatpush1.msra.mxu0 %v2811
    %2813 = vmatprep.subr.mxu0 0.0
    %v2814 = vand.u32 %v2386, 4294901760
    %2815 = vmatpush1.msra.mxu0 %v2814
    %2816 = vmatprep.subr.mxu0 0.0
    %2817 = vmatpush1.msra.mxu0 0.0
    %2818 = vmatprep.subr.mxu0 0.0
    %2819 = vmatpush1.msra.mxu0 0.0
    %2820 = vmatprep.subr.mxu0 0.0
    %2821 = vmatpush1.msra.mxu0 0.0
    %2822 = vmatprep.subr.mxu0 0.0
    %2823 = vmatpush1.msra.mxu0 0.0
    %2824 = vmatprep.subr.mxu0 0.0
    %2825 = vmatpush1.msra.mxu0 0.0
    %2826 = vmatprep.subr.mxu0 0.0
    %2827 = vmatpush1.msra.mxu0 0.0
    %2828 = vmatprep.subr.mxu0 0.0
    %2829 = vmatpush1.msra.mxu0 0.0
    %2830 = vmatprep.subr.mxu0 0.0
    %2831 = vmatpush1.msra.mxu0 0.0
    %2832 = vmatprep.subr.mxu0 0.0
    %2833 = vmatpush1.msra.mxu0 0.0
    %2834 = vmatprep.subr.mxu0 0.0
    %2835 = vmatpush1.msra.mxu0 0.0
    %2836 = vmatprep.subr.mxu0 0.0
    %2837 = vmatpush1.msra.mxu0 0.0
    %2838 = vmatprep.subr.mxu0 0.0
    %2839 = vmatpush1.msra.mxu0 0.0
    %2840 = vmatprep.subr.mxu0 0.0
    %2841 = vmatpush1.msra.mxu0 0.0
    %2842 = vmatprep.subr.mxu0 0.0
    %2843 = vmatpush1.msra.mxu0 0.0
    %2844 = vmatprep.subr.mxu0 0.0
    %2845 = vmatpush1.msra.mxu0 0.0
    %2846 = vmatprep.subr.mxu0 0.0
    %2847 = vmatpush1.msra.mxu0 0.0
    %2848 = vmatprep.subr.mxu0 0.0
    %2849 = vmatpush1.msra.mxu0 0.0
    %2850 = vmatprep.subr.mxu0 0.0
    %2851 = vmatpush1.msra.mxu0 0.0
    %2852 = vmatprep.subr.mxu0 0.0
    %2853 = vmatpush1.msra.mxu0 0.0
    %2854 = vmatprep.subr.mxu0 0.0
    %2855 = vmatpush1.msra.mxu0 0.0
    %2856 = vmatprep.subr.mxu0 0.0
    %2857 = vmatpush1.msra.mxu0 0.0
    %2858 = vmatprep.subr.mxu0 0.0
    %2859 = vmatpush1.msra.mxu0 0.0
    %2860 = vmatprep.subr.mxu0 0.0
    %2861 = vmatpush1.msra.mxu0 0.0
    %2862 = vmatprep.subr.mxu0 0.0
    %2863 = vmatpush1.msra.mxu0 0.0
    %2864 = vmatprep.subr.mxu0 0.0
    %2865 = vmatpush1.msra.mxu0 0.0
    %2866 = vmatprep.subr.mxu0 0.0
    %2867 = vmatpush1.msra.mxu0 0.0
    %2868 = vmatprep.subr.mxu0 0.0
    %2869 = vmatpush1.msra.mxu0 0.0
    %2870 = vmatprep.subr.mxu0 0.0
    %2871 = vmatpush1.msra.mxu0 0.0
    %2872 = vmatprep.subr.mxu0 0.0
    %2873 = vmatpush1.msra.mxu0 0.0
    %2874 = vmatprep.subr.mxu0 0.0
    %2875 = vmatpush1.msra.mxu0 0.0
    %2876 = vmatprep.mubr.f32.mxu0 0.0
    %v2877 = vand.u32 %v81, 4294901760
    %2878 = vmatmul.mubr.f32.gmra.mrb[0].mxu0 %v2877
    %v2879 = vpop.f32.mrb[0].mxu0
    %v2880 = vadd.f32 %v2801, %v2879
    %v2881 = vpop.f32.mrb[0].mxu0
    %2882 = vmatprep.mubr.f32.mxu0 0.0
    %v2883 = vand.u32 %v84, 4294901760
    %2884 = vmatmul.mubr.f32.gmra.mrb[0].mxu0 %v2883
    %v2885 = vpop.f32.mrb[0].mxu0
    %v2886 = vadd.f32 %v2807, %v2885
    %v2887 = vpop.f32.mrb[0].mxu0
    %2888 = vdwg.mxu0
    %v2890 = vsel %vm600, %v2880, 0
    %v2893 = vsel %vm600, %v2886, 0
    %2895 = vmatprep.subr.mxu0 0.0
    %v2896 = vand.u32 %v588, 4294901760
    %2897 = vmatpush1.msra.mxu0 %v2896
    %2898 = vmatprep.subr.mxu0 0.0
    %v2899 = vand.u32 %v589, 4294901760
    %2900 = vmatpush1.msra.mxu0 %v2899
    %2901 = vmatprep.subr.mxu0 0.0
    %v2902 = vand.u32 %v590, 4294901760
    %2903 = vmatpush1.msra.mxu0 %v2902
    %2904 = vmatprep.subr.mxu0 0.0
    %v2905 = vand.u32 %v591, 4294901760
    %2906 = vmatpush1.msra.mxu0 %v2905
    %2907 = vmatprep.subr.mxu0 0.0
    %v2908 = vand.u32 %v592, 4294901760
    %2909 = vmatpush1.msra.mxu0 %v2908
    %2910 = vmatprep.subr.mxu0 0.0
    %v2911 = vand.u32 %v593, 4294901760
    %2912 = vmatpush1.msra.mxu0 %v2911
    %2913 = vmatprep.subr.mxu0 0.0
    %v2914 = vand.u32 %v594, 4294901760
    %2915 = vmatpush1.msra.mxu0 %v2914
    %2916 = vmatprep.subr.mxu0 0.0
    %v2917 = vand.u32 %v595, 4294901760
    %2918 = vmatpush1.msra.mxu0 %v2917
    %2919 = vmatprep.subr.mxu0 0.0
    %v2920 = vand.u32 %v596, 4294901760
    %2921 = vmatpush1.msra.mxu0 %v2920
    %2922 = vmatprep.subr.mxu0 0.0
    %v2923 = vand.u32 %v597, 4294901760
    %2924 = vmatpush1.msra.mxu0 %v2923
    %2925 = vmatprep.subr.mxu0 0.0
    %v2926 = vand.u32 %v598, 4294901760
    %2927 = vmatpush1.msra.mxu0 %v2926
    %2928 = vmatprep.subr.mxu0 0.0
    %v2929 = vand.u32 %v599, 4294901760
    %2930 = vmatpush1.msra.mxu0 %v2929
    %2931 = vmatprep.subr.mxu0 0.0
    %2932 = vmatpush1.msra.mxu0 0.0
    %2933 = vmatprep.subr.mxu0 0.0
    %2934 = vmatpush1.msra.mxu0 0.0
    %2935 = vmatprep.subr.mxu0 0.0
    %2936 = vmatpush1.msra.mxu0 0.0
    %2937 = vmatprep.subr.mxu0 0.0
    %2938 = vmatpush1.msra.mxu0 0.0
    %2939 = vmatprep.subr.mxu0 0.0
    %2940 = vmatpush1.msra.mxu0 0.0
    %2941 = vmatprep.subr.mxu0 0.0
    %2942 = vmatpush1.msra.mxu0 0.0
    %2943 = vmatprep.subr.mxu0 0.0
    %2944 = vmatpush1.msra.mxu0 0.0
    %2945 = vmatprep.subr.mxu0 0.0
    %2946 = vmatpush1.msra.mxu0 0.0
    %2947 = vmatprep.subr.mxu0 0.0
    %2948 = vmatpush1.msra.mxu0 0.0
    %2949 = vmatprep.subr.mxu0 0.0
    %2950 = vmatpush1.msra.mxu0 0.0
    %2951 = vmatprep.subr.mxu0 0.0
    %2952 = vmatpush1.msra.mxu0 0.0
    %2953 = vmatprep.subr.mxu0 0.0
    %2954 = vmatpush1.msra.mxu0 0.0
    %2955 = vmatprep.subr.mxu0 0.0
    %2956 = vmatpush1.msra.mxu0 0.0
    %2957 = vmatprep.subr.mxu0 0.0
    %2958 = vmatpush1.msra.mxu0 0.0
    %2959 = vmatprep.subr.mxu0 0.0
    %2960 = vmatpush1.msra.mxu0 0.0
    %2961 = vmatprep.subr.mxu0 0.0
    %2962 = vmatpush1.msra.mxu0 0.0
    %2963 = vmatprep.subr.mxu0 0.0
    %2964 = vmatpush1.msra.mxu0 0.0
    %2965 = vmatprep.subr.mxu0 0.0
    %2966 = vmatpush1.msra.mxu0 0.0
    %2967 = vmatprep.subr.mxu0 0.0
    %2968 = vmatpush1.msra.mxu0 0.0
    %2969 = vmatprep.subr.mxu0 0.0
    %2970 = vmatpush1.msra.mxu0 0.0
    %2971 = vmatprep.mubr.f32.mxu0 0.0
    %v2972 = vand.u32 %v2890, 4294901760
    %v2973 = vsub.f32 %v2890, %v2972
    %v2974 = vand.u32 %v2973, 4294901760
    %v2975 = vsub.f32 %v2973, %v2974
    %v2976 = vand.u32 %v2975, 4294901760
    %2977 = vmatmul.mubr.f32.gmra.mrb[0].mxu0 %v2976
    %v2978 = vpop.f32.mrb[0].mxu0
    %v2979 = vadd.f32 0.0, %v2978
    %v2980 = vpop.f32.mrb[0].mxu0
    %2981 = vmatprep.mubr.f32.mxu0 0.0
    %v2982 = vand.u32 %v2893, 4294901760
    %v2983 = vsub.f32 %v2893, %v2982
    %v2984 = vand.u32 %v2983, 4294901760
    %v2985 = vsub.f32 %v2983, %v2984
    %v2986 = vand.u32 %v2985, 4294901760
    %2987 = vmatmul.mubr.f32.gmra.mrb[0].mxu0 %v2986
    %v2988 = vpop.f32.mrb[0].mxu0
    %v2989 = vadd.f32 0.0, %v2988
    %v2990 = vpop.f32.mrb[0].mxu0
    %2991 = vdwg.mxu0
    %2992 = vmatprep.subr.mxu0 0.0
    %v2993 = vand.u32 %v588, 4294901760
    %v2994 = vsub.f32 %v588, %v2993
    %v2995 = vand.u32 %v2994, 4294901760
    %v2996 = vsub.f32 %v2994, %v2995
    %v2997 = vand.u32 %v2996, 4294901760
    %2998 = vmatpush1.msra.mxu0 %v2997
    %2999 = vmatprep.subr.mxu0 0.0
    %v3000 = vand.u32 %v589, 4294901760
    %v3001 = vsub.f32 %v589, %v3000
    %v3002 = vand.u32 %v3001, 4294901760
    %v3003 = vsub.f32 %v3001, %v3002
    %v3004 = vand.u32 %v3003, 4294901760
    %3005 = vmatpush1.msra.mxu0 %v3004
    %3006 = vmatprep.subr.mxu0 0.0
    %v3007 = vand.u32 %v590, 4294901760
    %v3008 = vsub.f32 %v590, %v3007
    %v3009 = vand.u32 %v3008, 4294901760
    %v3010 = vsub.f32 %v3008, %v3009
    %v3011 = vand.u32 %v3010, 4294901760
    %3012 = vmatpush1.msra.mxu0 %v3011
    %3013 = vmatprep.subr.mxu0 0.0
    %v3014 = vand.u32 %v591, 4294901760
    %v3015 = vsub.f32 %v591, %v3014
    %v3016 = vand.u32 %v3015, 4294901760
    %v3017 = vsub.f32 %v3015, %v3016
    %v3018 = vand.u32 %v3017, 4294901760
    %3019 = vmatpush1.msra.mxu0 %v3018
    %3020 = vmatprep.subr.mxu0 0.0
    %v3021 = vand.u32 %v592, 4294901760
    %v3022 = vsub.f32 %v592, %v3021
    %v3023 = vand.u32 %v3022, 4294901760
    %v3024 = vsub.f32 %v3022, %v3023
    %v3025 = vand.u32 %v3024, 4294901760
    %3026 = vmatpush1.msra.mxu0 %v3025
    %3027 = vmatprep.subr.mxu0 0.0
    %v3028 = vand.u32 %v593, 4294901760
    %v3029 = vsub.f32 %v593, %v3028
    %v3030 = vand.u32 %v3029, 4294901760
    %v3031 = vsub.f32 %v3029, %v3030
    %v3032 = vand.u32 %v3031, 4294901760
    %3033 = vmatpush1.msra.mxu0 %v3032
    %3034 = vmatprep.subr.mxu0 0.0
    %v3035 = vand.u32 %v594, 4294901760
    %v3036 = vsub.f32 %v594, %v3035
    %v3037 = vand.u32 %v3036, 4294901760
    %v3038 = vsub.f32 %v3036, %v3037
    %v3039 = vand.u32 %v3038, 4294901760
    %3040 = vmatpush1.msra.mxu0 %v3039
    %3041 = vmatprep.subr.mxu0 0.0
    %v3042 = vand.u32 %v595, 4294901760
    %v3043 = vsub.f32 %v595, %v3042
    %v3044 = vand.u32 %v3043, 4294901760
    %v3045 = vsub.f32 %v3043, %v3044
    %v3046 = vand.u32 %v3045, 4294901760
    %3047 = vmatpush1.msra.mxu0 %v3046
    %3048 = vmatprep.subr.mxu0 0.0
    %v3049 = vand.u32 %v596, 4294901760
    %v3050 = vsub.f32 %v596, %v3049
    %v3051 = vand.u32 %v3050, 4294901760
    %v3052 = vsub.f32 %v3050, %v3051
    %v3053 = vand.u32 %v3052, 4294901760
    %3054 = vmatpush1.msra.mxu0 %v3053
    %3055 = vmatprep.subr.mxu0 0.0
    %v3056 = vand.u32 %v597, 4294901760
    %v3057 = vsub.f32 %v597, %v3056
    %v3058 = vand.u32 %v3057, 4294901760
    %v3059 = vsub.f32 %v3057, %v3058
    %v3060 = vand.u32 %v3059, 4294901760
    %3061 = vmatpush1.msra.mxu0 %v3060
    %3062 = vmatprep.subr.mxu0 0.0
    %v3063 = vand.u32 %v598, 4294901760
    %v3064 = vsub.f32 %v598, %v3063
    %v3065 = vand.u32 %v3064, 4294901760
    %v3066 = vsub.f32 %v3064, %v3065
    %v3067 = vand.u32 %v3066, 4294901760
    %3068 = vmatpush1.msra.mxu0 %v3067
    %3069 = vmatprep.subr.mxu0 0.0
    %v3070 = vand.u32 %v599, 4294901760
    %v3071 = vsub.f32 %v599, %v3070
    %v3072 = vand.u32 %v3071, 4294901760
    %v3073 = vsub.f32 %v3071, %v3072
    %v3074 = vand.u32 %v3073, 4294901760
    %3075 = vmatpush1.msra.mxu0 %v3074
    %3076 = vmatprep.subr.mxu0 0.0
    %3077 = vmatpush1.msra.mxu0 0.0
    %3078 = vmatprep.subr.mxu0 0.0
    %3079 = vmatpush1.msra.mxu0 0.0
    %3080 = vmatprep.subr.mxu0 0.0
    %3081 = vmatpush1.msra.mxu0 0.0
    %3082 = vmatprep.subr.mxu0 0.0
    %3083 = vmatpush1.msra.mxu0 0.0
    %3084 = vmatprep.subr.mxu0 0.0
    %3085 = vmatpush1.msra.mxu0 0.0
    %3086 = vmatprep.subr.mxu0 0.0
    %3087 = vmatpush1.msra.mxu0 0.0
    %3088 = vmatprep.subr.mxu0 0.0
    %3089 = vmatpush1.msra.mxu0 0.0
    %3090 = vmatprep.subr.mxu0 0.0
    %3091 = vmatpush1.msra.mxu0 0.0
    %3092 = vmatprep.subr.mxu0 0.0
    %3093 = vmatpush1.msra.mxu0 0.0
    %3094 = vmatprep.subr.mxu0 0.0
    %3095 = vmatpush1.msra.mxu0 0.0
    %3096 = vmatprep.subr.mxu0 0.0
    %3097 = vmatpush1.msra.mxu0 0.0
    %3098 = vmatprep.subr.mxu0 0.0
    %3099 = vmatpush1.msra.mxu0 0.0
    %3100 = vmatprep.subr.mxu0 0.0
    %3101 = vmatpush1.msra.mxu0 0.0
    %3102 = vmatprep.subr.mxu0 0.0
    %3103 = vmatpush1.msra.mxu0 0.0
    %3104 = vmatprep.subr.mxu0 0.0
    %3105 = vmatpush1.msra.mxu0 0.0
    %3106 = vmatprep.subr.mxu0 0.0
    %3107 = vmatpush1.msra.mxu0 0.0
    %3108 = vmatprep.subr.mxu0 0.0
    %3109 = vmatpush1.msra.mxu0 0.0
    %3110 = vmatprep.subr.mxu0 0.0
    %3111 = vmatpush1.msra.mxu0 0.0
    %3112 = vmatprep.subr.mxu0 0.0
    %3113 = vmatpush1.msra.mxu0 0.0
    %3114 = vmatprep.subr.mxu0 0.0
    %3115 = vmatpush1.msra.mxu0 0.0
    %3116 = vmatprep.mubr.f32.mxu0 0.0
    %v3117 = vand.u32 %v2890, 4294901760
    %3118 = vmatmul.mubr.f32.gmra.mrb[0].mxu0 %v3117
    %v3119 = vpop.f32.mrb[0].mxu0
    %v3120 = vadd.f32 %v2979, %v3119
    %v3121 = vpop.f32.mrb[0].mxu0
    %3122 = vmatprep.mubr.f32.mxu0 0.0
    %v3123 = vand.u32 %v2893, 4294901760
    %3124 = vmatmul.mubr.f32.gmra.mrb[0].mxu0 %v3123
    %v3125 = vpop.f32.mrb[0].mxu0
    %v3126 = vadd.f32 %v2989, %v3125
    %v3127 = vpop.f32.mrb[0].mxu0
    %3128 = vdwg.mxu0
    %3129 = vmatprep.subr.mxu0 0.0
    %v3130 = vand.u32 %v588, 4294901760
    %v3131 = vsub.f32 %v588, %v3130
    %3132 = vmatpush1.msra.mxu0 %v3131
    %3133 = vmatprep.subr.mxu0 0.0
    %v3134 = vand.u32 %v589, 4294901760
    %v3135 = vsub.f32 %v589, %v3134
    %3136 = vmatpush1.msra.mxu0 %v3135
    %3137 = vmatprep.subr.mxu0 0.0
    %v3138 = vand.u32 %v590, 4294901760
    %v3139 = vsub.f32 %v590, %v3138
    %3140 = vmatpush1.msra.mxu0 %v3139
    %3141 = vmatprep.subr.mxu0 0.0
    %v3142 = vand.u32 %v591, 4294901760
    %v3143 = vsub.f32 %v591, %v3142
    %3144 = vmatpush1.msra.mxu0 %v3143
    %3145 = vmatprep.subr.mxu0 0.0
    %v3146 = vand.u32 %v592, 4294901760
    %v3147 = vsub.f32 %v592, %v3146
    %3148 = vmatpush1.msra.mxu0 %v3147
    %3149 = vmatprep.subr.mxu0 0.0
    %v3150 = vand.u32 %v593, 4294901760
    %v3151 = vsub.f32 %v593, %v3150
    %3152 = vmatpush1.msra.mxu0 %v3151
    %3153 = vmatprep.subr.mxu0 0.0
    %v3154 = vand.u32 %v594, 4294901760
    %v3155 = vsub.f32 %v594, %v3154
    %3156 = vmatpush1.msra.mxu0 %v3155
    %3157 = vmatprep.subr.mxu0 0.0
    %v3158 = vand.u32 %v595, 4294901760
    %v3159 = vsub.f32 %v595, %v3158
    %3160 = vmatpush1.msra.mxu0 %v3159
    %3161 = vmatprep.subr.mxu0 0.0
    %v3162 = vand.u32 %v596, 4294901760
    %v3163 = vsub.f32 %v596, %v3162
    %3164 = vmatpush1.msra.mxu0 %v3163
    %3165 = vmatprep.subr.mxu0 0.0
    %v3166 = vand.u32 %v597, 4294901760
    %v3167 = vsub.f32 %v597, %v3166
    %3168 = vmatpush1.msra.mxu0 %v3167
    %3169 = vmatprep.subr.mxu0 0.0
    %v3170 = vand.u32 %v598, 4294901760
    %v3171 = vsub.f32 %v598, %v3170
    %3172 = vmatpush1.msra.mxu0 %v3171
    %3173 = vmatprep.subr.mxu0 0.0
    %v3174 = vand.u32 %v599, 4294901760
    %v3175 = vsub.f32 %v599, %v3174
    %3176 = vmatpush1.msra.mxu0 %v3175
    %3177 = vmatprep.subr.mxu0 0.0
    %3178 = vmatpush1.msra.mxu0 0.0
    %3179 = vmatprep.subr.mxu0 0.0
    %3180 = vmatpush1.msra.mxu0 0.0
    %3181 = vmatprep.subr.mxu0 0.0
    %3182 = vmatpush1.msra.mxu0 0.0
    %3183 = vmatprep.subr.mxu0 0.0
    %3184 = vmatpush1.msra.mxu0 0.0
    %3185 = vmatprep.subr.mxu0 0.0
    %3186 = vmatpush1.msra.mxu0 0.0
    %3187 = vmatprep.subr.mxu0 0.0
    %3188 = vmatpush1.msra.mxu0 0.0
    %3189 = vmatprep.subr.mxu0 0.0
    %3190 = vmatpush1.msra.mxu0 0.0
    %3191 = vmatprep.subr.mxu0 0.0
    %3192 = vmatpush1.msra.mxu0 0.0
    %3193 = vmatprep.subr.mxu0 0.0
    %3194 = vmatpush1.msra.mxu0 0.0
    %3195 = vmatprep.subr.mxu0 0.0
    %3196 = vmatpush1.msra.mxu0 0.0
    %3197 = vmatprep.subr.mxu0 0.0
    %3198 = vmatpush1.msra.mxu0 0.0
    %3199 = vmatprep.subr.mxu0 0.0
    %3200 = vmatpush1.msra.mxu0 0.0
    %3201 = vmatprep.subr.mxu0 0.0
    %3202 = vmatpush1.msra.mxu0 0.0
    %3203 = vmatprep.subr.mxu0 0.0
    %3204 = vmatpush1.msra.mxu0 0.0
    %3205 = vmatprep.subr.mxu0 0.0
    %3206 = vmatpush1.msra.mxu0 0.0
    %3207 = vmatprep.subr.mxu0 0.0
    %3208 = vmatpush1.msra.mxu0 0.0
    %3209 = vmatprep.subr.mxu0 0.0
    %3210 = vmatpush1.msra.mxu0 0.0
    %3211 = vmatprep.subr.mxu0 0.0
    %3212 = vmatpush1.msra.mxu0 0.0
    %3213 = vmatprep.subr.mxu0 0.0
    %3214 = vmatpush1.msra.mxu0 0.0
    %3215 = vmatprep.subr.mxu0 0.0
    %3216 = vmatpush1.msra.mxu0 0.0
    %3217 = vmatprep.mubr.f32.mxu0 0.0
    %v3218 = vand.u32 %v2890, 4294901760
    %v3219 = vsub.f32 %v2890, %v3218
    %3220 = vmatmul.mubr.f32.gmra.mrb[0].mxu0 %v3219
    %v3221 = vpop.f32.mrb[0].mxu0
    %v3222 = vadd.f32 %v3120, %v3221
    %v3223 = vpop.f32.mrb[0].mxu0
    %3224 = vmatprep.mubr.f32.mxu0 0.0
    %v3225 = vand.u32 %v2893, 4294901760
    %v3226 = vsub.f32 %v2893, %v3225
    %3227 = vmatmul.mubr.f32.gmra.mrb[0].mxu0 %v3226
    %v3228 = vpop.f32.mrb[0].mxu0
    %v3229 = vadd.f32 %v3126, %v3228
    %v3230 = vpop.f32.mrb[0].mxu0
    %3231 = vdwg.mxu0
    %3232 = vmatprep.subr.mxu0 0.0
    %v3233 = vand.u32 %v588, 4294901760
    %3234 = vmatpush1.msra.mxu0 %v3233
    %3235 = vmatprep.subr.mxu0 0.0
    %v3236 = vand.u32 %v589, 4294901760
    %3237 = vmatpush1.msra.mxu0 %v3236
    %3238 = vmatprep.subr.mxu0 0.0
    %v3239 = vand.u32 %v590, 4294901760
    %3240 = vmatpush1.msra.mxu0 %v3239
    %3241 = vmatprep.subr.mxu0 0.0
    %v3242 = vand.u32 %v591, 4294901760
    %3243 = vmatpush1.msra.mxu0 %v3242
    %3244 = vmatprep.subr.mxu0 0.0
    %v3245 = vand.u32 %v592, 4294901760
    %3246 = vmatpush1.msra.mxu0 %v3245
    %3247 = vmatprep.subr.mxu0 0.0
    %v3248 = vand.u32 %v593, 4294901760
    %3249 = vmatpush1.msra.mxu0 %v3248
    %3250 = vmatprep.subr.mxu0 0.0
    %v3251 = vand.u32 %v594, 4294901760
    %3252 = vmatpush1.msra.mxu0 %v3251
    %3253 = vmatprep.subr.mxu0 0.0
    %v3254 = vand.u32 %v595, 4294901760
    %3255 = vmatpush1.msra.mxu0 %v3254
    %3256 = vmatprep.subr.mxu0 0.0
    %v3257 = vand.u32 %v596, 4294901760
    %3258 = vmatpush1.msra.mxu0 %v3257
    %3259 = vmatprep.subr.mxu0 0.0
    %v3260 = vand.u32 %v597, 4294901760
    %3261 = vmatpush1.msra.mxu0 %v3260
    %3262 = vmatprep.subr.mxu0 0.0
    %v3263 = vand.u32 %v598, 4294901760
    %3264 = vmatpush1.msra.mxu0 %v3263
    %3265 = vmatprep.subr.mxu0 0.0
    %v3266 = vand.u32 %v599, 4294901760
    %3267 = vmatpush1.msra.mxu0 %v3266
    %3268 = vmatprep.subr.mxu0 0.0
    %3269 = vmatpush1.msra.mxu0 0.0
    %3270 = vmatprep.subr.mxu0 0.0
    %3271 = vmatpush1.msra.mxu0 0.0
    %3272 = vmatprep.subr.mxu0 0.0
    %3273 = vmatpush1.msra.mxu0 0.0
    %3274 = vmatprep.subr.mxu0 0.0
    %3275 = vmatpush1.msra.mxu0 0.0
    %3276 = vmatprep.subr.mxu0 0.0
    %3277 = vmatpush1.msra.mxu0 0.0
    %3278 = vmatprep.subr.mxu0 0.0
    %3279 = vmatpush1.msra.mxu0 0.0
    %3280 = vmatprep.subr.mxu0 0.0
    %3281 = vmatpush1.msra.mxu0 0.0
    %3282 = vmatprep.subr.mxu0 0.0
    %3283 = vmatpush1.msra.mxu0 0.0
    %3284 = vmatprep.subr.mxu0 0.0
    %3285 = vmatpush1.msra.mxu0 0.0
    %3286 = vmatprep.subr.mxu0 0.0
    %3287 = vmatpush1.msra.mxu0 0.0
    %3288 = vmatprep.subr.mxu0 0.0
    %3289 = vmatpush1.msra.mxu0 0.0
    %3290 = vmatprep.subr.mxu0 0.0
    %3291 = vmatpush1.msra.mxu0 0.0
    %3292 = vmatprep.subr.mxu0 0.0
    %3293 = vmatpush1.msra.mxu0 0.0
    %3294 = vmatprep.subr.mxu0 0.0
    %3295 = vmatpush1.msra.mxu0 0.0
    %3296 = vmatprep.subr.mxu0 0.0
    %3297 = vmatpush1.msra.mxu0 0.0
    %3298 = vmatprep.subr.mxu0 0.0
    %3299 = vmatpush1.msra.mxu0 0.0
    %3300 = vmatprep.subr.mxu0 0.0
    %3301 = vmatpush1.msra.mxu0 0.0
    %3302 = vmatprep.subr.mxu0 0.0
    %3303 = vmatpush1.msra.mxu0 0.0
    %3304 = vmatprep.subr.mxu0 0.0
    %3305 = vmatpush1.msra.mxu0 0.0
    %3306 = vmatprep.subr.mxu0 0.0
    %3307 = vmatpush1.msra.mxu0 0.0
    %3308 = vmatprep.mubr.f32.mxu0 0.0
    %v3309 = vand.u32 %v2890, 4294901760
    %v3310 = vsub.f32 %v2890, %v3309
    %v3311 = vand.u32 %v3310, 4294901760
    %3312 = vmatmul.mubr.f32.gmra.mrb[0].mxu0 %v3311
    %v3313 = vpop.f32.mrb[0].mxu0
    %v3314 = vadd.f32 %v3222, %v3313
    %v3315 = vpop.f32.mrb[0].mxu0
    %3316 = vmatprep.mubr.f32.mxu0 0.0
    %v3317 = vand.u32 %v2893, 4294901760
    %v3318 = vsub.f32 %v2893, %v3317
    %v3319 = vand.u32 %v3318, 4294901760
    %3320 = vmatmul.mubr.f32.gmra.mrb[0].mxu0 %v3319
    %v3321 = vpop.f32.mrb[0].mxu0
    %v3322 = vadd.f32 %v3229, %v3321
    %v3323 = vpop.f32.mrb[0].mxu0
    %3324 = vdwg.mxu0
    %3325 = vmatprep.subr.mxu0 0.0
    %v3326 = vand.u32 %v588, 4294901760
    %v3327 = vsub.f32 %v588, %v3326
    %v3328 = vand.u32 %v3327, 4294901760
    %3329 = vmatpush1.msra.mxu0 %v3328
    %3330 = vmatprep.subr.mxu0 0.0
    %v3331 = vand.u32 %v589, 4294901760
    %v3332 = vsub.f32 %v589, %v3331
    %v3333 = vand.u32 %v3332, 4294901760
    %3334 = vmatpush1.msra.mxu0 %v3333
    %3335 = vmatprep.subr.mxu0 0.0
    %v3336 = vand.u32 %v590, 4294901760
    %v3337 = vsub.f32 %v590, %v3336
    %v3338 = vand.u32 %v3337, 4294901760
    %3339 = vmatpush1.msra.mxu0 %v3338
    %3340 = vmatprep.subr.mxu0 0.0
    %v3341 = vand.u32 %v591, 4294901760
    %v3342 = vsub.f32 %v591, %v3341
    %v3343 = vand.u32 %v3342, 4294901760
    %3344 = vmatpush1.msra.mxu0 %v3343
    %3345 = vmatprep.subr.mxu0 0.0
    %v3346 = vand.u32 %v592, 4294901760
    %v3347 = vsub.f32 %v592, %v3346
    %v3348 = vand.u32 %v3347, 4294901760
    %3349 = vmatpush1.msra.mxu0 %v3348
    %3350 = vmatprep.subr.mxu0 0.0
    %v3351 = vand.u32 %v593, 4294901760
    %v3352 = vsub.f32 %v593, %v3351
    %v3353 = vand.u32 %v3352, 4294901760
    %3354 = vmatpush1.msra.mxu0 %v3353
    %3355 = vmatprep.subr.mxu0 0.0
    %v3356 = vand.u32 %v594, 4294901760
    %v3357 = vsub.f32 %v594, %v3356
    %v3358 = vand.u32 %v3357, 4294901760
    %3359 = vmatpush1.msra.mxu0 %v3358
    %3360 = vmatprep.subr.mxu0 0.0
    %v3361 = vand.u32 %v595, 4294901760
    %v3362 = vsub.f32 %v595, %v3361
    %v3363 = vand.u32 %v3362, 4294901760
    %3364 = vmatpush1.msra.mxu0 %v3363
    %3365 = vmatprep.subr.mxu0 0.0
    %v3366 = vand.u32 %v596, 4294901760
    %v3367 = vsub.f32 %v596, %v3366
    %v3368 = vand.u32 %v3367, 4294901760
    %3369 = vmatpush1.msra.mxu0 %v3368
    %3370 = vmatprep.subr.mxu0 0.0
    %v3371 = vand.u32 %v597, 4294901760
    %v3372 = vsub.f32 %v597, %v3371
    %v3373 = vand.u32 %v3372, 4294901760
    %3374 = vmatpush1.msra.mxu0 %v3373
    %3375 = vmatprep.subr.mxu0 0.0
    %v3376 = vand.u32 %v598, 4294901760
    %v3377 = vsub.f32 %v598, %v3376
    %v3378 = vand.u32 %v3377, 4294901760
    %3379 = vmatpush1.msra.mxu0 %v3378
    %3380 = vmatprep.subr.mxu0 0.0
    %v3381 = vand.u32 %v599, 4294901760
    %v3382 = vsub.f32 %v599, %v3381
    %v3383 = vand.u32 %v3382, 4294901760
    %3384 = vmatpush1.msra.mxu0 %v3383
    %3385 = vmatprep.subr.mxu0 0.0
    %3386 = vmatpush1.msra.mxu0 0.0
    %3387 = vmatprep.subr.mxu0 0.0
    %3388 = vmatpush1.msra.mxu0 0.0
    %3389 = vmatprep.subr.mxu0 0.0
    %3390 = vmatpush1.msra.mxu0 0.0
    %3391 = vmatprep.subr.mxu0 0.0
    %3392 = vmatpush1.msra.mxu0 0.0
    %3393 = vmatprep.subr.mxu0 0.0
    %3394 = vmatpush1.msra.mxu0 0.0
    %3395 = vmatprep.subr.mxu0 0.0
    %3396 = vmatpush1.msra.mxu0 0.0
    %3397 = vmatprep.subr.mxu0 0.0
    %3398 = vmatpush1.msra.mxu0 0.0
    %3399 = vmatprep.subr.mxu0 0.0
    %3400 = vmatpush1.msra.mxu0 0.0
    %3401 = vmatprep.subr.mxu0 0.0
    %3402 = vmatpush1.msra.mxu0 0.0
    %3403 = vmatprep.subr.mxu0 0.0
    %3404 = vmatpush1.msra.mxu0 0.0
    %3405 = vmatprep.subr.mxu0 0.0
    %3406 = vmatpush1.msra.mxu0 0.0
    %3407 = vmatprep.subr.mxu0 0.0
    %3408 = vmatpush1.msra.mxu0 0.0
    %3409 = vmatprep.subr.mxu0 0.0
    %3410 = vmatpush1.msra.mxu0 0.0
    %3411 = vmatprep.subr.mxu0 0.0
    %3412 = vmatpush1.msra.mxu0 0.0
    %3413 = vmatprep.subr.mxu0 0.0
    %3414 = vmatpush1.msra.mxu0 0.0
    %3415 = vmatprep.subr.mxu0 0.0
    %3416 = vmatpush1.msra.mxu0 0.0
    %3417 = vmatprep.subr.mxu0 0.0
    %3418 = vmatpush1.msra.mxu0 0.0
    %3419 = vmatprep.subr.mxu0 0.0
    %3420 = vmatpush1.msra.mxu0 0.0
    %3421 = vmatprep.subr.mxu0 0.0
    %3422 = vmatpush1.msra.mxu0 0.0
    %3423 = vmatprep.subr.mxu0 0.0
    %3424 = vmatpush1.msra.mxu0 0.0
    %3425 = vmatprep.mubr.f32.mxu0 0.0
    %v3426 = vand.u32 %v2890, 4294901760
    %3427 = vmatmul.mubr.f32.gmra.mrb[0].mxu0 %v3426
    %v3428 = vpop.f32.mrb[0].mxu0
    %v3429 = vadd.f32 %v3314, %v3428
    %v3430 = vpop.f32.mrb[0].mxu0
    %3431 = vmatprep.mubr.f32.mxu0 0.0
    %v3432 = vand.u32 %v2893, 4294901760
    %3433 = vmatmul.mubr.f32.gmra.mrb[0].mxu0 %v3432
    %v3434 = vpop.f32.mrb[0].mxu0
    %v3435 = vadd.f32 %v3322, %v3434
    %v3436 = vpop.f32.mrb[0].mxu0
    %3437 = vdwg.mxu0
    %3438 = vmatprep.subr.mxu0 0.0
    %v3439 = vand.u32 %v588, 4294901760
    %3440 = vmatpush1.msra.mxu0 %v3439
    %3441 = vmatprep.subr.mxu0 0.0
    %v3442 = vand.u32 %v589, 4294901760
    %3443 = vmatpush1.msra.mxu0 %v3442
    %3444 = vmatprep.subr.mxu0 0.0
    %v3445 = vand.u32 %v590, 4294901760
    %3446 = vmatpush1.msra.mxu0 %v3445
    %3447 = vmatprep.subr.mxu0 0.0
    %v3448 = vand.u32 %v591, 4294901760
    %3449 = vmatpush1.msra.mxu0 %v3448
    %3450 = vmatprep.subr.mxu0 0.0
    %v3451 = vand.u32 %v592, 4294901760
    %3452 = vmatpush1.msra.mxu0 %v3451
    %3453 = vmatprep.subr.mxu0 0.0
    %v3454 = vand.u32 %v593, 4294901760
    %3455 = vmatpush1.msra.mxu0 %v3454
    %3456 = vmatprep.subr.mxu0 0.0
    %v3457 = vand.u32 %v594, 4294901760
    %3458 = vmatpush1.msra.mxu0 %v3457
    %3459 = vmatprep.subr.mxu0 0.0
    %v3460 = vand.u32 %v595, 4294901760
    %3461 = vmatpush1.msra.mxu0 %v3460
    %3462 = vmatprep.subr.mxu0 0.0
    %v3463 = vand.u32 %v596, 4294901760
    %3464 = vmatpush1.msra.mxu0 %v3463
    %3465 = vmatprep.subr.mxu0 0.0
    %v3466 = vand.u32 %v597, 4294901760
    %3467 = vmatpush1.msra.mxu0 %v3466
    %3468 = vmatprep.subr.mxu0 0.0
    %v3469 = vand.u32 %v598, 4294901760
    %3470 = vmatpush1.msra.mxu0 %v3469
    %3471 = vmatprep.subr.mxu0 0.0
    %v3472 = vand.u32 %v599, 4294901760
    %3473 = vmatpush1.msra.mxu0 %v3472
    %3474 = vmatprep.subr.mxu0 0.0
    %3475 = vmatpush1.msra.mxu0 0.0
    %3476 = vmatprep.subr.mxu0 0.0
    %3477 = vmatpush1.msra.mxu0 0.0
    %3478 = vmatprep.subr.mxu0 0.0
    %3479 = vmatpush1.msra.mxu0 0.0
    %3480 = vmatprep.subr.mxu0 0.0
    %3481 = vmatpush1.msra.mxu0 0.0
    %3482 = vmatprep.subr.mxu0 0.0
    %3483 = vmatpush1.msra.mxu0 0.0
    %3484 = vmatprep.subr.mxu0 0.0
    %3485 = vmatpush1.msra.mxu0 0.0
    %3486 = vmatprep.subr.mxu0 0.0
    %3487 = vmatpush1.msra.mxu0 0.0
    %3488 = vmatprep.subr.mxu0 0.0
    %3489 = vmatpush1.msra.mxu0 0.0
    %3490 = vmatprep.subr.mxu0 0.0
    %3491 = vmatpush1.msra.mxu0 0.0
    %3492 = vmatprep.subr.mxu0 0.0
    %3493 = vmatpush1.msra.mxu0 0.0
    %3494 = vmatprep.subr.mxu0 0.0
    %3495 = vmatpush1.msra.mxu0 0.0
    %3496 = vmatprep.subr.mxu0 0.0
    %3497 = vmatpush1.msra.mxu0 0.0
    %3498 = vmatprep.subr.mxu0 0.0
    %3499 = vmatpush1.msra.mxu0 0.0
    %3500 = vmatprep.subr.mxu0 0.0
    %3501 = vmatpush1.msra.mxu0 0.0
    %3502 = vmatprep.subr.mxu0 0.0
    %3503 = vmatpush1.msra.mxu0 0.0
    %3504 = vmatprep.subr.mxu0 0.0
    %3505 = vmatpush1.msra.mxu0 0.0
    %3506 = vmatprep.subr.mxu0 0.0
    %3507 = vmatpush1.msra.mxu0 0.0
    %3508 = vmatprep.subr.mxu0 0.0
    %3509 = vmatpush1.msra.mxu0 0.0
    %3510 = vmatprep.subr.mxu0 0.0
    %3511 = vmatpush1.msra.mxu0 0.0
    %3512 = vmatprep.subr.mxu0 0.0
    %3513 = vmatpush1.msra.mxu0 0.0
    %3514 = vmatprep.mubr.f32.mxu0 0.0
    %v3515 = vand.u32 %v2890, 4294901760
    %3516 = vmatmul.mubr.f32.gmra.mrb[0].mxu0 %v3515
    %v3517 = vpop.f32.mrb[0].mxu0
    %v3518 = vadd.f32 %v3429, %v3517
    %v3519 = vpop.f32.mrb[0].mxu0
    %3520 = vmatprep.mubr.f32.mxu0 0.0
    %v3521 = vand.u32 %v2893, 4294901760
    %3522 = vmatmul.mubr.f32.gmra.mrb[0].mxu0 %v3521
    %v3523 = vpop.f32.mrb[0].mxu0
    %v3524 = vadd.f32 %v3435, %v3523
    %v3525 = vpop.f32.mrb[0].mxu0
    %3526 = vdwg.mxu0
    %v3527 = vsub.f32 %v3518, %v2379
    %v3528 = vsub.f32 %v3524, %v2380
    %v3529 = vmul.f32 %v75, %v75
    %v3530 = vmul.f32 %v76, %v76
    %3531 = vmatprep.subr.mxu0 0.0
    %v3532 = vand.u32 %v3529, 4294901760
    %3533 = vmatpush1.msra.mxu0 %v3532
    %3534 = vmatprep.subr.mxu0 0.0
    %v3535 = vand.u32 %v3530, 4294901760
    %3536 = vmatpush1.msra.mxu0 %v3535
    %3537 = vmatprep.subr.mxu0 0.0
    %3538 = vmatpush1.msra.mxu0 0.0
    %3539 = vmatprep.subr.mxu0 0.0
    %3540 = vmatpush1.msra.mxu0 0.0
    %3541 = vmatprep.subr.mxu0 0.0
    %3542 = vmatpush1.msra.mxu0 0.0
    %3543 = vmatprep.subr.mxu0 0.0
    %3544 = vmatpush1.msra.mxu0 0.0
    %3545 = vmatprep.subr.mxu0 0.0
    %3546 = vmatpush1.msra.mxu0 0.0
    %3547 = vmatprep.subr.mxu0 0.0
    %3548 = vmatpush1.msra.mxu0 0.0
    %3549 = vmatprep.subr.mxu0 0.0
    %3550 = vmatpush1.msra.mxu0 0.0
    %3551 = vmatprep.subr.mxu0 0.0
    %3552 = vmatpush1.msra.mxu0 0.0
    %3553 = vmatprep.subr.mxu0 0.0
    %3554 = vmatpush1.msra.mxu0 0.0
    %3555 = vmatprep.subr.mxu0 0.0
    %3556 = vmatpush1.msra.mxu0 0.0
    %3557 = vmatprep.subr.mxu0 0.0
    %3558 = vmatpush1.msra.mxu0 0.0
    %3559 = vmatprep.subr.mxu0 0.0
    %3560 = vmatpush1.msra.mxu0 0.0
    %3561 = vmatprep.subr.mxu0 0.0
    %3562 = vmatpush1.msra.mxu0 0.0
    %3563 = vmatprep.subr.mxu0 0.0
    %3564 = vmatpush1.msra.mxu0 0.0
    %3565 = vmatprep.subr.mxu0 0.0
    %3566 = vmatpush1.msra.mxu0 0.0
    %3567 = vmatprep.subr.mxu0 0.0
    %3568 = vmatpush1.msra.mxu0 0.0
    %3569 = vmatprep.subr.mxu0 0.0
    %3570 = vmatpush1.msra.mxu0 0.0
    %3571 = vmatprep.subr.mxu0 0.0
    %3572 = vmatpush1.msra.mxu0 0.0
    %3573 = vmatprep.subr.mxu0 0.0
    %3574 = vmatpush1.msra.mxu0 0.0
    %3575 = vmatprep.subr.mxu0 0.0
    %3576 = vmatpush1.msra.mxu0 0.0
    %3577 = vmatprep.subr.mxu0 0.0
    %3578 = vmatpush1.msra.mxu0 0.0
    %3579 = vmatprep.subr.mxu0 0.0
    %3580 = vmatpush1.msra.mxu0 0.0
    %3581 = vmatprep.subr.mxu0 0.0
    %3582 = vmatpush1.msra.mxu0 0.0
    %3583 = vmatprep.subr.mxu0 0.0
    %3584 = vmatpush1.msra.mxu0 0.0
    %3585 = vmatprep.subr.mxu0 0.0
    %3586 = vmatpush1.msra.mxu0 0.0
    %3587 = vmatprep.subr.mxu0 0.0
    %3588 = vmatpush1.msra.mxu0 0.0
    %3589 = vmatprep.subr.mxu0 0.0
    %3590 = vmatpush1.msra.mxu0 0.0
    %3591 = vmatprep.subr.mxu0 0.0
    %3592 = vmatpush1.msra.mxu0 0.0
    %3593 = vmatprep.subr.mxu0 0.0
    %3594 = vmatpush1.msra.mxu0 0.0
    %3595 = vmatprep.subr.mxu0 0.0
    %3596 = vmatpush1.msra.mxu0 0.0
    %3597 = vmatprep.mubr.f32.mxu0 0.0
    %v3598 = vand.u32 %v81, 4294901760
    %v3599 = vsub.f32 %v81, %v3598
    %v3600 = vand.u32 %v3599, 4294901760
    %v3601 = vsub.f32 %v3599, %v3600
    %v3602 = vand.u32 %v3601, 4294901760
    %3603 = vmatmul.mubr.f32.gmra.mrb[0].mxu0 %v3602
    %v3604 = vpop.f32.mrb[0].mxu0
    %v3605 = vadd.f32 0.0, %v3604
    %v3606 = vpop.f32.mrb[0].mxu0
    %3607 = vmatprep.mubr.f32.mxu0 0.0
    %v3608 = vand.u32 %v84, 4294901760
    %v3609 = vsub.f32 %v84, %v3608
    %v3610 = vand.u32 %v3609, 4294901760
    %v3611 = vsub.f32 %v3609, %v3610
    %v3612 = vand.u32 %v3611, 4294901760
    %3613 = vmatmul.mubr.f32.gmra.mrb[0].mxu0 %v3612
    %v3614 = vpop.f32.mrb[0].mxu0
    %v3615 = vadd.f32 0.0, %v3614
    %v3616 = vpop.f32.mrb[0].mxu0
    %3617 = vdwg.mxu0
    %3618 = vmatprep.subr.mxu0 0.0
    %v3619 = vand.u32 %v3529, 4294901760
    %v3620 = vsub.f32 %v3529, %v3619
    %v3621 = vand.u32 %v3620, 4294901760
    %v3622 = vsub.f32 %v3620, %v3621
    %v3623 = vand.u32 %v3622, 4294901760
    %3624 = vmatpush1.msra.mxu0 %v3623
    %3625 = vmatprep.subr.mxu0 0.0
    %v3626 = vand.u32 %v3530, 4294901760
    %v3627 = vsub.f32 %v3530, %v3626
    %v3628 = vand.u32 %v3627, 4294901760
    %v3629 = vsub.f32 %v3627, %v3628
    %v3630 = vand.u32 %v3629, 4294901760
    %3631 = vmatpush1.msra.mxu0 %v3630
    %3632 = vmatprep.subr.mxu0 0.0
    %3633 = vmatpush1.msra.mxu0 0.0
    %3634 = vmatprep.subr.mxu0 0.0
    %3635 = vmatpush1.msra.mxu0 0.0
    %3636 = vmatprep.subr.mxu0 0.0
    %3637 = vmatpush1.msra.mxu0 0.0
    %3638 = vmatprep.subr.mxu0 0.0
    %3639 = vmatpush1.msra.mxu0 0.0
    %3640 = vmatprep.subr.mxu0 0.0
    %3641 = vmatpush1.msra.mxu0 0.0
    %3642 = vmatprep.subr.mxu0 0.0
    %3643 = vmatpush1.msra.mxu0 0.0
    %3644 = vmatprep.subr.mxu0 0.0
    %3645 = vmatpush1.msra.mxu0 0.0
    %3646 = vmatprep.subr.mxu0 0.0
    %3647 = vmatpush1.msra.mxu0 0.0
    %3648 = vmatprep.subr.mxu0 0.0
    %3649 = vmatpush1.msra.mxu0 0.0
    %3650 = vmatprep.subr.mxu0 0.0
    %3651 = vmatpush1.msra.mxu0 0.0
    %3652 = vmatprep.subr.mxu0 0.0
    %3653 = vmatpush1.msra.mxu0 0.0
    %3654 = vmatprep.subr.mxu0 0.0
    %3655 = vmatpush1.msra.mxu0 0.0
    %3656 = vmatprep.subr.mxu0 0.0
    %3657 = vmatpush1.msra.mxu0 0.0
    %3658 = vmatprep.subr.mxu0 0.0
    %3659 = vmatpush1.msra.mxu0 0.0
    %3660 = vmatprep.subr.mxu0 0.0
    %3661 = vmatpush1.msra.mxu0 0.0
    %3662 = vmatprep.subr.mxu0 0.0
    %3663 = vmatpush1.msra.mxu0 0.0
    %3664 = vmatprep.subr.mxu0 0.0
    %3665 = vmatpush1.msra.mxu0 0.0
    %3666 = vmatprep.subr.mxu0 0.0
    %3667 = vmatpush1.msra.mxu0 0.0
    %3668 = vmatprep.subr.mxu0 0.0
    %3669 = vmatpush1.msra.mxu0 0.0
    %3670 = vmatprep.subr.mxu0 0.0
    %3671 = vmatpush1.msra.mxu0 0.0
    %3672 = vmatprep.subr.mxu0 0.0
    %3673 = vmatpush1.msra.mxu0 0.0
    %3674 = vmatprep.subr.mxu0 0.0
    %3675 = vmatpush1.msra.mxu0 0.0
    %3676 = vmatprep.subr.mxu0 0.0
    %3677 = vmatpush1.msra.mxu0 0.0
    %3678 = vmatprep.subr.mxu0 0.0
    %3679 = vmatpush1.msra.mxu0 0.0
    %3680 = vmatprep.subr.mxu0 0.0
    %3681 = vmatpush1.msra.mxu0 0.0
    %3682 = vmatprep.subr.mxu0 0.0
    %3683 = vmatpush1.msra.mxu0 0.0
    %3684 = vmatprep.subr.mxu0 0.0
    %3685 = vmatpush1.msra.mxu0 0.0
    %3686 = vmatprep.subr.mxu0 0.0
    %3687 = vmatpush1.msra.mxu0 0.0
    %3688 = vmatprep.subr.mxu0 0.0
    %3689 = vmatpush1.msra.mxu0 0.0
    %3690 = vmatprep.subr.mxu0 0.0
    %3691 = vmatpush1.msra.mxu0 0.0
    %3692 = vmatprep.mubr.f32.mxu0 0.0
    %v3693 = vand.u32 %v81, 4294901760
    %3694 = vmatmul.mubr.f32.gmra.mrb[0].mxu0 %v3693
    %v3695 = vpop.f32.mrb[0].mxu0
    %v3696 = vadd.f32 %v3605, %v3695
    %v3697 = vpop.f32.mrb[0].mxu0
    %3698 = vmatprep.mubr.f32.mxu0 0.0
    %v3699 = vand.u32 %v84, 4294901760
    %3700 = vmatmul.mubr.f32.gmra.mrb[0].mxu0 %v3699
    %v3701 = vpop.f32.mrb[0].mxu0
    %v3702 = vadd.f32 %v3615, %v3701
    %v3703 = vpop.f32.mrb[0].mxu0
    %3704 = vdwg.mxu0
    %3705 = vmatprep.subr.mxu0 0.0
    %v3706 = vand.u32 %v3529, 4294901760
    %v3707 = vsub.f32 %v3529, %v3706
    %3708 = vmatpush1.msra.mxu0 %v3707
    %3709 = vmatprep.subr.mxu0 0.0
    %v3710 = vand.u32 %v3530, 4294901760
    %v3711 = vsub.f32 %v3530, %v3710
    %3712 = vmatpush1.msra.mxu0 %v3711
    %3713 = vmatprep.subr.mxu0 0.0
    %3714 = vmatpush1.msra.mxu0 0.0
    %3715 = vmatprep.subr.mxu0 0.0
    %3716 = vmatpush1.msra.mxu0 0.0
    %3717 = vmatprep.subr.mxu0 0.0
    %3718 = vmatpush1.msra.mxu0 0.0
    %3719 = vmatprep.subr.mxu0 0.0
    %3720 = vmatpush1.msra.mxu0 0.0
    %3721 = vmatprep.subr.mxu0 0.0
    %3722 = vmatpush1.msra.mxu0 0.0
    %3723 = vmatprep.subr.mxu0 0.0
    %3724 = vmatpush1.msra.mxu0 0.0
    %3725 = vmatprep.subr.mxu0 0.0
    %3726 = vmatpush1.msra.mxu0 0.0
    %3727 = vmatprep.subr.mxu0 0.0
    %3728 = vmatpush1.msra.mxu0 0.0
    %3729 = vmatprep.subr.mxu0 0.0
    %3730 = vmatpush1.msra.mxu0 0.0
    %3731 = vmatprep.subr.mxu0 0.0
    %3732 = vmatpush1.msra.mxu0 0.0
    %3733 = vmatprep.subr.mxu0 0.0
    %3734 = vmatpush1.msra.mxu0 0.0
    %3735 = vmatprep.subr.mxu0 0.0
    %3736 = vmatpush1.msra.mxu0 0.0
    %3737 = vmatprep.subr.mxu0 0.0
    %3738 = vmatpush1.msra.mxu0 0.0
    %3739 = vmatprep.subr.mxu0 0.0
    %3740 = vmatpush1.msra.mxu0 0.0
    %3741 = vmatprep.subr.mxu0 0.0
    %3742 = vmatpush1.msra.mxu0 0.0
    %3743 = vmatprep.subr.mxu0 0.0
    %3744 = vmatpush1.msra.mxu0 0.0
    %3745 = vmatprep.subr.mxu0 0.0
    %3746 = vmatpush1.msra.mxu0 0.0
    %3747 = vmatprep.subr.mxu0 0.0
    %3748 = vmatpush1.msra.mxu0 0.0
    %3749 = vmatprep.subr.mxu0 0.0
    %3750 = vmatpush1.msra.mxu0 0.0
    %3751 = vmatprep.subr.mxu0 0.0
    %3752 = vmatpush1.msra.mxu0 0.0
    %3753 = vmatprep.subr.mxu0 0.0
    %3754 = vmatpush1.msra.mxu0 0.0
    %3755 = vmatprep.subr.mxu0 0.0
    %3756 = vmatpush1.msra.mxu0 0.0
    %3757 = vmatprep.subr.mxu0 0.0
    %3758 = vmatpush1.msra.mxu0 0.0
    %3759 = vmatprep.subr.mxu0 0.0
    %3760 = vmatpush1.msra.mxu0 0.0
    %3761 = vmatprep.subr.mxu0 0.0
    %3762 = vmatpush1.msra.mxu0 0.0
    %3763 = vmatprep.subr.mxu0 0.0
    %3764 = vmatpush1.msra.mxu0 0.0
    %3765 = vmatprep.subr.mxu0 0.0
    %3766 = vmatpush1.msra.mxu0 0.0
    %3767 = vmatprep.subr.mxu0 0.0
    %3768 = vmatpush1.msra.mxu0 0.0
    %3769 = vmatprep.subr.mxu0 0.0
    %3770 = vmatpush1.msra.mxu0 0.0
    %3771 = vmatprep.subr.mxu0 0.0
    %3772 = vmatpush1.msra.mxu0 0.0
    %3773 = vmatprep.mubr.f32.mxu0 0.0
    %v3774 = vand.u32 %v81, 4294901760
    %v3775 = vsub.f32 %v81, %v3774
    %3776 = vmatmul.mubr.f32.gmra.mrb[0].mxu0 %v3775
    %v3777 = vpop.f32.mrb[0].mxu0
    %v3778 = vadd.f32 %v3696, %v3777
    %v3779 = vpop.f32.mrb[0].mxu0
    %3780 = vmatprep.mubr.f32.mxu0 0.0
    %v3781 = vand.u32 %v84, 4294901760
    %v3782 = vsub.f32 %v84, %v3781
    %3783 = vmatmul.mubr.f32.gmra.mrb[0].mxu0 %v3782
    %v3784 = vpop.f32.mrb[0].mxu0
    %v3785 = vadd.f32 %v3702, %v3784
    %v3786 = vpop.f32.mrb[0].mxu0
    %3787 = vdwg.mxu0
    %3788 = vmatprep.subr.mxu0 0.0
    %v3789 = vand.u32 %v3529, 4294901760
    %3790 = vmatpush1.msra.mxu0 %v3789
    %3791 = vmatprep.subr.mxu0 0.0
    %v3792 = vand.u32 %v3530, 4294901760
    %3793 = vmatpush1.msra.mxu0 %v3792
    %3794 = vmatprep.subr.mxu0 0.0
    %3795 = vmatpush1.msra.mxu0 0.0
    %3796 = vmatprep.subr.mxu0 0.0
    %3797 = vmatpush1.msra.mxu0 0.0
    %3798 = vmatprep.subr.mxu0 0.0
    %3799 = vmatpush1.msra.mxu0 0.0
    %3800 = vmatprep.subr.mxu0 0.0
    %3801 = vmatpush1.msra.mxu0 0.0
    %3802 = vmatprep.subr.mxu0 0.0
    %3803 = vmatpush1.msra.mxu0 0.0
    %3804 = vmatprep.subr.mxu0 0.0
    %3805 = vmatpush1.msra.mxu0 0.0
    %3806 = vmatprep.subr.mxu0 0.0
    %3807 = vmatpush1.msra.mxu0 0.0
    %3808 = vmatprep.subr.mxu0 0.0
    %3809 = vmatpush1.msra.mxu0 0.0
    %3810 = vmatprep.subr.mxu0 0.0
    %3811 = vmatpush1.msra.mxu0 0.0
    %3812 = vmatprep.subr.mxu0 0.0
    %3813 = vmatpush1.msra.mxu0 0.0
    %3814 = vmatprep.subr.mxu0 0.0
    %3815 = vmatpush1.msra.mxu0 0.0
    %3816 = vmatprep.subr.mxu0 0.0
    %3817 = vmatpush1.msra.mxu0 0.0
    %3818 = vmatprep.subr.mxu0 0.0
    %3819 = vmatpush1.msra.mxu0 0.0
    %3820 = vmatprep.subr.mxu0 0.0
    %3821 = vmatpush1.msra.mxu0 0.0
    %3822 = vmatprep.subr.mxu0 0.0
    %3823 = vmatpush1.msra.mxu0 0.0
    %3824 = vmatprep.subr.mxu0 0.0
    %3825 = vmatpush1.msra.mxu0 0.0
    %3826 = vmatprep.subr.mxu0 0.0
    %3827 = vmatpush1.msra.mxu0 0.0
    %3828 = vmatprep.subr.mxu0 0.0
    %3829 = vmatpush1.msra.mxu0 0.0
    %3830 = vmatprep.subr.mxu0 0.0
    %3831 = vmatpush1.msra.mxu0 0.0
    %3832 = vmatprep.subr.mxu0 0.0
    %3833 = vmatpush1.msra.mxu0 0.0
    %3834 = vmatprep.subr.mxu0 0.0
    %3835 = vmatpush1.msra.mxu0 0.0
    %3836 = vmatprep.subr.mxu0 0.0
    %3837 = vmatpush1.msra.mxu0 0.0
    %3838 = vmatprep.subr.mxu0 0.0
    %3839 = vmatpush1.msra.mxu0 0.0
    %3840 = vmatprep.subr.mxu0 0.0
    %3841 = vmatpush1.msra.mxu0 0.0
    %3842 = vmatprep.subr.mxu0 0.0
    %3843 = vmatpush1.msra.mxu0 0.0
    %3844 = vmatprep.subr.mxu0 0.0
    %3845 = vmatpush1.msra.mxu0 0.0
    %3846 = vmatprep.subr.mxu0 0.0
    %3847 = vmatpush1.msra.mxu0 0.0
    %3848 = vmatprep.subr.mxu0 0.0
    %3849 = vmatpush1.msra.mxu0 0.0
    %3850 = vmatprep.subr.mxu0 0.0
    %3851 = vmatpush1.msra.mxu0 0.0
    %3852 = vmatprep.subr.mxu0 0.0
    %3853 = vmatpush1.msra.mxu0 0.0
    %3854 = vmatprep.mubr.f32.mxu0 0.0
    %v3855 = vand.u32 %v81, 4294901760
    %v3856 = vsub.f32 %v81, %v3855
    %v3857 = vand.u32 %v3856, 4294901760
    %3858 = vmatmul.mubr.f32.gmra.mrb[0].mxu0 %v3857
    %v3859 = vpop.f32.mrb[0].mxu0
    %v3860 = vadd.f32 %v3778, %v3859
    %v3861 = vpop.f32.mrb[0].mxu0
    %3862 = vmatprep.mubr.f32.mxu0 0.0
    %v3863 = vand.u32 %v84, 4294901760
    %v3864 = vsub.f32 %v84, %v3863
    %v3865 = vand.u32 %v3864, 4294901760
    %3866 = vmatmul.mubr.f32.gmra.mrb[0].mxu0 %v3865
    %v3867 = vpop.f32.mrb[0].mxu0
    %v3868 = vadd.f32 %v3785, %v3867
    %v3869 = vpop.f32.mrb[0].mxu0
    %3870 = vdwg.mxu0
    %3871 = vmatprep.subr.mxu0 0.0
    %v3872 = vand.u32 %v3529, 4294901760
    %v3873 = vsub.f32 %v3529, %v3872
    %v3874 = vand.u32 %v3873, 4294901760
    %3875 = vmatpush1.msra.mxu0 %v3874
    %3876 = vmatprep.subr.mxu0 0.0
    %v3877 = vand.u32 %v3530, 4294901760
    %v3878 = vsub.f32 %v3530, %v3877
    %v3879 = vand.u32 %v3878, 4294901760
    %3880 = vmatpush1.msra.mxu0 %v3879
    %3881 = vmatprep.subr.mxu0 0.0
    %3882 = vmatpush1.msra.mxu0 0.0
    %3883 = vmatprep.subr.mxu0 0.0
    %3884 = vmatpush1.msra.mxu0 0.0
    %3885 = vmatprep.subr.mxu0 0.0
    %3886 = vmatpush1.msra.mxu0 0.0
    %3887 = vmatprep.subr.mxu0 0.0
    %3888 = vmatpush1.msra.mxu0 0.0
    %3889 = vmatprep.subr.mxu0 0.0
    %3890 = vmatpush1.msra.mxu0 0.0
    %3891 = vmatprep.subr.mxu0 0.0
    %3892 = vmatpush1.msra.mxu0 0.0
    %3893 = vmatprep.subr.mxu0 0.0
    %3894 = vmatpush1.msra.mxu0 0.0
    %3895 = vmatprep.subr.mxu0 0.0
    %3896 = vmatpush1.msra.mxu0 0.0
    %3897 = vmatprep.subr.mxu0 0.0
    %3898 = vmatpush1.msra.mxu0 0.0
    %3899 = vmatprep.subr.mxu0 0.0
    %3900 = vmatpush1.msra.mxu0 0.0
    %3901 = vmatprep.subr.mxu0 0.0
    %3902 = vmatpush1.msra.mxu0 0.0
    %3903 = vmatprep.subr.mxu0 0.0
    %3904 = vmatpush1.msra.mxu0 0.0
    %3905 = vmatprep.subr.mxu0 0.0
    %3906 = vmatpush1.msra.mxu0 0.0
    %3907 = vmatprep.subr.mxu0 0.0
    %3908 = vmatpush1.msra.mxu0 0.0
    %3909 = vmatprep.subr.mxu0 0.0
    %3910 = vmatpush1.msra.mxu0 0.0
    %3911 = vmatprep.subr.mxu0 0.0
    %3912 = vmatpush1.msra.mxu0 0.0
    %3913 = vmatprep.subr.mxu0 0.0
    %3914 = vmatpush1.msra.mxu0 0.0
    %3915 = vmatprep.subr.mxu0 0.0
    %3916 = vmatpush1.msra.mxu0 0.0
    %3917 = vmatprep.subr.mxu0 0.0
    %3918 = vmatpush1.msra.mxu0 0.0
    %3919 = vmatprep.subr.mxu0 0.0
    %3920 = vmatpush1.msra.mxu0 0.0
    %3921 = vmatprep.subr.mxu0 0.0
    %3922 = vmatpush1.msra.mxu0 0.0
    %3923 = vmatprep.subr.mxu0 0.0
    %3924 = vmatpush1.msra.mxu0 0.0
    %3925 = vmatprep.subr.mxu0 0.0
    %3926 = vmatpush1.msra.mxu0 0.0
    %3927 = vmatprep.subr.mxu0 0.0
    %3928 = vmatpush1.msra.mxu0 0.0
    %3929 = vmatprep.subr.mxu0 0.0
    %3930 = vmatpush1.msra.mxu0 0.0
    %3931 = vmatprep.subr.mxu0 0.0
    %3932 = vmatpush1.msra.mxu0 0.0
    %3933 = vmatprep.subr.mxu0 0.0
    %3934 = vmatpush1.msra.mxu0 0.0
    %3935 = vmatprep.subr.mxu0 0.0
    %3936 = vmatpush1.msra.mxu0 0.0
    %3937 = vmatprep.subr.mxu0 0.0
    %3938 = vmatpush1.msra.mxu0 0.0
    %3939 = vmatprep.subr.mxu0 0.0
    %3940 = vmatpush1.msra.mxu0 0.0
    %3941 = vmatprep.mubr.f32.mxu0 0.0
    %v3942 = vand.u32 %v81, 4294901760
    %3943 = vmatmul.mubr.f32.gmra.mrb[0].mxu0 %v3942
    %v3944 = vpop.f32.mrb[0].mxu0
    %v3945 = vadd.f32 %v3860, %v3944
    %v3946 = vpop.f32.mrb[0].mxu0
    %3947 = vmatprep.mubr.f32.mxu0 0.0
    %v3948 = vand.u32 %v84, 4294901760
    %3949 = vmatmul.mubr.f32.gmra.mrb[0].mxu0 %v3948
    %v3950 = vpop.f32.mrb[0].mxu0
    %v3951 = vadd.f32 %v3868, %v3950
    %v3952 = vpop.f32.mrb[0].mxu0
    %3953 = vdwg.mxu0
    %3954 = vmatprep.subr.mxu0 0.0
    %v3955 = vand.u32 %v3529, 4294901760
    %3956 = vmatpush1.msra.mxu0 %v3955
    %3957 = vmatprep.subr.mxu0 0.0
    %v3958 = vand.u32 %v3530, 4294901760
    %3959 = vmatpush1.msra.mxu0 %v3958
    %3960 = vmatprep.subr.mxu0 0.0
    %3961 = vmatpush1.msra.mxu0 0.0
    %3962 = vmatprep.subr.mxu0 0.0
    %3963 = vmatpush1.msra.mxu0 0.0
    %3964 = vmatprep.subr.mxu0 0.0
    %3965 = vmatpush1.msra.mxu0 0.0
    %3966 = vmatprep.subr.mxu0 0.0
    %3967 = vmatpush1.msra.mxu0 0.0
    %3968 = vmatprep.subr.mxu0 0.0
    %3969 = vmatpush1.msra.mxu0 0.0
    %3970 = vmatprep.subr.mxu0 0.0
    %3971 = vmatpush1.msra.mxu0 0.0
    %3972 = vmatprep.subr.mxu0 0.0
    %3973 = vmatpush1.msra.mxu0 0.0
    %3974 = vmatprep.subr.mxu0 0.0
    %3975 = vmatpush1.msra.mxu0 0.0
    %3976 = vmatprep.subr.mxu0 0.0
    %3977 = vmatpush1.msra.mxu0 0.0
    %3978 = vmatprep.subr.mxu0 0.0
    %3979 = vmatpush1.msra.mxu0 0.0
    %3980 = vmatprep.subr.mxu0 0.0
    %3981 = vmatpush1.msra.mxu0 0.0
    %3982 = vmatprep.subr.mxu0 0.0
    %3983 = vmatpush1.msra.mxu0 0.0
    %3984 = vmatprep.subr.mxu0 0.0
    %3985 = vmatpush1.msra.mxu0 0.0
    %3986 = vmatprep.subr.mxu0 0.0
    %3987 = vmatpush1.msra.mxu0 0.0
    %3988 = vmatprep.subr.mxu0 0.0
    %3989 = vmatpush1.msra.mxu0 0.0
    %3990 = vmatprep.subr.mxu0 0.0
    %3991 = vmatpush1.msra.mxu0 0.0
    %3992 = vmatprep.subr.mxu0 0.0
    %3993 = vmatpush1.msra.mxu0 0.0
    %3994 = vmatprep.subr.mxu0 0.0
    %3995 = vmatpush1.msra.mxu0 0.0
    %3996 = vmatprep.subr.mxu0 0.0
    %3997 = vmatpush1.msra.mxu0 0.0
    %3998 = vmatprep.subr.mxu0 0.0
    %3999 = vmatpush1.msra.mxu0 0.0
    %4000 = vmatprep.subr.mxu0 0.0
    %4001 = vmatpush1.msra.mxu0 0.0
    %4002 = vmatprep.subr.mxu0 0.0
    %4003 = vmatpush1.msra.mxu0 0.0
    %4004 = vmatprep.subr.mxu0 0.0
    %4005 = vmatpush1.msra.mxu0 0.0
    %4006 = vmatprep.subr.mxu0 0.0
    %4007 = vmatpush1.msra.mxu0 0.0
    %4008 = vmatprep.subr.mxu0 0.0
    %4009 = vmatpush1.msra.mxu0 0.0
    %4010 = vmatprep.subr.mxu0 0.0
    %4011 = vmatpush1.msra.mxu0 0.0
    %4012 = vmatprep.subr.mxu0 0.0
    %4013 = vmatpush1.msra.mxu0 0.0
    %4014 = vmatprep.subr.mxu0 0.0
    %4015 = vmatpush1.msra.mxu0 0.0
    %4016 = vmatprep.subr.mxu0 0.0
    %4017 = vmatpush1.msra.mxu0 0.0
    %4018 = vmatprep.subr.mxu0 0.0
    %4019 = vmatpush1.msra.mxu0 0.0
    %4020 = vmatprep.mubr.f32.mxu0 0.0
    %v4021 = vand.u32 %v81, 4294901760
    %4022 = vmatmul.mubr.f32.gmra.mrb[0].mxu0 %v4021
    %v4023 = vpop.f32.mrb[0].mxu0
    %v4024 = vadd.f32 %v3945, %v4023
    %v4025 = vpop.f32.mrb[0].mxu0
    %4026 = vmatprep.mubr.f32.mxu0 0.0
    %v4027 = vand.u32 %v84, 4294901760
    %4028 = vmatmul.mubr.f32.gmra.mrb[0].mxu0 %v4027
    %v4029 = vpop.f32.mrb[0].mxu0
    %v4030 = vadd.f32 %v3951, %v4029
    %v4031 = vpop.f32.mrb[0].mxu0
    %4032 = vdwg.mxu0
    %v4034 = vsel %vm600, %v4024, 0
    %v4037 = vsel %vm600, %v4030, 0
    %4039 = vmatprep.subr.mxu0 0.0
    %v4040 = vand.u32 %v588, 4294901760
    %4041 = vmatpush1.msra.mxu0 %v4040
    %4042 = vmatprep.subr.mxu0 0.0
    %v4043 = vand.u32 %v589, 4294901760
    %4044 = vmatpush1.msra.mxu0 %v4043
    %4045 = vmatprep.subr.mxu0 0.0
    %v4046 = vand.u32 %v590, 4294901760
    %4047 = vmatpush1.msra.mxu0 %v4046
    %4048 = vmatprep.subr.mxu0 0.0
    %v4049 = vand.u32 %v591, 4294901760
    %4050 = vmatpush1.msra.mxu0 %v4049
    %4051 = vmatprep.subr.mxu0 0.0
    %v4052 = vand.u32 %v592, 4294901760
    %4053 = vmatpush1.msra.mxu0 %v4052
    %4054 = vmatprep.subr.mxu0 0.0
    %v4055 = vand.u32 %v593, 4294901760
    %4056 = vmatpush1.msra.mxu0 %v4055
    %4057 = vmatprep.subr.mxu0 0.0
    %v4058 = vand.u32 %v594, 4294901760
    %4059 = vmatpush1.msra.mxu0 %v4058
    %4060 = vmatprep.subr.mxu0 0.0
    %v4061 = vand.u32 %v595, 4294901760
    %4062 = vmatpush1.msra.mxu0 %v4061
    %4063 = vmatprep.subr.mxu0 0.0
    %v4064 = vand.u32 %v596, 4294901760
    %4065 = vmatpush1.msra.mxu0 %v4064
    %4066 = vmatprep.subr.mxu0 0.0
    %v4067 = vand.u32 %v597, 4294901760
    %4068 = vmatpush1.msra.mxu0 %v4067
    %4069 = vmatprep.subr.mxu0 0.0
    %v4070 = vand.u32 %v598, 4294901760
    %4071 = vmatpush1.msra.mxu0 %v4070
    %4072 = vmatprep.subr.mxu0 0.0
    %v4073 = vand.u32 %v599, 4294901760
    %4074 = vmatpush1.msra.mxu0 %v4073
    %4075 = vmatprep.subr.mxu0 0.0
    %4076 = vmatpush1.msra.mxu0 0.0
    %4077 = vmatprep.subr.mxu0 0.0
    %4078 = vmatpush1.msra.mxu0 0.0
    %4079 = vmatprep.subr.mxu0 0.0
    %4080 = vmatpush1.msra.mxu0 0.0
    %4081 = vmatprep.subr.mxu0 0.0
    %4082 = vmatpush1.msra.mxu0 0.0
    %4083 = vmatprep.subr.mxu0 0.0
    %4084 = vmatpush1.msra.mxu0 0.0
    %4085 = vmatprep.subr.mxu0 0.0
    %4086 = vmatpush1.msra.mxu0 0.0
    %4087 = vmatprep.subr.mxu0 0.0
    %4088 = vmatpush1.msra.mxu0 0.0
    %4089 = vmatprep.subr.mxu0 0.0
    %4090 = vmatpush1.msra.mxu0 0.0
    %4091 = vmatprep.subr.mxu0 0.0
    %4092 = vmatpush1.msra.mxu0 0.0
    %4093 = vmatprep.subr.mxu0 0.0
    %4094 = vmatpush1.msra.mxu0 0.0
    %4095 = vmatprep.subr.mxu0 0.0
    %4096 = vmatpush1.msra.mxu0 0.0
    %4097 = vmatprep.subr.mxu0 0.0
    %4098 = vmatpush1.msra.mxu0 0.0
    %4099 = vmatprep.subr.mxu0 0.0
    %4100 = vmatpush1.msra.mxu0 0.0
    %4101 = vmatprep.subr.mxu0 0.0
    %4102 = vmatpush1.msra.mxu0 0.0
    %4103 = vmatprep.subr.mxu0 0.0
    %4104 = vmatpush1.msra.mxu0 0.0
    %4105 = vmatprep.subr.mxu0 0.0
    %4106 = vmatpush1.msra.mxu0 0.0
    %4107 = vmatprep.subr.mxu0 0.0
    %4108 = vmatpush1.msra.mxu0 0.0
    %4109 = vmatprep.subr.mxu0 0.0
    %4110 = vmatpush1.msra.mxu0 0.0
    %4111 = vmatprep.subr.mxu0 0.0
    %4112 = vmatpush1.msra.mxu0 0.0
    %4113 = vmatprep.subr.mxu0 0.0
    %4114 = vmatpush1.msra.mxu0 0.0
    %4115 = vmatprep.mubr.f32.mxu0 0.0
    %v4116 = vand.u32 %v4034, 4294901760
    %v4117 = vsub.f32 %v4034, %v4116
    %v4118 = vand.u32 %v4117, 4294901760
    %v4119 = vsub.f32 %v4117, %v4118
    %v4120 = vand.u32 %v4119, 4294901760
    %4121 = vmatmul.mubr.f32.gmra.mrb[0].mxu0 %v4120
    %v4122 = vpop.f32.mrb[0].mxu0
    %v4123 = vadd.f32 0.0, %v4122
    %v4124 = vpop.f32.mrb[0].mxu0
    %4125 = vmatprep.mubr.f32.mxu0 0.0
    %v4126 = vand.u32 %v4037, 4294901760
    %v4127 = vsub.f32 %v4037, %v4126
    %v4128 = vand.u32 %v4127, 4294901760
    %v4129 = vsub.f32 %v4127, %v4128
    %v4130 = vand.u32 %v4129, 4294901760
    %4131 = vmatmul.mubr.f32.gmra.mrb[0].mxu0 %v4130
    %v4132 = vpop.f32.mrb[0].mxu0
    %v4133 = vadd.f32 0.0, %v4132
    %v4134 = vpop.f32.mrb[0].mxu0
    %4135 = vdwg.mxu0
    %4136 = vmatprep.subr.mxu0 0.0
    %v4137 = vand.u32 %v588, 4294901760
    %v4138 = vsub.f32 %v588, %v4137
    %v4139 = vand.u32 %v4138, 4294901760
    %v4140 = vsub.f32 %v4138, %v4139
    %v4141 = vand.u32 %v4140, 4294901760
    %4142 = vmatpush1.msra.mxu0 %v4141
    %4143 = vmatprep.subr.mxu0 0.0
    %v4144 = vand.u32 %v589, 4294901760
    %v4145 = vsub.f32 %v589, %v4144
    %v4146 = vand.u32 %v4145, 4294901760
    %v4147 = vsub.f32 %v4145, %v4146
    %v4148 = vand.u32 %v4147, 4294901760
    %4149 = vmatpush1.msra.mxu0 %v4148
    %4150 = vmatprep.subr.mxu0 0.0
    %v4151 = vand.u32 %v590, 4294901760
    %v4152 = vsub.f32 %v590, %v4151
    %v4153 = vand.u32 %v4152, 4294901760
    %v4154 = vsub.f32 %v4152, %v4153
    %v4155 = vand.u32 %v4154, 4294901760
    %4156 = vmatpush1.msra.mxu0 %v4155
    %4157 = vmatprep.subr.mxu0 0.0
    %v4158 = vand.u32 %v591, 4294901760
    %v4159 = vsub.f32 %v591, %v4158
    %v4160 = vand.u32 %v4159, 4294901760
    %v4161 = vsub.f32 %v4159, %v4160
    %v4162 = vand.u32 %v4161, 4294901760
    %4163 = vmatpush1.msra.mxu0 %v4162
    %4164 = vmatprep.subr.mxu0 0.0
    %v4165 = vand.u32 %v592, 4294901760
    %v4166 = vsub.f32 %v592, %v4165
    %v4167 = vand.u32 %v4166, 4294901760
    %v4168 = vsub.f32 %v4166, %v4167
    %v4169 = vand.u32 %v4168, 4294901760
    %4170 = vmatpush1.msra.mxu0 %v4169
    %4171 = vmatprep.subr.mxu0 0.0
    %v4172 = vand.u32 %v593, 4294901760
    %v4173 = vsub.f32 %v593, %v4172
    %v4174 = vand.u32 %v4173, 4294901760
    %v4175 = vsub.f32 %v4173, %v4174
    %v4176 = vand.u32 %v4175, 4294901760
    %4177 = vmatpush1.msra.mxu0 %v4176
    %4178 = vmatprep.subr.mxu0 0.0
    %v4179 = vand.u32 %v594, 4294901760
    %v4180 = vsub.f32 %v594, %v4179
    %v4181 = vand.u32 %v4180, 4294901760
    %v4182 = vsub.f32 %v4180, %v4181
    %v4183 = vand.u32 %v4182, 4294901760
    %4184 = vmatpush1.msra.mxu0 %v4183
    %4185 = vmatprep.subr.mxu0 0.0
    %v4186 = vand.u32 %v595, 4294901760
    %v4187 = vsub.f32 %v595, %v4186
    %v4188 = vand.u32 %v4187, 4294901760
    %v4189 = vsub.f32 %v4187, %v4188
    %v4190 = vand.u32 %v4189, 4294901760
    %4191 = vmatpush1.msra.mxu0 %v4190
    %4192 = vmatprep.subr.mxu0 0.0
    %v4193 = vand.u32 %v596, 4294901760
    %v4194 = vsub.f32 %v596, %v4193
    %v4195 = vand.u32 %v4194, 4294901760
    %v4196 = vsub.f32 %v4194, %v4195
    %v4197 = vand.u32 %v4196, 4294901760
    %4198 = vmatpush1.msra.mxu0 %v4197
    %4199 = vmatprep.subr.mxu0 0.0
    %v4200 = vand.u32 %v597, 4294901760
    %v4201 = vsub.f32 %v597, %v4200
    %v4202 = vand.u32 %v4201, 4294901760
    %v4203 = vsub.f32 %v4201, %v4202
    %v4204 = vand.u32 %v4203, 4294901760
    %4205 = vmatpush1.msra.mxu0 %v4204
    %4206 = vmatprep.subr.mxu0 0.0
    %v4207 = vand.u32 %v598, 4294901760
    %v4208 = vsub.f32 %v598, %v4207
    %v4209 = vand.u32 %v4208, 4294901760
    %v4210 = vsub.f32 %v4208, %v4209
    %v4211 = vand.u32 %v4210, 4294901760
    %4212 = vmatpush1.msra.mxu0 %v4211
    %4213 = vmatprep.subr.mxu0 0.0
    %v4214 = vand.u32 %v599, 4294901760
    %v4215 = vsub.f32 %v599, %v4214
    %v4216 = vand.u32 %v4215, 4294901760
    %v4217 = vsub.f32 %v4215, %v4216
    %v4218 = vand.u32 %v4217, 4294901760
    %4219 = vmatpush1.msra.mxu0 %v4218
    %4220 = vmatprep.subr.mxu0 0.0
    %4221 = vmatpush1.msra.mxu0 0.0
    %4222 = vmatprep.subr.mxu0 0.0
    %4223 = vmatpush1.msra.mxu0 0.0
    %4224 = vmatprep.subr.mxu0 0.0
    %4225 = vmatpush1.msra.mxu0 0.0
    %4226 = vmatprep.subr.mxu0 0.0
    %4227 = vmatpush1.msra.mxu0 0.0
    %4228 = vmatprep.subr.mxu0 0.0
    %4229 = vmatpush1.msra.mxu0 0.0
    %4230 = vmatprep.subr.mxu0 0.0
    %4231 = vmatpush1.msra.mxu0 0.0
    %4232 = vmatprep.subr.mxu0 0.0
    %4233 = vmatpush1.msra.mxu0 0.0
    %4234 = vmatprep.subr.mxu0 0.0
    %4235 = vmatpush1.msra.mxu0 0.0
    %4236 = vmatprep.subr.mxu0 0.0
    %4237 = vmatpush1.msra.mxu0 0.0
    %4238 = vmatprep.subr.mxu0 0.0
    %4239 = vmatpush1.msra.mxu0 0.0
    %4240 = vmatprep.subr.mxu0 0.0
    %4241 = vmatpush1.msra.mxu0 0.0
    %4242 = vmatprep.subr.mxu0 0.0
    %4243 = vmatpush1.msra.mxu0 0.0
    %4244 = vmatprep.subr.mxu0 0.0
    %4245 = vmatpush1.msra.mxu0 0.0
    %4246 = vmatprep.subr.mxu0 0.0
    %4247 = vmatpush1.msra.mxu0 0.0
    %4248 = vmatprep.subr.mxu0 0.0
    %4249 = vmatpush1.msra.mxu0 0.0
    %4250 = vmatprep.subr.mxu0 0.0
    %4251 = vmatpush1.msra.mxu0 0.0
    %4252 = vmatprep.subr.mxu0 0.0
    %4253 = vmatpush1.msra.mxu0 0.0
    %4254 = vmatprep.subr.mxu0 0.0
    %4255 = vmatpush1.msra.mxu0 0.0
    %4256 = vmatprep.subr.mxu0 0.0
    %4257 = vmatpush1.msra.mxu0 0.0
    %4258 = vmatprep.subr.mxu0 0.0
    %4259 = vmatpush1.msra.mxu0 0.0
    %4260 = vmatprep.mubr.f32.mxu0 0.0
    %v4261 = vand.u32 %v4034, 4294901760
    %4262 = vmatmul.mubr.f32.gmra.mrb[0].mxu0 %v4261
    %v4263 = vpop.f32.mrb[0].mxu0
    %v4264 = vadd.f32 %v4123, %v4263
    %v4265 = vpop.f32.mrb[0].mxu0
    %4266 = vmatprep.mubr.f32.mxu0 0.0
    %v4267 = vand.u32 %v4037, 4294901760
    %4268 = vmatmul.mubr.f32.gmra.mrb[0].mxu0 %v4267
    %v4269 = vpop.f32.mrb[0].mxu0
    %v4270 = vadd.f32 %v4133, %v4269
    %v4271 = vpop.f32.mrb[0].mxu0
    %4272 = vdwg.mxu0
    %4273 = vmatprep.subr.mxu0 0.0
    %v4274 = vand.u32 %v588, 4294901760
    %v4275 = vsub.f32 %v588, %v4274
    %4276 = vmatpush1.msra.mxu0 %v4275
    %4277 = vmatprep.subr.mxu0 0.0
    %v4278 = vand.u32 %v589, 4294901760
    %v4279 = vsub.f32 %v589, %v4278
    %4280 = vmatpush1.msra.mxu0 %v4279
    %4281 = vmatprep.subr.mxu0 0.0
    %v4282 = vand.u32 %v590, 4294901760
    %v4283 = vsub.f32 %v590, %v4282
    %4284 = vmatpush1.msra.mxu0 %v4283
    %4285 = vmatprep.subr.mxu0 0.0
    %v4286 = vand.u32 %v591, 4294901760
    %v4287 = vsub.f32 %v591, %v4286
    %4288 = vmatpush1.msra.mxu0 %v4287
    %4289 = vmatprep.subr.mxu0 0.0
    %v4290 = vand.u32 %v592, 4294901760
    %v4291 = vsub.f32 %v592, %v4290
    %4292 = vmatpush1.msra.mxu0 %v4291
    %4293 = vmatprep.subr.mxu0 0.0
    %v4294 = vand.u32 %v593, 4294901760
    %v4295 = vsub.f32 %v593, %v4294
    %4296 = vmatpush1.msra.mxu0 %v4295
    %4297 = vmatprep.subr.mxu0 0.0
    %v4298 = vand.u32 %v594, 4294901760
    %v4299 = vsub.f32 %v594, %v4298
    %4300 = vmatpush1.msra.mxu0 %v4299
    %4301 = vmatprep.subr.mxu0 0.0
    %v4302 = vand.u32 %v595, 4294901760
    %v4303 = vsub.f32 %v595, %v4302
    %4304 = vmatpush1.msra.mxu0 %v4303
    %4305 = vmatprep.subr.mxu0 0.0
    %v4306 = vand.u32 %v596, 4294901760
    %v4307 = vsub.f32 %v596, %v4306
    %4308 = vmatpush1.msra.mxu0 %v4307
    %4309 = vmatprep.subr.mxu0 0.0
    %v4310 = vand.u32 %v597, 4294901760
    %v4311 = vsub.f32 %v597, %v4310
    %4312 = vmatpush1.msra.mxu0 %v4311
    %4313 = vmatprep.subr.mxu0 0.0
    %v4314 = vand.u32 %v598, 4294901760
    %v4315 = vsub.f32 %v598, %v4314
    %4316 = vmatpush1.msra.mxu0 %v4315
    %4317 = vmatprep.subr.mxu0 0.0
    %v4318 = vand.u32 %v599, 4294901760
    %v4319 = vsub.f32 %v599, %v4318
    %4320 = vmatpush1.msra.mxu0 %v4319
    %4321 = vmatprep.subr.mxu0 0.0
    %4322 = vmatpush1.msra.mxu0 0.0
    %4323 = vmatprep.subr.mxu0 0.0
    %4324 = vmatpush1.msra.mxu0 0.0
    %4325 = vmatprep.subr.mxu0 0.0
    %4326 = vmatpush1.msra.mxu0 0.0
    %4327 = vmatprep.subr.mxu0 0.0
    %4328 = vmatpush1.msra.mxu0 0.0
    %4329 = vmatprep.subr.mxu0 0.0
    %4330 = vmatpush1.msra.mxu0 0.0
    %4331 = vmatprep.subr.mxu0 0.0
    %4332 = vmatpush1.msra.mxu0 0.0
    %4333 = vmatprep.subr.mxu0 0.0
    %4334 = vmatpush1.msra.mxu0 0.0
    %4335 = vmatprep.subr.mxu0 0.0
    %4336 = vmatpush1.msra.mxu0 0.0
    %4337 = vmatprep.subr.mxu0 0.0
    %4338 = vmatpush1.msra.mxu0 0.0
    %4339 = vmatprep.subr.mxu0 0.0
    %4340 = vmatpush1.msra.mxu0 0.0
    %4341 = vmatprep.subr.mxu0 0.0
    %4342 = vmatpush1.msra.mxu0 0.0
    %4343 = vmatprep.subr.mxu0 0.0
    %4344 = vmatpush1.msra.mxu0 0.0
    %4345 = vmatprep.subr.mxu0 0.0
    %4346 = vmatpush1.msra.mxu0 0.0
    %4347 = vmatprep.subr.mxu0 0.0
    %4348 = vmatpush1.msra.mxu0 0.0
    %4349 = vmatprep.subr.mxu0 0.0
    %4350 = vmatpush1.msra.mxu0 0.0
    %4351 = vmatprep.subr.mxu0 0.0
    %4352 = vmatpush1.msra.mxu0 0.0
    %4353 = vmatprep.subr.mxu0 0.0
    %4354 = vmatpush1.msra.mxu0 0.0
    %4355 = vmatprep.subr.mxu0 0.0
    %4356 = vmatpush1.msra.mxu0 0.0
    %4357 = vmatprep.subr.mxu0 0.0
    %4358 = vmatpush1.msra.mxu0 0.0
    %4359 = vmatprep.subr.mxu0 0.0
    %4360 = vmatpush1.msra.mxu0 0.0
    %4361 = vmatprep.mubr.f32.mxu0 0.0
    %v4362 = vand.u32 %v4034, 4294901760
    %v4363 = vsub.f32 %v4034, %v4362
    %4364 = vmatmul.mubr.f32.gmra.mrb[0].mxu0 %v4363
    %v4365 = vpop.f32.mrb[0].mxu0
    %v4366 = vadd.f32 %v4264, %v4365
    %v4367 = vpop.f32.mrb[0].mxu0
    %4368 = vmatprep.mubr.f32.mxu0 0.0
    %v4369 = vand.u32 %v4037, 4294901760
    %v4370 = vsub.f32 %v4037, %v4369
    %4371 = vmatmul.mubr.f32.gmra.mrb[0].mxu0 %v4370
    %v4372 = vpop.f32.mrb[0].mxu0
    %v4373 = vadd.f32 %v4270, %v4372
    %v4374 = vpop.f32.mrb[0].mxu0
    %4375 = vdwg.mxu0
    %4376 = vmatprep.subr.mxu0 0.0
    %v4377 = vand.u32 %v588, 4294901760
    %4378 = vmatpush1.msra.mxu0 %v4377
    %4379 = vmatprep.subr.mxu0 0.0
    %v4380 = vand.u32 %v589, 4294901760
    %4381 = vmatpush1.msra.mxu0 %v4380
    %4382 = vmatprep.subr.mxu0 0.0
    %v4383 = vand.u32 %v590, 4294901760
    %4384 = vmatpush1.msra.mxu0 %v4383
    %4385 = vmatprep.subr.mxu0 0.0
    %v4386 = vand.u32 %v591, 4294901760
    %4387 = vmatpush1.msra.mxu0 %v4386
    %4388 = vmatprep.subr.mxu0 0.0
    %v4389 = vand.u32 %v592, 4294901760
    %4390 = vmatpush1.msra.mxu0 %v4389
    %4391 = vmatprep.subr.mxu0 0.0
    %v4392 = vand.u32 %v593, 4294901760
    %4393 = vmatpush1.msra.mxu0 %v4392
    %4394 = vmatprep.subr.mxu0 0.0
    %v4395 = vand.u32 %v594, 4294901760
    %4396 = vmatpush1.msra.mxu0 %v4395
    %4397 = vmatprep.subr.mxu0 0.0
    %v4398 = vand.u32 %v595, 4294901760
    %4399 = vmatpush1.msra.mxu0 %v4398
    %4400 = vmatprep.subr.mxu0 0.0
    %v4401 = vand.u32 %v596, 4294901760
    %4402 = vmatpush1.msra.mxu0 %v4401
    %4403 = vmatprep.subr.mxu0 0.0
    %v4404 = vand.u32 %v597, 4294901760
    %4405 = vmatpush1.msra.mxu0 %v4404
    %4406 = vmatprep.subr.mxu0 0.0
    %v4407 = vand.u32 %v598, 4294901760
    %4408 = vmatpush1.msra.mxu0 %v4407
    %4409 = vmatprep.subr.mxu0 0.0
    %v4410 = vand.u32 %v599, 4294901760
    %4411 = vmatpush1.msra.mxu0 %v4410
    %4412 = vmatprep.subr.mxu0 0.0
    %4413 = vmatpush1.msra.mxu0 0.0
    %4414 = vmatprep.subr.mxu0 0.0
    %4415 = vmatpush1.msra.mxu0 0.0
    %4416 = vmatprep.subr.mxu0 0.0
    %4417 = vmatpush1.msra.mxu0 0.0
    %4418 = vmatprep.subr.mxu0 0.0
    %4419 = vmatpush1.msra.mxu0 0.0
    %4420 = vmatprep.subr.mxu0 0.0
    %4421 = vmatpush1.msra.mxu0 0.0
    %4422 = vmatprep.subr.mxu0 0.0
    %4423 = vmatpush1.msra.mxu0 0.0
    %4424 = vmatprep.subr.mxu0 0.0
    %4425 = vmatpush1.msra.mxu0 0.0
    %4426 = vmatprep.subr.mxu0 0.0
    %4427 = vmatpush1.msra.mxu0 0.0
    %4428 = vmatprep.subr.mxu0 0.0
    %4429 = vmatpush1.msra.mxu0 0.0
    %4430 = vmatprep.subr.mxu0 0.0
    %4431 = vmatpush1.msra.mxu0 0.0
    %4432 = vmatprep.subr.mxu0 0.0
    %4433 = vmatpush1.msra.mxu0 0.0
    %4434 = vmatprep.subr.mxu0 0.0
    %4435 = vmatpush1.msra.mxu0 0.0
    %4436 = vmatprep.subr.mxu0 0.0
    %4437 = vmatpush1.msra.mxu0 0.0
    %4438 = vmatprep.subr.mxu0 0.0
    %4439 = vmatpush1.msra.mxu0 0.0
    %4440 = vmatprep.subr.mxu0 0.0
    %4441 = vmatpush1.msra.mxu0 0.0
    %4442 = vmatprep.subr.mxu0 0.0
    %4443 = vmatpush1.msra.mxu0 0.0
    %4444 = vmatprep.subr.mxu0 0.0
    %4445 = vmatpush1.msra.mxu0 0.0
    %4446 = vmatprep.subr.mxu0 0.0
    %4447 = vmatpush1.msra.mxu0 0.0
    %4448 = vmatprep.subr.mxu0 0.0
    %4449 = vmatpush1.msra.mxu0 0.0
    %4450 = vmatprep.subr.mxu0 0.0
    %4451 = vmatpush1.msra.mxu0 0.0
    %4452 = vmatprep.mubr.f32.mxu0 0.0
    %v4453 = vand.u32 %v4034, 4294901760
    %v4454 = vsub.f32 %v4034, %v4453
    %v4455 = vand.u32 %v4454, 4294901760
    %4456 = vmatmul.mubr.f32.gmra.mrb[0].mxu0 %v4455
    %v4457 = vpop.f32.mrb[0].mxu0
    %v4458 = vadd.f32 %v4366, %v4457
    %v4459 = vpop.f32.mrb[0].mxu0
    %4460 = vmatprep.mubr.f32.mxu0 0.0
    %v4461 = vand.u32 %v4037, 4294901760
    %v4462 = vsub.f32 %v4037, %v4461
    %v4463 = vand.u32 %v4462, 4294901760
    %4464 = vmatmul.mubr.f32.gmra.mrb[0].mxu0 %v4463
    %v4465 = vpop.f32.mrb[0].mxu0
    %v4466 = vadd.f32 %v4373, %v4465
    %v4467 = vpop.f32.mrb[0].mxu0
    %4468 = vdwg.mxu0
    %4469 = vmatprep.subr.mxu0 0.0
    %v4470 = vand.u32 %v588, 4294901760
    %v4471 = vsub.f32 %v588, %v4470
    %v4472 = vand.u32 %v4471, 4294901760
    %4473 = vmatpush1.msra.mxu0 %v4472
    %4474 = vmatprep.subr.mxu0 0.0
    %v4475 = vand.u32 %v589, 4294901760
    %v4476 = vsub.f32 %v589, %v4475
    %v4477 = vand.u32 %v4476, 4294901760
    %4478 = vmatpush1.msra.mxu0 %v4477
    %4479 = vmatprep.subr.mxu0 0.0
    %v4480 = vand.u32 %v590, 4294901760
    %v4481 = vsub.f32 %v590, %v4480
    %v4482 = vand.u32 %v4481, 4294901760
    %4483 = vmatpush1.msra.mxu0 %v4482
    %4484 = vmatprep.subr.mxu0 0.0
    %v4485 = vand.u32 %v591, 4294901760
    %v4486 = vsub.f32 %v591, %v4485
    %v4487 = vand.u32 %v4486, 4294901760
    %4488 = vmatpush1.msra.mxu0 %v4487
    %4489 = vmatprep.subr.mxu0 0.0
    %v4490 = vand.u32 %v592, 4294901760
    %v4491 = vsub.f32 %v592, %v4490
    %v4492 = vand.u32 %v4491, 4294901760
    %4493 = vmatpush1.msra.mxu0 %v4492
    %4494 = vmatprep.subr.mxu0 0.0
    %v4495 = vand.u32 %v593, 4294901760
    %v4496 = vsub.f32 %v593, %v4495
    %v4497 = vand.u32 %v4496, 4294901760
    %4498 = vmatpush1.msra.mxu0 %v4497
    %4499 = vmatprep.subr.mxu0 0.0
    %v4500 = vand.u32 %v594, 4294901760
    %v4501 = vsub.f32 %v594, %v4500
    %v4502 = vand.u32 %v4501, 4294901760
    %4503 = vmatpush1.msra.mxu0 %v4502
    %4504 = vmatprep.subr.mxu0 0.0
    %v4505 = vand.u32 %v595, 4294901760
    %v4506 = vsub.f32 %v595, %v4505
    %v4507 = vand.u32 %v4506, 4294901760
    %4508 = vmatpush1.msra.mxu0 %v4507
    %4509 = vmatprep.subr.mxu0 0.0
    %v4510 = vand.u32 %v596, 4294901760
    %v4511 = vsub.f32 %v596, %v4510
    %v4512 = vand.u32 %v4511, 4294901760
    %4513 = vmatpush1.msra.mxu0 %v4512
    %4514 = vmatprep.subr.mxu0 0.0
    %v4515 = vand.u32 %v597, 4294901760
    %v4516 = vsub.f32 %v597, %v4515
    %v4517 = vand.u32 %v4516, 4294901760
    %4518 = vmatpush1.msra.mxu0 %v4517
    %4519 = vmatprep.subr.mxu0 0.0
    %v4520 = vand.u32 %v598, 4294901760
    %v4521 = vsub.f32 %v598, %v4520
    %v4522 = vand.u32 %v4521, 4294901760
    %4523 = vmatpush1.msra.mxu0 %v4522
    %4524 = vmatprep.subr.mxu0 0.0
    %v4525 = vand.u32 %v599, 4294901760
    %v4526 = vsub.f32 %v599, %v4525
    %v4527 = vand.u32 %v4526, 4294901760
    %4528 = vmatpush1.msra.mxu0 %v4527
    %4529 = vmatprep.subr.mxu0 0.0
    %4530 = vmatpush1.msra.mxu0 0.0
    %4531 = vmatprep.subr.mxu0 0.0
    %4532 = vmatpush1.msra.mxu0 0.0
    %4533 = vmatprep.subr.mxu0 0.0
    %4534 = vmatpush1.msra.mxu0 0.0
    %4535 = vmatprep.subr.mxu0 0.0
    %4536 = vmatpush1.msra.mxu0 0.0
    %4537 = vmatprep.subr.mxu0 0.0
    %4538 = vmatpush1.msra.mxu0 0.0
    %4539 = vmatprep.subr.mxu0 0.0
    %4540 = vmatpush1.msra.mxu0 0.0
    %4541 = vmatprep.subr.mxu0 0.0
    %4542 = vmatpush1.msra.mxu0 0.0
    %4543 = vmatprep.subr.mxu0 0.0
    %4544 = vmatpush1.msra.mxu0 0.0
    %4545 = vmatprep.subr.mxu0 0.0
    %4546 = vmatpush1.msra.mxu0 0.0
    %4547 = vmatprep.subr.mxu0 0.0
    %4548 = vmatpush1.msra.mxu0 0.0
    %4549 = vmatprep.subr.mxu0 0.0
    %4550 = vmatpush1.msra.mxu0 0.0
    %4551 = vmatprep.subr.mxu0 0.0
    %4552 = vmatpush1.msra.mxu0 0.0
    %4553 = vmatprep.subr.mxu0 0.0
    %4554 = vmatpush1.msra.mxu0 0.0
    %4555 = vmatprep.subr.mxu0 0.0
    %4556 = vmatpush1.msra.mxu0 0.0
    %4557 = vmatprep.subr.mxu0 0.0
    %4558 = vmatpush1.msra.mxu0 0.0
    %4559 = vmatprep.subr.mxu0 0.0
    %4560 = vmatpush1.msra.mxu0 0.0
    %4561 = vmatprep.subr.mxu0 0.0
    %4562 = vmatpush1.msra.mxu0 0.0
    %4563 = vmatprep.subr.mxu0 0.0
    %4564 = vmatpush1.msra.mxu0 0.0
    %4565 = vmatprep.subr.mxu0 0.0
    %4566 = vmatpush1.msra.mxu0 0.0
    %4567 = vmatprep.subr.mxu0 0.0
    %4568 = vmatpush1.msra.mxu0 0.0
    %4569 = vmatprep.mubr.f32.mxu0 0.0
    %v4570 = vand.u32 %v4034, 4294901760
    %4571 = vmatmul.mubr.f32.gmra.mrb[0].mxu0 %v4570
    %v4572 = vpop.f32.mrb[0].mxu0
    %v4573 = vadd.f32 %v4458, %v4572
    %v4574 = vpop.f32.mrb[0].mxu0
    %4575 = vmatprep.mubr.f32.mxu0 0.0
    %v4576 = vand.u32 %v4037, 4294901760
    %4577 = vmatmul.mubr.f32.gmra.mrb[0].mxu0 %v4576
    %v4578 = vpop.f32.mrb[0].mxu0
    %v4579 = vadd.f32 %v4466, %v4578
    %v4580 = vpop.f32.mrb[0].mxu0
    %4581 = vdwg.mxu0
    %4582 = vmatprep.subr.mxu0 0.0
    %v4583 = vand.u32 %v588, 4294901760
    %4584 = vmatpush1.msra.mxu0 %v4583
    %4585 = vmatprep.subr.mxu0 0.0
    %v4586 = vand.u32 %v589, 4294901760
    %4587 = vmatpush1.msra.mxu0 %v4586
    %4588 = vmatprep.subr.mxu0 0.0
    %v4589 = vand.u32 %v590, 4294901760
    %4590 = vmatpush1.msra.mxu0 %v4589
    %4591 = vmatprep.subr.mxu0 0.0
    %v4592 = vand.u32 %v591, 4294901760
    %4593 = vmatpush1.msra.mxu0 %v4592
    %4594 = vmatprep.subr.mxu0 0.0
    %v4595 = vand.u32 %v592, 4294901760
    %4596 = vmatpush1.msra.mxu0 %v4595
    %4597 = vmatprep.subr.mxu0 0.0
    %v4598 = vand.u32 %v593, 4294901760
    %4599 = vmatpush1.msra.mxu0 %v4598
    %4600 = vmatprep.subr.mxu0 0.0
    %v4601 = vand.u32 %v594, 4294901760
    %4602 = vmatpush1.msra.mxu0 %v4601
    %4603 = vmatprep.subr.mxu0 0.0
    %v4604 = vand.u32 %v595, 4294901760
    %4605 = vmatpush1.msra.mxu0 %v4604
    %4606 = vmatprep.subr.mxu0 0.0
    %v4607 = vand.u32 %v596, 4294901760
    %4608 = vmatpush1.msra.mxu0 %v4607
    %4609 = vmatprep.subr.mxu0 0.0
    %v4610 = vand.u32 %v597, 4294901760
    %4611 = vmatpush1.msra.mxu0 %v4610
    %4612 = vmatprep.subr.mxu0 0.0
    %v4613 = vand.u32 %v598, 4294901760
    %4614 = vmatpush1.msra.mxu0 %v4613
    %4615 = vmatprep.subr.mxu0 0.0
    %v4616 = vand.u32 %v599, 4294901760
    %4617 = vmatpush1.msra.mxu0 %v4616
    %4618 = vmatprep.subr.mxu0 0.0
    %4619 = vmatpush1.msra.mxu0 0.0
    %4620 = vmatprep.subr.mxu0 0.0
    %4621 = vmatpush1.msra.mxu0 0.0
    %4622 = vmatprep.subr.mxu0 0.0
    %4623 = vmatpush1.msra.mxu0 0.0
    %4624 = vmatprep.subr.mxu0 0.0
    %4625 = vmatpush1.msra.mxu0 0.0
    %4626 = vmatprep.subr.mxu0 0.0
    %4627 = vmatpush1.msra.mxu0 0.0
    %4628 = vmatprep.subr.mxu0 0.0
    %4629 = vmatpush1.msra.mxu0 0.0
    %4630 = vmatprep.subr.mxu0 0.0
    %4631 = vmatpush1.msra.mxu0 0.0
    %4632 = vmatprep.subr.mxu0 0.0
    %4633 = vmatpush1.msra.mxu0 0.0
    %4634 = vmatprep.subr.mxu0 0.0
    %4635 = vmatpush1.msra.mxu0 0.0
    %4636 = vmatprep.subr.mxu0 0.0
    %4637 = vmatpush1.msra.mxu0 0.0
    %4638 = vmatprep.subr.mxu0 0.0
    %4639 = vmatpush1.msra.mxu0 0.0
    %4640 = vmatprep.subr.mxu0 0.0
    %4641 = vmatpush1.msra.mxu0 0.0
    %4642 = vmatprep.subr.mxu0 0.0
    %4643 = vmatpush1.msra.mxu0 0.0
    %4644 = vmatprep.subr.mxu0 0.0
    %4645 = vmatpush1.msra.mxu0 0.0
    %4646 = vmatprep.subr.mxu0 0.0
    %4647 = vmatpush1.msra.mxu0 0.0
    %4648 = vmatprep.subr.mxu0 0.0
    %4649 = vmatpush1.msra.mxu0 0.0
    %4650 = vmatprep.subr.mxu0 0.0
    %4651 = vmatpush1.msra.mxu0 0.0
    %4652 = vmatprep.subr.mxu0 0.0
    %4653 = vmatpush1.msra.mxu0 0.0
    %4654 = vmatprep.subr.mxu0 0.0
    %4655 = vmatpush1.msra.mxu0 0.0
    %4656 = vmatprep.subr.mxu0 0.0
    %4657 = vmatpush1.msra.mxu0 0.0
    %4658 = vmatprep.mubr.f32.mxu0 0.0
    %v4659 = vand.u32 %v4034, 4294901760
    %4660 = vmatmul.mubr.f32.gmra.mrb[0].mxu0 %v4659
    %v4661 = vpop.f32.mrb[0].mxu0
    %v4662 = vadd.f32 %v4573, %v4661
    %v4663 = vpop.f32.mrb[0].mxu0
    %4664 = vmatprep.mubr.f32.mxu0 0.0
    %v4665 = vand.u32 %v4037, 4294901760
    %4666 = vmatmul.mubr.f32.gmra.mrb[0].mxu0 %v4665
    %v4667 = vpop.f32.mrb[0].mxu0
    %v4668 = vadd.f32 %v4579, %v4667
    %v4669 = vpop.f32.mrb[0].mxu0
    %4670 = vdwg.mxu0
    %v4671 = vsub.f32 %v4662, %v2381
    %v4672 = vsub.f32 %v4668, %v2382
    %v4673 = vmul.f32 %v73, %v75
    %v4674 = vmul.f32 %v74, %v76
    %4675 = vmatprep.subr.mxu0 0.0
    %v4676 = vand.u32 %v4673, 4294901760
    %4677 = vmatpush1.msra.mxu0 %v4676
    %4678 = vmatprep.subr.mxu0 0.0
    %v4679 = vand.u32 %v4674, 4294901760
    %4680 = vmatpush1.msra.mxu0 %v4679
    %4681 = vmatprep.subr.mxu0 0.0
    %4682 = vmatpush1.msra.mxu0 0.0
    %4683 = vmatprep.subr.mxu0 0.0
    %4684 = vmatpush1.msra.mxu0 0.0
    %4685 = vmatprep.subr.mxu0 0.0
    %4686 = vmatpush1.msra.mxu0 0.0
    %4687 = vmatprep.subr.mxu0 0.0
    %4688 = vmatpush1.msra.mxu0 0.0
    %4689 = vmatprep.subr.mxu0 0.0
    %4690 = vmatpush1.msra.mxu0 0.0
    %4691 = vmatprep.subr.mxu0 0.0
    %4692 = vmatpush1.msra.mxu0 0.0
    %4693 = vmatprep.subr.mxu0 0.0
    %4694 = vmatpush1.msra.mxu0 0.0
    %4695 = vmatprep.subr.mxu0 0.0
    %4696 = vmatpush1.msra.mxu0 0.0
    %4697 = vmatprep.subr.mxu0 0.0
    %4698 = vmatpush1.msra.mxu0 0.0
    %4699 = vmatprep.subr.mxu0 0.0
    %4700 = vmatpush1.msra.mxu0 0.0
    %4701 = vmatprep.subr.mxu0 0.0
    %4702 = vmatpush1.msra.mxu0 0.0
    %4703 = vmatprep.subr.mxu0 0.0
    %4704 = vmatpush1.msra.mxu0 0.0
    %4705 = vmatprep.subr.mxu0 0.0
    %4706 = vmatpush1.msra.mxu0 0.0
    %4707 = vmatprep.subr.mxu0 0.0
    %4708 = vmatpush1.msra.mxu0 0.0
    %4709 = vmatprep.subr.mxu0 0.0
    %4710 = vmatpush1.msra.mxu0 0.0
    %4711 = vmatprep.subr.mxu0 0.0
    %4712 = vmatpush1.msra.mxu0 0.0
    %4713 = vmatprep.subr.mxu0 0.0
    %4714 = vmatpush1.msra.mxu0 0.0
    %4715 = vmatprep.subr.mxu0 0.0
    %4716 = vmatpush1.msra.mxu0 0.0
    %4717 = vmatprep.subr.mxu0 0.0
    %4718 = vmatpush1.msra.mxu0 0.0
    %4719 = vmatprep.subr.mxu0 0.0
    %4720 = vmatpush1.msra.mxu0 0.0
    %4721 = vmatprep.subr.mxu0 0.0
    %4722 = vmatpush1.msra.mxu0 0.0
    %4723 = vmatprep.subr.mxu0 0.0
    %4724 = vmatpush1.msra.mxu0 0.0
    %4725 = vmatprep.subr.mxu0 0.0
    %4726 = vmatpush1.msra.mxu0 0.0
    %4727 = vmatprep.subr.mxu0 0.0
    %4728 = vmatpush1.msra.mxu0 0.0
    %4729 = vmatprep.subr.mxu0 0.0
    %4730 = vmatpush1.msra.mxu0 0.0
    %4731 = vmatprep.subr.mxu0 0.0
    %4732 = vmatpush1.msra.mxu0 0.0
    %4733 = vmatprep.subr.mxu0 0.0
    %4734 = vmatpush1.msra.mxu0 0.0
    %4735 = vmatprep.subr.mxu0 0.0
    %4736 = vmatpush1.msra.mxu0 0.0
    %4737 = vmatprep.subr.mxu0 0.0
    %4738 = vmatpush1.msra.mxu0 0.0
    %4739 = vmatprep.subr.mxu0 0.0
    %4740 = vmatpush1.msra.mxu0 0.0
    %4741 = vmatprep.mubr.f32.mxu0 0.0
    %v4742 = vand.u32 %v81, 4294901760
    %v4743 = vsub.f32 %v81, %v4742
    %v4744 = vand.u32 %v4743, 4294901760
    %v4745 = vsub.f32 %v4743, %v4744
    %v4746 = vand.u32 %v4745, 4294901760
    %4747 = vmatmul.mubr.f32.gmra.mrb[0].mxu0 %v4746
    %v4748 = vpop.f32.mrb[0].mxu0
    %v4749 = vadd.f32 0.0, %v4748
    %v4750 = vpop.f32.mrb[0].mxu0
    %4751 = vmatprep.mubr.f32.mxu0 0.0
    %v4752 = vand.u32 %v84, 4294901760
    %v4753 = vsub.f32 %v84, %v4752
    %v4754 = vand.u32 %v4753, 4294901760
    %v4755 = vsub.f32 %v4753, %v4754
    %v4756 = vand.u32 %v4755, 4294901760
    %4757 = vmatmul.mubr.f32.gmra.mrb[0].mxu0 %v4756
    %v4758 = vpop.f32.mrb[0].mxu0
    %v4759 = vadd.f32 0.0, %v4758
    %v4760 = vpop.f32.mrb[0].mxu0
    %4761 = vdwg.mxu0
    %4762 = vmatprep.subr.mxu0 0.0
    %v4763 = vand.u32 %v4673, 4294901760
    %v4764 = vsub.f32 %v4673, %v4763
    %v4765 = vand.u32 %v4764, 4294901760
    %v4766 = vsub.f32 %v4764, %v4765
    %v4767 = vand.u32 %v4766, 4294901760
    %4768 = vmatpush1.msra.mxu0 %v4767
    %4769 = vmatprep.subr.mxu0 0.0
    %v4770 = vand.u32 %v4674, 4294901760
    %v4771 = vsub.f32 %v4674, %v4770
    %v4772 = vand.u32 %v4771, 4294901760
    %v4773 = vsub.f32 %v4771, %v4772
    %v4774 = vand.u32 %v4773, 4294901760
    %4775 = vmatpush1.msra.mxu0 %v4774
    %4776 = vmatprep.subr.mxu0 0.0
    %4777 = vmatpush1.msra.mxu0 0.0
    %4778 = vmatprep.subr.mxu0 0.0
    %4779 = vmatpush1.msra.mxu0 0.0
    %4780 = vmatprep.subr.mxu0 0.0
    %4781 = vmatpush1.msra.mxu0 0.0
    %4782 = vmatprep.subr.mxu0 0.0
    %4783 = vmatpush1.msra.mxu0 0.0
    %4784 = vmatprep.subr.mxu0 0.0
    %4785 = vmatpush1.msra.mxu0 0.0
    %4786 = vmatprep.subr.mxu0 0.0
    %4787 = vmatpush1.msra.mxu0 0.0
    %4788 = vmatprep.subr.mxu0 0.0
    %4789 = vmatpush1.msra.mxu0 0.0
    %4790 = vmatprep.subr.mxu0 0.0
    %4791 = vmatpush1.msra.mxu0 0.0
    %4792 = vmatprep.subr.mxu0 0.0
    %4793 = vmatpush1.msra.mxu0 0.0
    %4794 = vmatprep.subr.mxu0 0.0
    %4795 = vmatpush1.msra.mxu0 0.0
    %4796 = vmatprep.subr.mxu0 0.0
    %4797 = vmatpush1.msra.mxu0 0.0
    %4798 = vmatprep.subr.mxu0 0.0
    %4799 = vmatpush1.msra.mxu0 0.0
    %4800 = vmatprep.subr.mxu0 0.0
    %4801 = vmatpush1.msra.mxu0 0.0
    %4802 = vmatprep.subr.mxu0 0.0
    %4803 = vmatpush1.msra.mxu0 0.0
    %4804 = vmatprep.subr.mxu0 0.0
    %4805 = vmatpush1.msra.mxu0 0.0
    %4806 = vmatprep.subr.mxu0 0.0
    %4807 = vmatpush1.msra.mxu0 0.0
    %4808 = vmatprep.subr.mxu0 0.0
    %4809 = vmatpush1.msra.mxu0 0.0
    %4810 = vmatprep.subr.mxu0 0.0
    %4811 = vmatpush1.msra.mxu0 0.0
    %4812 = vmatprep.subr.mxu0 0.0
    %4813 = vmatpush1.msra.mxu0 0.0
    %4814 = vmatprep.subr.mxu0 0.0
    %4815 = vmatpush1.msra.mxu0 0.0
    %4816 = vmatprep.subr.mxu0 0.0
    %4817 = vmatpush1.msra.mxu0 0.0
    %4818 = vmatprep.subr.mxu0 0.0
    %4819 = vmatpush1.msra.mxu0 0.0
    %4820 = vmatprep.subr.mxu0 0.0
    %4821 = vmatpush1.msra.mxu0 0.0
    %4822 = vmatprep.subr.mxu0 0.0
    %4823 = vmatpush1.msra.mxu0 0.0
    %4824 = vmatprep.subr.mxu0 0.0
    %4825 = vmatpush1.msra.mxu0 0.0
    %4826 = vmatprep.subr.mxu0 0.0
    %4827 = vmatpush1.msra.mxu0 0.0
    %4828 = vmatprep.subr.mxu0 0.0
    %4829 = vmatpush1.msra.mxu0 0.0
    %4830 = vmatprep.subr.mxu0 0.0
    %4831 = vmatpush1.msra.mxu0 0.0
    %4832 = vmatprep.subr.mxu0 0.0
    %4833 = vmatpush1.msra.mxu0 0.0
    %4834 = vmatprep.subr.mxu0 0.0
    %4835 = vmatpush1.msra.mxu0 0.0
    %4836 = vmatprep.mubr.f32.mxu0 0.0
    %v4837 = vand.u32 %v81, 4294901760
    %4838 = vmatmul.mubr.f32.gmra.mrb[0].mxu0 %v4837
    %v4839 = vpop.f32.mrb[0].mxu0
    %v4840 = vadd.f32 %v4749, %v4839
    %v4841 = vpop.f32.mrb[0].mxu0
    %4842 = vmatprep.mubr.f32.mxu0 0.0
    %v4843 = vand.u32 %v84, 4294901760
    %4844 = vmatmul.mubr.f32.gmra.mrb[0].mxu0 %v4843
    %v4845 = vpop.f32.mrb[0].mxu0
    %v4846 = vadd.f32 %v4759, %v4845
    %v4847 = vpop.f32.mrb[0].mxu0
    %4848 = vdwg.mxu0
    %4849 = vmatprep.subr.mxu0 0.0
    %v4850 = vand.u32 %v4673, 4294901760
    %v4851 = vsub.f32 %v4673, %v4850
    %4852 = vmatpush1.msra.mxu0 %v4851
    %4853 = vmatprep.subr.mxu0 0.0
    %v4854 = vand.u32 %v4674, 4294901760
    %v4855 = vsub.f32 %v4674, %v4854
    %4856 = vmatpush1.msra.mxu0 %v4855
    %4857 = vmatprep.subr.mxu0 0.0
    %4858 = vmatpush1.msra.mxu0 0.0
    %4859 = vmatprep.subr.mxu0 0.0
    %4860 = vmatpush1.msra.mxu0 0.0
    %4861 = vmatprep.subr.mxu0 0.0
    %4862 = vmatpush1.msra.mxu0 0.0
    %4863 = vmatprep.subr.mxu0 0.0
    %4864 = vmatpush1.msra.mxu0 0.0
    %4865 = vmatprep.subr.mxu0 0.0
    %4866 = vmatpush1.msra.mxu0 0.0
    %4867 = vmatprep.subr.mxu0 0.0
    %4868 = vmatpush1.msra.mxu0 0.0
    %4869 = vmatprep.subr.mxu0 0.0
    %4870 = vmatpush1.msra.mxu0 0.0
    %4871 = vmatprep.subr.mxu0 0.0
    %4872 = vmatpush1.msra.mxu0 0.0
    %4873 = vmatprep.subr.mxu0 0.0
    %4874 = vmatpush1.msra.mxu0 0.0
    %4875 = vmatprep.subr.mxu0 0.0
    %4876 = vmatpush1.msra.mxu0 0.0
    %4877 = vmatprep.subr.mxu0 0.0
    %4878 = vmatpush1.msra.mxu0 0.0
    %4879 = vmatprep.subr.mxu0 0.0
    %4880 = vmatpush1.msra.mxu0 0.0
    %4881 = vmatprep.subr.mxu0 0.0
    %4882 = vmatpush1.msra.mxu0 0.0
    %4883 = vmatprep.subr.mxu0 0.0
    %4884 = vmatpush1.msra.mxu0 0.0
    %4885 = vmatprep.subr.mxu0 0.0
    %4886 = vmatpush1.msra.mxu0 0.0
    %4887 = vmatprep.subr.mxu0 0.0
    %4888 = vmatpush1.msra.mxu0 0.0
    %4889 = vmatprep.subr.mxu0 0.0
    %4890 = vmatpush1.msra.mxu0 0.0
    %4891 = vmatprep.subr.mxu0 0.0
    %4892 = vmatpush1.msra.mxu0 0.0
    %4893 = vmatprep.subr.mxu0 0.0
    %4894 = vmatpush1.msra.mxu0 0.0
    %4895 = vmatprep.subr.mxu0 0.0
    %4896 = vmatpush1.msra.mxu0 0.0
    %4897 = vmatprep.subr.mxu0 0.0
    %4898 = vmatpush1.msra.mxu0 0.0
    %4899 = vmatprep.subr.mxu0 0.0
    %4900 = vmatpush1.msra.mxu0 0.0
    %4901 = vmatprep.subr.mxu0 0.0
    %4902 = vmatpush1.msra.mxu0 0.0
    %4903 = vmatprep.subr.mxu0 0.0
    %4904 = vmatpush1.msra.mxu0 0.0
    %4905 = vmatprep.subr.mxu0 0.0
    %4906 = vmatpush1.msra.mxu0 0.0
    %4907 = vmatprep.subr.mxu0 0.0
    %4908 = vmatpush1.msra.mxu0 0.0
    %4909 = vmatprep.subr.mxu0 0.0
    %4910 = vmatpush1.msra.mxu0 0.0
    %4911 = vmatprep.subr.mxu0 0.0
    %4912 = vmatpush1.msra.mxu0 0.0
    %4913 = vmatprep.subr.mxu0 0.0
    %4914 = vmatpush1.msra.mxu0 0.0
    %4915 = vmatprep.subr.mxu0 0.0
    %4916 = vmatpush1.msra.mxu0 0.0
    %4917 = vmatprep.mubr.f32.mxu0 0.0
    %v4918 = vand.u32 %v81, 4294901760
    %v4919 = vsub.f32 %v81, %v4918
    %4920 = vmatmul.mubr.f32.gmra.mrb[0].mxu0 %v4919
    %v4921 = vpop.f32.mrb[0].mxu0
    %v4922 = vadd.f32 %v4840, %v4921
    %v4923 = vpop.f32.mrb[0].mxu0
    %4924 = vmatprep.mubr.f32.mxu0 0.0
    %v4925 = vand.u32 %v84, 4294901760
    %v4926 = vsub.f32 %v84, %v4925
    %4927 = vmatmul.mubr.f32.gmra.mrb[0].mxu0 %v4926
    %v4928 = vpop.f32.mrb[0].mxu0
    %v4929 = vadd.f32 %v4846, %v4928
    %v4930 = vpop.f32.mrb[0].mxu0
    %4931 = vdwg.mxu0
    %4932 = vmatprep.subr.mxu0 0.0
    %v4933 = vand.u32 %v4673, 4294901760
    %4934 = vmatpush1.msra.mxu0 %v4933
    %4935 = vmatprep.subr.mxu0 0.0
    %v4936 = vand.u32 %v4674, 4294901760
    %4937 = vmatpush1.msra.mxu0 %v4936
    %4938 = vmatprep.subr.mxu0 0.0
    %4939 = vmatpush1.msra.mxu0 0.0
    %4940 = vmatprep.subr.mxu0 0.0
    %4941 = vmatpush1.msra.mxu0 0.0
    %4942 = vmatprep.subr.mxu0 0.0
    %4943 = vmatpush1.msra.mxu0 0.0
    %4944 = vmatprep.subr.mxu0 0.0
    %4945 = vmatpush1.msra.mxu0 0.0
    %4946 = vmatprep.subr.mxu0 0.0
    %4947 = vmatpush1.msra.mxu0 0.0
    %4948 = vmatprep.subr.mxu0 0.0
    %4949 = vmatpush1.msra.mxu0 0.0
    %4950 = vmatprep.subr.mxu0 0.0
    %4951 = vmatpush1.msra.mxu0 0.0
    %4952 = vmatprep.subr.mxu0 0.0
    %4953 = vmatpush1.msra.mxu0 0.0
    %4954 = vmatprep.subr.mxu0 0.0
    %4955 = vmatpush1.msra.mxu0 0.0
    %4956 = vmatprep.subr.mxu0 0.0
    %4957 = vmatpush1.msra.mxu0 0.0
    %4958 = vmatprep.subr.mxu0 0.0
    %4959 = vmatpush1.msra.mxu0 0.0
    %4960 = vmatprep.subr.mxu0 0.0
    %4961 = vmatpush1.msra.mxu0 0.0
    %4962 = vmatprep.subr.mxu0 0.0
    %4963 = vmatpush1.msra.mxu0 0.0
    %4964 = vmatprep.subr.mxu0 0.0
    %4965 = vmatpush1.msra.mxu0 0.0
    %4966 = vmatprep.subr.mxu0 0.0
    %4967 = vmatpush1.msra.mxu0 0.0
    %4968 = vmatprep.subr.mxu0 0.0
    %4969 = vmatpush1.msra.mxu0 0.0
    %4970 = vmatprep.subr.mxu0 0.0
    %4971 = vmatpush1.msra.mxu0 0.0
    %4972 = vmatprep.subr.mxu0 0.0
    %4973 = vmatpush1.msra.mxu0 0.0
    %4974 = vmatprep.subr.mxu0 0.0
    %4975 = vmatpush1.msra.mxu0 0.0
    %4976 = vmatprep.subr.mxu0 0.0
    %4977 = vmatpush1.msra.mxu0 0.0
    %4978 = vmatprep.subr.mxu0 0.0
    %4979 = vmatpush1.msra.mxu0 0.0
    %4980 = vmatprep.subr.mxu0 0.0
    %4981 = vmatpush1.msra.mxu0 0.0
    %4982 = vmatprep.subr.mxu0 0.0
    %4983 = vmatpush1.msra.mxu0 0.0
    %4984 = vmatprep.subr.mxu0 0.0
    %4985 = vmatpush1.msra.mxu0 0.0
    %4986 = vmatprep.subr.mxu0 0.0
    %4987 = vmatpush1.msra.mxu0 0.0
    %4988 = vmatprep.subr.mxu0 0.0
    %4989 = vmatpush1.msra.mxu0 0.0
    %4990 = vmatprep.subr.mxu0 0.0
    %4991 = vmatpush1.msra.mxu0 0.0
    %4992 = vmatprep.subr.mxu0 0.0
    %4993 = vmatpush1.msra.mxu0 0.0
    %4994 = vmatprep.subr.mxu0 0.0
    %4995 = vmatpush1.msra.mxu0 0.0
    %4996 = vmatprep.subr.mxu0 0.0
    %4997 = vmatpush1.msra.mxu0 0.0
    %4998 = vmatprep.mubr.f32.mxu0 0.0
    %v4999 = vand.u32 %v81, 4294901760
    %v5000 = vsub.f32 %v81, %v4999
    %v5001 = vand.u32 %v5000, 4294901760
    %5002 = vmatmul.mubr.f32.gmra.mrb[0].mxu0 %v5001
    %v5003 = vpop.f32.mrb[0].mxu0
    %v5004 = vadd.f32 %v4922, %v5003
    %v5005 = vpop.f32.mrb[0].mxu0
    %5006 = vmatprep.mubr.f32.mxu0 0.0
    %v5007 = vand.u32 %v84, 4294901760
    %v5008 = vsub.f32 %v84, %v5007
    %v5009 = vand.u32 %v5008, 4294901760
    %5010 = vmatmul.mubr.f32.gmra.mrb[0].mxu0 %v5009
    %v5011 = vpop.f32.mrb[0].mxu0
    %v5012 = vadd.f32 %v4929, %v5011
    %v5013 = vpop.f32.mrb[0].mxu0
    %5014 = vdwg.mxu0
    %5015 = vmatprep.subr.mxu0 0.0
    %v5016 = vand.u32 %v4673, 4294901760
    %v5017 = vsub.f32 %v4673, %v5016
    %v5018 = vand.u32 %v5017, 4294901760
    %5019 = vmatpush1.msra.mxu0 %v5018
    %5020 = vmatprep.subr.mxu0 0.0
    %v5021 = vand.u32 %v4674, 4294901760
    %v5022 = vsub.f32 %v4674, %v5021
    %v5023 = vand.u32 %v5022, 4294901760
    %5024 = vmatpush1.msra.mxu0 %v5023
    %5025 = vmatprep.subr.mxu0 0.0
    %5026 = vmatpush1.msra.mxu0 0.0
    %5027 = vmatprep.subr.mxu0 0.0
    %5028 = vmatpush1.msra.mxu0 0.0
    %5029 = vmatprep.subr.mxu0 0.0
    %5030 = vmatpush1.msra.mxu0 0.0
    %5031 = vmatprep.subr.mxu0 0.0
    %5032 = vmatpush1.msra.mxu0 0.0
    %5033 = vmatprep.subr.mxu0 0.0
    %5034 = vmatpush1.msra.mxu0 0.0
    %5035 = vmatprep.subr.mxu0 0.0
    %5036 = vmatpush1.msra.mxu0 0.0
    %5037 = vmatprep.subr.mxu0 0.0
    %5038 = vmatpush1.msra.mxu0 0.0
    %5039 = vmatprep.subr.mxu0 0.0
    %5040 = vmatpush1.msra.mxu0 0.0
    %5041 = vmatprep.subr.mxu0 0.0
    %5042 = vmatpush1.msra.mxu0 0.0
    %5043 = vmatprep.subr.mxu0 0.0
    %5044 = vmatpush1.msra.mxu0 0.0
    %5045 = vmatprep.subr.mxu0 0.0
    %5046 = vmatpush1.msra.mxu0 0.0
    %5047 = vmatprep.subr.mxu0 0.0
    %5048 = vmatpush1.msra.mxu0 0.0
    %5049 = vmatprep.subr.mxu0 0.0
    %5050 = vmatpush1.msra.mxu0 0.0
    %5051 = vmatprep.subr.mxu0 0.0
    %5052 = vmatpush1.msra.mxu0 0.0
    %5053 = vmatprep.subr.mxu0 0.0
    %5054 = vmatpush1.msra.mxu0 0.0
    %5055 = vmatprep.subr.mxu0 0.0
    %5056 = vmatpush1.msra.mxu0 0.0
    %5057 = vmatprep.subr.mxu0 0.0
    %5058 = vmatpush1.msra.mxu0 0.0
    %5059 = vmatprep.subr.mxu0 0.0
    %5060 = vmatpush1.msra.mxu0 0.0
    %5061 = vmatprep.subr.mxu0 0.0
    %5062 = vmatpush1.msra.mxu0 0.0
    %5063 = vmatprep.subr.mxu0 0.0
    %5064 = vmatpush1.msra.mxu0 0.0
    %5065 = vmatprep.subr.mxu0 0.0
    %5066 = vmatpush1.msra.mxu0 0.0
    %5067 = vmatprep.subr.mxu0 0.0
    %5068 = vmatpush1.msra.mxu0 0.0
    %5069 = vmatprep.subr.mxu0 0.0
    %5070 = vmatpush1.msra.mxu0 0.0
    %5071 = vmatprep.subr.mxu0 0.0
    %5072 = vmatpush1.msra.mxu0 0.0
    %5073 = vmatprep.subr.mxu0 0.0
    %5074 = vmatpush1.msra.mxu0 0.0
    %5075 = vmatprep.subr.mxu0 0.0
    %5076 = vmatpush1.msra.mxu0 0.0
    %5077 = vmatprep.subr.mxu0 0.0
    %5078 = vmatpush1.msra.mxu0 0.0
    %5079 = vmatprep.subr.mxu0 0.0
    %5080 = vmatpush1.msra.mxu0 0.0
    %5081 = vmatprep.subr.mxu0 0.0
    %5082 = vmatpush1.msra.mxu0 0.0
    %5083 = vmatprep.subr.mxu0 0.0
    %5084 = vmatpush1.msra.mxu0 0.0
    %5085 = vmatprep.mubr.f32.mxu0 0.0
    %v5086 = vand.u32 %v81, 4294901760
    %5087 = vmatmul.mubr.f32.gmra.mrb[0].mxu0 %v5086
    %v5088 = vpop.f32.mrb[0].mxu0
    %v5089 = vadd.f32 %v5004, %v5088
    %v5090 = vpop.f32.mrb[0].mxu0
    %5091 = vmatprep.mubr.f32.mxu0 0.0
    %v5092 = vand.u32 %v84, 4294901760
    %5093 = vmatmul.mubr.f32.gmra.mrb[0].mxu0 %v5092
    %v5094 = vpop.f32.mrb[0].mxu0
    %v5095 = vadd.f32 %v5012, %v5094
    %v5096 = vpop.f32.mrb[0].mxu0
    %5097 = vdwg.mxu0
    %5098 = vmatprep.subr.mxu0 0.0
    %v5099 = vand.u32 %v4673, 4294901760
    %5100 = vmatpush1.msra.mxu0 %v5099
    %5101 = vmatprep.subr.mxu0 0.0
    %v5102 = vand.u32 %v4674, 4294901760
    %5103 = vmatpush1.msra.mxu0 %v5102
    %5104 = vmatprep.subr.mxu0 0.0
    %5105 = vmatpush1.msra.mxu0 0.0
    %5106 = vmatprep.subr.mxu0 0.0
    %5107 = vmatpush1.msra.mxu0 0.0
    %5108 = vmatprep.subr.mxu0 0.0
    %5109 = vmatpush1.msra.mxu0 0.0
    %5110 = vmatprep.subr.mxu0 0.0
    %5111 = vmatpush1.msra.mxu0 0.0
    %5112 = vmatprep.subr.mxu0 0.0
    %5113 = vmatpush1.msra.mxu0 0.0
    %5114 = vmatprep.subr.mxu0 0.0
    %5115 = vmatpush1.msra.mxu0 0.0
    %5116 = vmatprep.subr.mxu0 0.0
    %5117 = vmatpush1.msra.mxu0 0.0
    %5118 = vmatprep.subr.mxu0 0.0
    %5119 = vmatpush1.msra.mxu0 0.0
    %5120 = vmatprep.subr.mxu0 0.0
    %5121 = vmatpush1.msra.mxu0 0.0
    %5122 = vmatprep.subr.mxu0 0.0
    %5123 = vmatpush1.msra.mxu0 0.0
    %5124 = vmatprep.subr.mxu0 0.0
    %5125 = vmatpush1.msra.mxu0 0.0
    %5126 = vmatprep.subr.mxu0 0.0
    %5127 = vmatpush1.msra.mxu0 0.0
    %5128 = vmatprep.subr.mxu0 0.0
    %5129 = vmatpush1.msra.mxu0 0.0
    %5130 = vmatprep.subr.mxu0 0.0
    %5131 = vmatpush1.msra.mxu0 0.0
    %5132 = vmatprep.subr.mxu0 0.0
    %5133 = vmatpush1.msra.mxu0 0.0
    %5134 = vmatprep.subr.mxu0 0.0
    %5135 = vmatpush1.msra.mxu0 0.0
    %5136 = vmatprep.subr.mxu0 0.0
    %5137 = vmatpush1.msra.mxu0 0.0
    %5138 = vmatprep.subr.mxu0 0.0
    %5139 = vmatpush1.msra.mxu0 0.0
    %5140 = vmatprep.subr.mxu0 0.0
    %5141 = vmatpush1.msra.mxu0 0.0
    %5142 = vmatprep.subr.mxu0 0.0
    %5143 = vmatpush1.msra.mxu0 0.0
    %5144 = vmatprep.subr.mxu0 0.0
    %5145 = vmatpush1.msra.mxu0 0.0
    %5146 = vmatprep.subr.mxu0 0.0
    %5147 = vmatpush1.msra.mxu0 0.0
    %5148 = vmatprep.subr.mxu0 0.0
    %5149 = vmatpush1.msra.mxu0 0.0
    %5150 = vmatprep.subr.mxu0 0.0
    %5151 = vmatpush1.msra.mxu0 0.0
    %5152 = vmatprep.subr.mxu0 0.0
    %5153 = vmatpush1.msra.mxu0 0.0
    %5154 = vmatprep.subr.mxu0 0.0
    %5155 = vmatpush1.msra.mxu0 0.0
    %5156 = vmatprep.subr.mxu0 0.0
    %5157 = vmatpush1.msra.mxu0 0.0
    %5158 = vmatprep.subr.mxu0 0.0
    %5159 = vmatpush1.msra.mxu0 0.0
    %5160 = vmatprep.subr.mxu0 0.0
    %5161 = vmatpush1.msra.mxu0 0.0
    %5162 = vmatprep.subr.mxu0 0.0
    %5163 = vmatpush1.msra.mxu0 0.0
    %5164 = vmatprep.mubr.f32.mxu0 0.0
    %v5165 = vand.u32 %v81, 4294901760
    %5166 = vmatmul.mubr.f32.gmra.mrb[0].mxu0 %v5165
    %v5167 = vpop.f32.mrb[0].mxu0
    %v5168 = vadd.f32 %v5089, %v5167
    %v5169 = vpop.f32.mrb[0].mxu0
    %5170 = vmatprep.mubr.f32.mxu0 0.0
    %v5171 = vand.u32 %v84, 4294901760
    %5172 = vmatmul.mubr.f32.gmra.mrb[0].mxu0 %v5171
    %v5173 = vpop.f32.mrb[0].mxu0
    %v5174 = vadd.f32 %v5095, %v5173
    %v5175 = vpop.f32.mrb[0].mxu0
    %5176 = vdwg.mxu0
    %v5178 = vsel %vm600, %v5168, 0
    %v5181 = vsel %vm600, %v5174, 0
    %5183 = vmatprep.subr.mxu0 0.0
    %v5184 = vand.u32 %v588, 4294901760
    %5185 = vmatpush1.msra.mxu0 %v5184
    %5186 = vmatprep.subr.mxu0 0.0
    %v5187 = vand.u32 %v589, 4294901760
    %5188 = vmatpush1.msra.mxu0 %v5187
    %5189 = vmatprep.subr.mxu0 0.0
    %v5190 = vand.u32 %v590, 4294901760
    %5191 = vmatpush1.msra.mxu0 %v5190
    %5192 = vmatprep.subr.mxu0 0.0
    %v5193 = vand.u32 %v591, 4294901760
    %5194 = vmatpush1.msra.mxu0 %v5193
    %5195 = vmatprep.subr.mxu0 0.0
    %v5196 = vand.u32 %v592, 4294901760
    %5197 = vmatpush1.msra.mxu0 %v5196
    %5198 = vmatprep.subr.mxu0 0.0
    %v5199 = vand.u32 %v593, 4294901760
    %5200 = vmatpush1.msra.mxu0 %v5199
    %5201 = vmatprep.subr.mxu0 0.0
    %v5202 = vand.u32 %v594, 4294901760
    %5203 = vmatpush1.msra.mxu0 %v5202
    %5204 = vmatprep.subr.mxu0 0.0
    %v5205 = vand.u32 %v595, 4294901760
    %5206 = vmatpush1.msra.mxu0 %v5205
    %5207 = vmatprep.subr.mxu0 0.0
    %v5208 = vand.u32 %v596, 4294901760
    %5209 = vmatpush1.msra.mxu0 %v5208
    %5210 = vmatprep.subr.mxu0 0.0
    %v5211 = vand.u32 %v597, 4294901760
    %5212 = vmatpush1.msra.mxu0 %v5211
    %5213 = vmatprep.subr.mxu0 0.0
    %v5214 = vand.u32 %v598, 4294901760
    %5215 = vmatpush1.msra.mxu0 %v5214
    %5216 = vmatprep.subr.mxu0 0.0
    %v5217 = vand.u32 %v599, 4294901760
    %5218 = vmatpush1.msra.mxu0 %v5217
    %5219 = vmatprep.subr.mxu0 0.0
    %5220 = vmatpush1.msra.mxu0 0.0
    %5221 = vmatprep.subr.mxu0 0.0
    %5222 = vmatpush1.msra.mxu0 0.0
    %5223 = vmatprep.subr.mxu0 0.0
    %5224 = vmatpush1.msra.mxu0 0.0
    %5225 = vmatprep.subr.mxu0 0.0
    %5226 = vmatpush1.msra.mxu0 0.0
    %5227 = vmatprep.subr.mxu0 0.0
    %5228 = vmatpush1.msra.mxu0 0.0
    %5229 = vmatprep.subr.mxu0 0.0
    %5230 = vmatpush1.msra.mxu0 0.0
    %5231 = vmatprep.subr.mxu0 0.0
    %5232 = vmatpush1.msra.mxu0 0.0
    %5233 = vmatprep.subr.mxu0 0.0
    %5234 = vmatpush1.msra.mxu0 0.0
    %5235 = vmatprep.subr.mxu0 0.0
    %5236 = vmatpush1.msra.mxu0 0.0
    %5237 = vmatprep.subr.mxu0 0.0
    %5238 = vmatpush1.msra.mxu0 0.0
    %5239 = vmatprep.subr.mxu0 0.0
    %5240 = vmatpush1.msra.mxu0 0.0
    %5241 = vmatprep.subr.mxu0 0.0
    %5242 = vmatpush1.msra.mxu0 0.0
    %5243 = vmatprep.subr.mxu0 0.0
    %5244 = vmatpush1.msra.mxu0 0.0
    %5245 = vmatprep.subr.mxu0 0.0
    %5246 = vmatpush1.msra.mxu0 0.0
    %5247 = vmatprep.subr.mxu0 0.0
    %5248 = vmatpush1.msra.mxu0 0.0
    %5249 = vmatprep.subr.mxu0 0.0
    %5250 = vmatpush1.msra.mxu0 0.0
    %5251 = vmatprep.subr.mxu0 0.0
    %5252 = vmatpush1.msra.mxu0 0.0
    %5253 = vmatprep.subr.mxu0 0.0
    %5254 = vmatpush1.msra.mxu0 0.0
    %5255 = vmatprep.subr.mxu0 0.0
    %5256 = vmatpush1.msra.mxu0 0.0
    %5257 = vmatprep.subr.mxu0 0.0
    %5258 = vmatpush1.msra.mxu0 0.0
    %5259 = vmatprep.mubr.f32.mxu0 0.0
    %v5260 = vand.u32 %v5178, 4294901760
    %v5261 = vsub.f32 %v5178, %v5260
    %v5262 = vand.u32 %v5261, 4294901760
    %v5263 = vsub.f32 %v5261, %v5262
    %v5264 = vand.u32 %v5263, 4294901760
    %5265 = vmatmul.mubr.f32.gmra.mrb[0].mxu0 %v5264
    %v5266 = vpop.f32.mrb[0].mxu0
    %v5267 = vadd.f32 0.0, %v5266
    %v5268 = vpop.f32.mrb[0].mxu0
    %5269 = vmatprep.mubr.f32.mxu0 0.0
    %v5270 = vand.u32 %v5181, 4294901760
    %v5271 = vsub.f32 %v5181, %v5270
    %v5272 = vand.u32 %v5271, 4294901760
    %v5273 = vsub.f32 %v5271, %v5272
    %v5274 = vand.u32 %v5273, 4294901760
    %5275 = vmatmul.mubr.f32.gmra.mrb[0].mxu0 %v5274
    %v5276 = vpop.f32.mrb[0].mxu0
    %v5277 = vadd.f32 0.0, %v5276
    %v5278 = vpop.f32.mrb[0].mxu0
    %5279 = vdwg.mxu0
    %5280 = vmatprep.subr.mxu0 0.0
    %v5281 = vand.u32 %v588, 4294901760
    %v5282 = vsub.f32 %v588, %v5281
    %v5283 = vand.u32 %v5282, 4294901760
    %v5284 = vsub.f32 %v5282, %v5283
    %v5285 = vand.u32 %v5284, 4294901760
    %5286 = vmatpush1.msra.mxu0 %v5285
    %5287 = vmatprep.subr.mxu0 0.0
    %v5288 = vand.u32 %v589, 4294901760
    %v5289 = vsub.f32 %v589, %v5288
    %v5290 = vand.u32 %v5289, 4294901760
    %v5291 = vsub.f32 %v5289, %v5290
    %v5292 = vand.u32 %v5291, 4294901760
    %5293 = vmatpush1.msra.mxu0 %v5292
    %5294 = vmatprep.subr.mxu0 0.0
    %v5295 = vand.u32 %v590, 4294901760
    %v5296 = vsub.f32 %v590, %v5295
    %v5297 = vand.u32 %v5296, 4294901760
    %v5298 = vsub.f32 %v5296, %v5297
    %v5299 = vand.u32 %v5298, 4294901760
    %5300 = vmatpush1.msra.mxu0 %v5299
    %5301 = vmatprep.subr.mxu0 0.0
    %v5302 = vand.u32 %v591, 4294901760
    %v5303 = vsub.f32 %v591, %v5302
    %v5304 = vand.u32 %v5303, 4294901760
    %v5305 = vsub.f32 %v5303, %v5304
    %v5306 = vand.u32 %v5305, 4294901760
    %5307 = vmatpush1.msra.mxu0 %v5306
    %5308 = vmatprep.subr.mxu0 0.0
    %v5309 = vand.u32 %v592, 4294901760
    %v5310 = vsub.f32 %v592, %v5309
    %v5311 = vand.u32 %v5310, 4294901760
    %v5312 = vsub.f32 %v5310, %v5311
    %v5313 = vand.u32 %v5312, 4294901760
    %5314 = vmatpush1.msra.mxu0 %v5313
    %5315 = vmatprep.subr.mxu0 0.0
    %v5316 = vand.u32 %v593, 4294901760
    %v5317 = vsub.f32 %v593, %v5316
    %v5318 = vand.u32 %v5317, 4294901760
    %v5319 = vsub.f32 %v5317, %v5318
    %v5320 = vand.u32 %v5319, 4294901760
    %5321 = vmatpush1.msra.mxu0 %v5320
    %5322 = vmatprep.subr.mxu0 0.0
    %v5323 = vand.u32 %v594, 4294901760
    %v5324 = vsub.f32 %v594, %v5323
    %v5325 = vand.u32 %v5324, 4294901760
    %v5326 = vsub.f32 %v5324, %v5325
    %v5327 = vand.u32 %v5326, 4294901760
    %5328 = vmatpush1.msra.mxu0 %v5327
    %5329 = vmatprep.subr.mxu0 0.0
    %v5330 = vand.u32 %v595, 4294901760
    %v5331 = vsub.f32 %v595, %v5330
    %v5332 = vand.u32 %v5331, 4294901760
    %v5333 = vsub.f32 %v5331, %v5332
    %v5334 = vand.u32 %v5333, 4294901760
    %5335 = vmatpush1.msra.mxu0 %v5334
    %5336 = vmatprep.subr.mxu0 0.0
    %v5337 = vand.u32 %v596, 4294901760
    %v5338 = vsub.f32 %v596, %v5337
    %v5339 = vand.u32 %v5338, 4294901760
    %v5340 = vsub.f32 %v5338, %v5339
    %v5341 = vand.u32 %v5340, 4294901760
    %5342 = vmatpush1.msra.mxu0 %v5341
    %5343 = vmatprep.subr.mxu0 0.0
    %v5344 = vand.u32 %v597, 4294901760
    %v5345 = vsub.f32 %v597, %v5344
    %v5346 = vand.u32 %v5345, 4294901760
    %v5347 = vsub.f32 %v5345, %v5346
    %v5348 = vand.u32 %v5347, 4294901760
    %5349 = vmatpush1.msra.mxu0 %v5348
    %5350 = vmatprep.subr.mxu0 0.0
    %v5351 = vand.u32 %v598, 4294901760
    %v5352 = vsub.f32 %v598, %v5351
    %v5353 = vand.u32 %v5352, 4294901760
    %v5354 = vsub.f32 %v5352, %v5353
    %v5355 = vand.u32 %v5354, 4294901760
    %5356 = vmatpush1.msra.mxu0 %v5355
    %5357 = vmatprep.subr.mxu0 0.0
    %v5358 = vand.u32 %v599, 4294901760
    %v5359 = vsub.f32 %v599, %v5358
    %v5360 = vand.u32 %v5359, 4294901760
    %v5361 = vsub.f32 %v5359, %v5360
    %v5362 = vand.u32 %v5361, 4294901760
    %5363 = vmatpush1.msra.mxu0 %v5362
    %5364 = vmatprep.subr.mxu0 0.0
    %5365 = vmatpush1.msra.mxu0 0.0
    %5366 = vmatprep.subr.mxu0 0.0
    %5367 = vmatpush1.msra.mxu0 0.0
    %5368 = vmatprep.subr.mxu0 0.0
    %5369 = vmatpush1.msra.mxu0 0.0
    %5370 = vmatprep.subr.mxu0 0.0
    %5371 = vmatpush1.msra.mxu0 0.0
    %5372 = vmatprep.subr.mxu0 0.0
    %5373 = vmatpush1.msra.mxu0 0.0
    %5374 = vmatprep.subr.mxu0 0.0
    %5375 = vmatpush1.msra.mxu0 0.0
    %5376 = vmatprep.subr.mxu0 0.0
    %5377 = vmatpush1.msra.mxu0 0.0
    %5378 = vmatprep.subr.mxu0 0.0
    %5379 = vmatpush1.msra.mxu0 0.0
    %5380 = vmatprep.subr.mxu0 0.0
    %5381 = vmatpush1.msra.mxu0 0.0
    %5382 = vmatprep.subr.mxu0 0.0
    %5383 = vmatpush1.msra.mxu0 0.0
    %5384 = vmatprep.subr.mxu0 0.0
    %5385 = vmatpush1.msra.mxu0 0.0
    %5386 = vmatprep.subr.mxu0 0.0
    %5387 = vmatpush1.msra.mxu0 0.0
    %5388 = vmatprep.subr.mxu0 0.0
    %5389 = vmatpush1.msra.mxu0 0.0
    %5390 = vmatprep.subr.mxu0 0.0
    %5391 = vmatpush1.msra.mxu0 0.0
    %5392 = vmatprep.subr.mxu0 0.0
    %5393 = vmatpush1.msra.mxu0 0.0
    %5394 = vmatprep.subr.mxu0 0.0
    %5395 = vmatpush1.msra.mxu0 0.0
    %5396 = vmatprep.subr.mxu0 0.0
    %5397 = vmatpush1.msra.mxu0 0.0
    %5398 = vmatprep.subr.mxu0 0.0
    %5399 = vmatpush1.msra.mxu0 0.0
    %5400 = vmatprep.subr.mxu0 0.0
    %5401 = vmatpush1.msra.mxu0 0.0
    %5402 = vmatprep.subr.mxu0 0.0
    %5403 = vmatpush1.msra.mxu0 0.0
    %5404 = vmatprep.mubr.f32.mxu0 0.0
    %v5405 = vand.u32 %v5178, 4294901760
    %5406 = vmatmul.mubr.f32.gmra.mrb[0].mxu0 %v5405
    %v5407 = vpop.f32.mrb[0].mxu0
    %v5408 = vadd.f32 %v5267, %v5407
    %v5409 = vpop.f32.mrb[0].mxu0
    %5410 = vmatprep.mubr.f32.mxu0 0.0
    %v5411 = vand.u32 %v5181, 4294901760
    %5412 = vmatmul.mubr.f32.gmra.mrb[0].mxu0 %v5411
    %v5413 = vpop.f32.mrb[0].mxu0
    %v5414 = vadd.f32 %v5277, %v5413
    %v5415 = vpop.f32.mrb[0].mxu0
    %5416 = vdwg.mxu0
    %5417 = vmatprep.subr.mxu0 0.0
    %v5418 = vand.u32 %v588, 4294901760
    %v5419 = vsub.f32 %v588, %v5418
    %5420 = vmatpush1.msra.mxu0 %v5419
    %5421 = vmatprep.subr.mxu0 0.0
    %v5422 = vand.u32 %v589, 4294901760
    %v5423 = vsub.f32 %v589, %v5422
    %5424 = vmatpush1.msra.mxu0 %v5423
    %5425 = vmatprep.subr.mxu0 0.0
    %v5426 = vand.u32 %v590, 4294901760
    %v5427 = vsub.f32 %v590, %v5426
    %5428 = vmatpush1.msra.mxu0 %v5427
    %5429 = vmatprep.subr.mxu0 0.0
    %v5430 = vand.u32 %v591, 4294901760
    %v5431 = vsub.f32 %v591, %v5430
    %5432 = vmatpush1.msra.mxu0 %v5431
    %5433 = vmatprep.subr.mxu0 0.0
    %v5434 = vand.u32 %v592, 4294901760
    %v5435 = vsub.f32 %v592, %v5434
    %5436 = vmatpush1.msra.mxu0 %v5435
    %5437 = vmatprep.subr.mxu0 0.0
    %v5438 = vand.u32 %v593, 4294901760
    %v5439 = vsub.f32 %v593, %v5438
    %5440 = vmatpush1.msra.mxu0 %v5439
    %5441 = vmatprep.subr.mxu0 0.0
    %v5442 = vand.u32 %v594, 4294901760
    %v5443 = vsub.f32 %v594, %v5442
    %5444 = vmatpush1.msra.mxu0 %v5443
    %5445 = vmatprep.subr.mxu0 0.0
    %v5446 = vand.u32 %v595, 4294901760
    %v5447 = vsub.f32 %v595, %v5446
    %5448 = vmatpush1.msra.mxu0 %v5447
    %5449 = vmatprep.subr.mxu0 0.0
    %v5450 = vand.u32 %v596, 4294901760
    %v5451 = vsub.f32 %v596, %v5450
    %5452 = vmatpush1.msra.mxu0 %v5451
    %5453 = vmatprep.subr.mxu0 0.0
    %v5454 = vand.u32 %v597, 4294901760
    %v5455 = vsub.f32 %v597, %v5454
    %5456 = vmatpush1.msra.mxu0 %v5455
    %5457 = vmatprep.subr.mxu0 0.0
    %v5458 = vand.u32 %v598, 4294901760
    %v5459 = vsub.f32 %v598, %v5458
    %5460 = vmatpush1.msra.mxu0 %v5459
    %5461 = vmatprep.subr.mxu0 0.0
    %v5462 = vand.u32 %v599, 4294901760
    %v5463 = vsub.f32 %v599, %v5462
    %5464 = vmatpush1.msra.mxu0 %v5463
    %5465 = vmatprep.subr.mxu0 0.0
    %5466 = vmatpush1.msra.mxu0 0.0
    %5467 = vmatprep.subr.mxu0 0.0
    %5468 = vmatpush1.msra.mxu0 0.0
    %5469 = vmatprep.subr.mxu0 0.0
    %5470 = vmatpush1.msra.mxu0 0.0
    %5471 = vmatprep.subr.mxu0 0.0
    %5472 = vmatpush1.msra.mxu0 0.0
    %5473 = vmatprep.subr.mxu0 0.0
    %5474 = vmatpush1.msra.mxu0 0.0
    %5475 = vmatprep.subr.mxu0 0.0
    %5476 = vmatpush1.msra.mxu0 0.0
    %5477 = vmatprep.subr.mxu0 0.0
    %5478 = vmatpush1.msra.mxu0 0.0
    %5479 = vmatprep.subr.mxu0 0.0
    %5480 = vmatpush1.msra.mxu0 0.0
    %5481 = vmatprep.subr.mxu0 0.0
    %5482 = vmatpush1.msra.mxu0 0.0
    %5483 = vmatprep.subr.mxu0 0.0
    %5484 = vmatpush1.msra.mxu0 0.0
    %5485 = vmatprep.subr.mxu0 0.0
    %5486 = vmatpush1.msra.mxu0 0.0
    %5487 = vmatprep.subr.mxu0 0.0
    %5488 = vmatpush1.msra.mxu0 0.0
    %5489 = vmatprep.subr.mxu0 0.0
    %5490 = vmatpush1.msra.mxu0 0.0
    %5491 = vmatprep.subr.mxu0 0.0
    %5492 = vmatpush1.msra.mxu0 0.0
    %5493 = vmatprep.subr.mxu0 0.0
    %5494 = vmatpush1.msra.mxu0 0.0
    %5495 = vmatprep.subr.mxu0 0.0
    %5496 = vmatpush1.msra.mxu0 0.0
    %5497 = vmatprep.subr.mxu0 0.0
    %5498 = vmatpush1.msra.mxu0 0.0
    %5499 = vmatprep.subr.mxu0 0.0
    %5500 = vmatpush1.msra.mxu0 0.0
    %5501 = vmatprep.subr.mxu0 0.0
    %5502 = vmatpush1.msra.mxu0 0.0
    %5503 = vmatprep.subr.mxu0 0.0
    %5504 = vmatpush1.msra.mxu0 0.0
    %5505 = vmatprep.mubr.f32.mxu0 0.0
    %v5506 = vand.u32 %v5178, 4294901760
    %v5507 = vsub.f32 %v5178, %v5506
    %5508 = vmatmul.mubr.f32.gmra.mrb[0].mxu0 %v5507
    %v5509 = vpop.f32.mrb[0].mxu0
    %v5510 = vadd.f32 %v5408, %v5509
    %v5511 = vpop.f32.mrb[0].mxu0
    %5512 = vmatprep.mubr.f32.mxu0 0.0
    %v5513 = vand.u32 %v5181, 4294901760
    %v5514 = vsub.f32 %v5181, %v5513
    %5515 = vmatmul.mubr.f32.gmra.mrb[0].mxu0 %v5514
    %v5516 = vpop.f32.mrb[0].mxu0
    %v5517 = vadd.f32 %v5414, %v5516
    %v5518 = vpop.f32.mrb[0].mxu0
    %5519 = vdwg.mxu0
    %5520 = vmatprep.subr.mxu0 0.0
    %v5521 = vand.u32 %v588, 4294901760
    %5522 = vmatpush1.msra.mxu0 %v5521
    %5523 = vmatprep.subr.mxu0 0.0
    %v5524 = vand.u32 %v589, 4294901760
    %5525 = vmatpush1.msra.mxu0 %v5524
    %5526 = vmatprep.subr.mxu0 0.0
    %v5527 = vand.u32 %v590, 4294901760
    %5528 = vmatpush1.msra.mxu0 %v5527
    %5529 = vmatprep.subr.mxu0 0.0
    %v5530 = vand.u32 %v591, 4294901760
    %5531 = vmatpush1.msra.mxu0 %v5530
    %5532 = vmatprep.subr.mxu0 0.0
    %v5533 = vand.u32 %v592, 4294901760
    %5534 = vmatpush1.msra.mxu0 %v5533
    %5535 = vmatprep.subr.mxu0 0.0
    %v5536 = vand.u32 %v593, 4294901760
    %5537 = vmatpush1.msra.mxu0 %v5536
    %5538 = vmatprep.subr.mxu0 0.0
    %v5539 = vand.u32 %v594, 4294901760
    %5540 = vmatpush1.msra.mxu0 %v5539
    %5541 = vmatprep.subr.mxu0 0.0
    %v5542 = vand.u32 %v595, 4294901760
    %5543 = vmatpush1.msra.mxu0 %v5542
    %5544 = vmatprep.subr.mxu0 0.0
    %v5545 = vand.u32 %v596, 4294901760
    %5546 = vmatpush1.msra.mxu0 %v5545
    %5547 = vmatprep.subr.mxu0 0.0
    %v5548 = vand.u32 %v597, 4294901760
    %5549 = vmatpush1.msra.mxu0 %v5548
    %5550 = vmatprep.subr.mxu0 0.0
    %v5551 = vand.u32 %v598, 4294901760
    %5552 = vmatpush1.msra.mxu0 %v5551
    %5553 = vmatprep.subr.mxu0 0.0
    %v5554 = vand.u32 %v599, 4294901760
    %5555 = vmatpush1.msra.mxu0 %v5554
    %5556 = vmatprep.subr.mxu0 0.0
    %5557 = vmatpush1.msra.mxu0 0.0
    %5558 = vmatprep.subr.mxu0 0.0
    %5559 = vmatpush1.msra.mxu0 0.0
    %5560 = vmatprep.subr.mxu0 0.0
    %5561 = vmatpush1.msra.mxu0 0.0
    %5562 = vmatprep.subr.mxu0 0.0
    %5563 = vmatpush1.msra.mxu0 0.0
    %5564 = vmatprep.subr.mxu0 0.0
    %5565 = vmatpush1.msra.mxu0 0.0
    %5566 = vmatprep.subr.mxu0 0.0
    %5567 = vmatpush1.msra.mxu0 0.0
    %5568 = vmatprep.subr.mxu0 0.0
    %5569 = vmatpush1.msra.mxu0 0.0
    %5570 = vmatprep.subr.mxu0 0.0
    %5571 = vmatpush1.msra.mxu0 0.0
    %5572 = vmatprep.subr.mxu0 0.0
    %5573 = vmatpush1.msra.mxu0 0.0
    %5574 = vmatprep.subr.mxu0 0.0
    %5575 = vmatpush1.msra.mxu0 0.0
    %5576 = vmatprep.subr.mxu0 0.0
    %5577 = vmatpush1.msra.mxu0 0.0
    %5578 = vmatprep.subr.mxu0 0.0
    %5579 = vmatpush1.msra.mxu0 0.0
    %5580 = vmatprep.subr.mxu0 0.0
    %5581 = vmatpush1.msra.mxu0 0.0
    %5582 = vmatprep.subr.mxu0 0.0
    %5583 = vmatpush1.msra.mxu0 0.0
    %5584 = vmatprep.subr.mxu0 0.0
    %5585 = vmatpush1.msra.mxu0 0.0
    %5586 = vmatprep.subr.mxu0 0.0
    %5587 = vmatpush1.msra.mxu0 0.0
    %5588 = vmatprep.subr.mxu0 0.0
    %5589 = vmatpush1.msra.mxu0 0.0
    %5590 = vmatprep.subr.mxu0 0.0
    %5591 = vmatpush1.msra.mxu0 0.0
    %5592 = vmatprep.subr.mxu0 0.0
    %5593 = vmatpush1.msra.mxu0 0.0
    %5594 = vmatprep.subr.mxu0 0.0
    %5595 = vmatpush1.msra.mxu0 0.0
    %5596 = vmatprep.mubr.f32.mxu0 0.0
    %v5597 = vand.u32 %v5178, 4294901760
    %v5598 = vsub.f32 %v5178, %v5597
    %v5599 = vand.u32 %v5598, 4294901760
    %5600 = vmatmul.mubr.f32.gmra.mrb[0].mxu0 %v5599
    %v5601 = vpop.f32.mrb[0].mxu0
    %v5602 = vadd.f32 %v5510, %v5601
    %v5603 = vpop.f32.mrb[0].mxu0
    %5604 = vmatprep.mubr.f32.mxu0 0.0
    %v5605 = vand.u32 %v5181, 4294901760
    %v5606 = vsub.f32 %v5181, %v5605
    %v5607 = vand.u32 %v5606, 4294901760
    %5608 = vmatmul.mubr.f32.gmra.mrb[0].mxu0 %v5607
    %v5609 = vpop.f32.mrb[0].mxu0
    %v5610 = vadd.f32 %v5517, %v5609
    %v5611 = vpop.f32.mrb[0].mxu0
    %5612 = vdwg.mxu0
    %5613 = vmatprep.subr.mxu0 0.0
    %v5614 = vand.u32 %v588, 4294901760
    %v5615 = vsub.f32 %v588, %v5614
    %v5616 = vand.u32 %v5615, 4294901760
    %5617 = vmatpush1.msra.mxu0 %v5616
    %5618 = vmatprep.subr.mxu0 0.0
    %v5619 = vand.u32 %v589, 4294901760
    %v5620 = vsub.f32 %v589, %v5619
    %v5621 = vand.u32 %v5620, 4294901760
    %5622 = vmatpush1.msra.mxu0 %v5621
    %5623 = vmatprep.subr.mxu0 0.0
    %v5624 = vand.u32 %v590, 4294901760
    %v5625 = vsub.f32 %v590, %v5624
    %v5626 = vand.u32 %v5625, 4294901760
    %5627 = vmatpush1.msra.mxu0 %v5626
    %5628 = vmatprep.subr.mxu0 0.0
    %v5629 = vand.u32 %v591, 4294901760
    %v5630 = vsub.f32 %v591, %v5629
    %v5631 = vand.u32 %v5630, 4294901760
    %5632 = vmatpush1.msra.mxu0 %v5631
    %5633 = vmatprep.subr.mxu0 0.0
    %v5634 = vand.u32 %v592, 4294901760
    %v5635 = vsub.f32 %v592, %v5634
    %v5636 = vand.u32 %v5635, 4294901760
    %5637 = vmatpush1.msra.mxu0 %v5636
    %5638 = vmatprep.subr.mxu0 0.0
    %v5639 = vand.u32 %v593, 4294901760
    %v5640 = vsub.f32 %v593, %v5639
    %v5641 = vand.u32 %v5640, 4294901760
    %5642 = vmatpush1.msra.mxu0 %v5641
    %5643 = vmatprep.subr.mxu0 0.0
    %v5644 = vand.u32 %v594, 4294901760
    %v5645 = vsub.f32 %v594, %v5644
    %v5646 = vand.u32 %v5645, 4294901760
    %5647 = vmatpush1.msra.mxu0 %v5646
    %5648 = vmatprep.subr.mxu0 0.0
    %v5649 = vand.u32 %v595, 4294901760
    %v5650 = vsub.f32 %v595, %v5649
    %v5651 = vand.u32 %v5650, 4294901760
    %5652 = vmatpush1.msra.mxu0 %v5651
    %5653 = vmatprep.subr.mxu0 0.0
    %v5654 = vand.u32 %v596, 4294901760
    %v5655 = vsub.f32 %v596, %v5654
    %v5656 = vand.u32 %v5655, 4294901760
    %5657 = vmatpush1.msra.mxu0 %v5656
    %5658 = vmatprep.subr.mxu0 0.0
    %v5659 = vand.u32 %v597, 4294901760
    %v5660 = vsub.f32 %v597, %v5659
    %v5661 = vand.u32 %v5660, 4294901760
    %5662 = vmatpush1.msra.mxu0 %v5661
    %5663 = vmatprep.subr.mxu0 0.0
    %v5664 = vand.u32 %v598, 4294901760
    %v5665 = vsub.f32 %v598, %v5664
    %v5666 = vand.u32 %v5665, 4294901760
    %5667 = vmatpush1.msra.mxu0 %v5666
    %5668 = vmatprep.subr.mxu0 0.0
    %v5669 = vand.u32 %v599, 4294901760
    %v5670 = vsub.f32 %v599, %v5669
    %v5671 = vand.u32 %v5670, 4294901760
    %5672 = vmatpush1.msra.mxu0 %v5671
    %5673 = vmatprep.subr.mxu0 0.0
    %5674 = vmatpush1.msra.mxu0 0.0
    %5675 = vmatprep.subr.mxu0 0.0
    %5676 = vmatpush1.msra.mxu0 0.0
    %5677 = vmatprep.subr.mxu0 0.0
    %5678 = vmatpush1.msra.mxu0 0.0
    %5679 = vmatprep.subr.mxu0 0.0
    %5680 = vmatpush1.msra.mxu0 0.0
    %5681 = vmatprep.subr.mxu0 0.0
    %5682 = vmatpush1.msra.mxu0 0.0
    %5683 = vmatprep.subr.mxu0 0.0
    %5684 = vmatpush1.msra.mxu0 0.0
    %5685 = vmatprep.subr.mxu0 0.0
    %5686 = vmatpush1.msra.mxu0 0.0
    %5687 = vmatprep.subr.mxu0 0.0
    %5688 = vmatpush1.msra.mxu0 0.0
    %5689 = vmatprep.subr.mxu0 0.0
    %5690 = vmatpush1.msra.mxu0 0.0
    %5691 = vmatprep.subr.mxu0 0.0
    %5692 = vmatpush1.msra.mxu0 0.0
    %5693 = vmatprep.subr.mxu0 0.0
    %5694 = vmatpush1.msra.mxu0 0.0
    %5695 = vmatprep.subr.mxu0 0.0
    %5696 = vmatpush1.msra.mxu0 0.0
    %5697 = vmatprep.subr.mxu0 0.0
    %5698 = vmatpush1.msra.mxu0 0.0
    %5699 = vmatprep.subr.mxu0 0.0
    %5700 = vmatpush1.msra.mxu0 0.0
    %5701 = vmatprep.subr.mxu0 0.0
    %5702 = vmatpush1.msra.mxu0 0.0
    %5703 = vmatprep.subr.mxu0 0.0
    %5704 = vmatpush1.msra.mxu0 0.0
    %5705 = vmatprep.subr.mxu0 0.0
    %5706 = vmatpush1.msra.mxu0 0.0
    %5707 = vmatprep.subr.mxu0 0.0
    %5708 = vmatpush1.msra.mxu0 0.0
    %5709 = vmatprep.subr.mxu0 0.0
    %5710 = vmatpush1.msra.mxu0 0.0
    %5711 = vmatprep.subr.mxu0 0.0
    %5712 = vmatpush1.msra.mxu0 0.0
    %5713 = vmatprep.mubr.f32.mxu0 0.0
    %v5714 = vand.u32 %v5178, 4294901760
    %5715 = vmatmul.mubr.f32.gmra.mrb[0].mxu0 %v5714
    %v5716 = vpop.f32.mrb[0].mxu0
    %v5717 = vadd.f32 %v5602, %v5716
    %v5718 = vpop.f32.mrb[0].mxu0
    %5719 = vmatprep.mubr.f32.mxu0 0.0
    %v5720 = vand.u32 %v5181, 4294901760
    %5721 = vmatmul.mubr.f32.gmra.mrb[0].mxu0 %v5720
    %v5722 = vpop.f32.mrb[0].mxu0
    %v5723 = vadd.f32 %v5610, %v5722
    %v5724 = vpop.f32.mrb[0].mxu0
    %5725 = vdwg.mxu0
    %5726 = vmatprep.subr.mxu0 0.0
    %v5727 = vand.u32 %v588, 4294901760
    %5728 = vmatpush1.msra.mxu0 %v5727
    %5729 = vmatprep.subr.mxu0 0.0
    %v5730 = vand.u32 %v589, 4294901760
    %5731 = vmatpush1.msra.mxu0 %v5730
    %5732 = vmatprep.subr.mxu0 0.0
    %v5733 = vand.u32 %v590, 4294901760
    %5734 = vmatpush1.msra.mxu0 %v5733
    %5735 = vmatprep.subr.mxu0 0.0
    %v5736 = vand.u32 %v591, 4294901760
    %5737 = vmatpush1.msra.mxu0 %v5736
    %5738 = vmatprep.subr.mxu0 0.0
    %v5739 = vand.u32 %v592, 4294901760
    %5740 = vmatpush1.msra.mxu0 %v5739
    %5741 = vmatprep.subr.mxu0 0.0
    %v5742 = vand.u32 %v593, 4294901760
    %5743 = vmatpush1.msra.mxu0 %v5742
    %5744 = vmatprep.subr.mxu0 0.0
    %v5745 = vand.u32 %v594, 4294901760
    %5746 = vmatpush1.msra.mxu0 %v5745
    %5747 = vmatprep.subr.mxu0 0.0
    %v5748 = vand.u32 %v595, 4294901760
    %5749 = vmatpush1.msra.mxu0 %v5748
    %5750 = vmatprep.subr.mxu0 0.0
    %v5751 = vand.u32 %v596, 4294901760
    %5752 = vmatpush1.msra.mxu0 %v5751
    %5753 = vmatprep.subr.mxu0 0.0
    %v5754 = vand.u32 %v597, 4294901760
    %5755 = vmatpush1.msra.mxu0 %v5754
    %5756 = vmatprep.subr.mxu0 0.0
    %v5757 = vand.u32 %v598, 4294901760
    %5758 = vmatpush1.msra.mxu0 %v5757
    %5759 = vmatprep.subr.mxu0 0.0
    %v5760 = vand.u32 %v599, 4294901760
    %5761 = vmatpush1.msra.mxu0 %v5760
    %5762 = vmatprep.subr.mxu0 0.0
    %5763 = vmatpush1.msra.mxu0 0.0
    %5764 = vmatprep.subr.mxu0 0.0
    %5765 = vmatpush1.msra.mxu0 0.0
    %5766 = vmatprep.subr.mxu0 0.0
    %5767 = vmatpush1.msra.mxu0 0.0
    %5768 = vmatprep.subr.mxu0 0.0
    %5769 = vmatpush1.msra.mxu0 0.0
    %5770 = vmatprep.subr.mxu0 0.0
    %5771 = vmatpush1.msra.mxu0 0.0
    %5772 = vmatprep.subr.mxu0 0.0
    %5773 = vmatpush1.msra.mxu0 0.0
    %5774 = vmatprep.subr.mxu0 0.0
    %5775 = vmatpush1.msra.mxu0 0.0
    %5776 = vmatprep.subr.mxu0 0.0
    %5777 = vmatpush1.msra.mxu0 0.0
    %5778 = vmatprep.subr.mxu0 0.0
    %5779 = vmatpush1.msra.mxu0 0.0
    %5780 = vmatprep.subr.mxu0 0.0
    %5781 = vmatpush1.msra.mxu0 0.0
    %5782 = vmatprep.subr.mxu0 0.0
    %5783 = vmatpush1.msra.mxu0 0.0
    %5784 = vmatprep.subr.mxu0 0.0
    %5785 = vmatpush1.msra.mxu0 0.0
    %5786 = vmatprep.subr.mxu0 0.0
    %5787 = vmatpush1.msra.mxu0 0.0
    %5788 = vmatprep.subr.mxu0 0.0
    %5789 = vmatpush1.msra.mxu0 0.0
    %5790 = vmatprep.subr.mxu0 0.0
    %5791 = vmatpush1.msra.mxu0 0.0
    %5792 = vmatprep.subr.mxu0 0.0
    %5793 = vmatpush1.msra.mxu0 0.0
    %5794 = vmatprep.subr.mxu0 0.0
    %5795 = vmatpush1.msra.mxu0 0.0
    %5796 = vmatprep.subr.mxu0 0.0
    %5797 = vmatpush1.msra.mxu0 0.0
    %5798 = vmatprep.subr.mxu0 0.0
    %5799 = vmatpush1.msra.mxu0 0.0
    %5800 = vmatprep.subr.mxu0 0.0
    %5801 = vmatpush1.msra.mxu0 0.0
    %5802 = vmatprep.mubr.f32.mxu0 0.0
    %v5803 = vand.u32 %v5178, 4294901760
    %5804 = vmatmul.mubr.f32.gmra.mrb[0].mxu0 %v5803
    %v5805 = vpop.f32.mrb[0].mxu0
    %v5806 = vadd.f32 %v5717, %v5805
    %v5807 = vpop.f32.mrb[0].mxu0
    %5808 = vmatprep.mubr.f32.mxu0 0.0
    %v5809 = vand.u32 %v5181, 4294901760
    %5810 = vmatmul.mubr.f32.gmra.mrb[0].mxu0 %v5809
    %v5811 = vpop.f32.mrb[0].mxu0
    %v5812 = vadd.f32 %v5723, %v5811
    %v5813 = vpop.f32.mrb[0].mxu0
    %5814 = vdwg.mxu0
    %v5815 = vsub.f32 %v5806, %v2383
    %v5816 = vsub.f32 %v5812, %v2384
    %v5817 = vmul.f32 %v2383, 2.0
    %v5818 = vmul.f32 %v2384, 2.0
    %v5819 = vadd.f32 %v5817, 0.0001
    %v5820 = vadd.f32 %v5818, 0.0001
    %v5821 = vmul.f32 %v5815, 2.0
    %v5822 = vmul.f32 %v5816, 2.0
    %v5823 = vadd.f32 %v5821, 0.0009
    %v5824 = vadd.f32 %v5822, 0.0009
    %v5825 = vmul.f32 %v5819, %v5823
    %v5826 = vmul.f32 %v5820, %v5824
    %v5827 = vadd.f32 %v2379, %v2381
    %v5828 = vadd.f32 %v2380, %v2382
    %v5829 = vadd.f32 %v5827, 0.0001
    %v5830 = vadd.f32 %v5828, 0.0001
    %v5831 = vadd.f32 %v3527, %v4671
    %v5832 = vadd.f32 %v3528, %v4672
    %v5833 = vadd.f32 %v5831, 0.0009
    %v5834 = vadd.f32 %v5832, 0.0009
    %v5835 = vmul.f32 %v5829, %v5833
    %v5836 = vmul.f32 %v5830, %v5834
    %v5837 = vrcp.pop %v5835
    %v5838 = vmul.f32 %v5825, %v5837
    %v5839 = vrcp.pop %v5836
    %v5840 = vmul.f32 %v5826, %v5839
    %v5841 = vsel %vm600, %v5838, 0.0
    %v5842 = vsel %vm600, %v5840, 0.0
    %v5843 = vadd.f32 %v5841, %v5842
    %5844 = vst.msk [vmem:[#allocation10] sm:$0xff] %vm600, %v5843
    // Predicated region
    $region34: #{tpu_custom_call.1} parent=1 // pred_check
      _
    $region35: #{tpu_custom_call.1} parent=1 // pred_check_branch
      %5846 = sbr.rel (0) target = $region37
    $region36: #{tpu_custom_call.1} parent=1 // pred_region
      %s5848 = ssub.s32 128, 128
      %5849 = vsyncadd [#allocation4], %s5848
      %s5851 = sshll.u32 [#allocation10], 4
      %s5852 = int_to_ptr.vmem [resolvable:$true] %s5851
      %5854 = dma.vmem_to_hbm [thread:$0]  %s5852, 128, %s4, [#allocation4]
    $region37: #{tpu_custom_call.1} parent=1 // pred_fallthru
      _
    // Predicated region
    $region38: #{tpu_custom_call.1} parent=1 // pred_check
      _
    $region39: #{tpu_custom_call.1} parent=1 // pred_check_branch
      %5856 = sbr.rel (0) target = $region41
    $region40: #{tpu_custom_call.1} parent=1 // pred_region
      %5857 = dma.done [#allocation4], 128
    $region41: #{tpu_custom_call.1} parent=1 // pred_fallthru
      _
    %5858 = vsyncpa [#allocation3], 1
    %5859 = vsyncpa [#allocation6], 1
    %5860 = vsyncpa [#allocation9], 1
    %5861 = vsyncpa [#allocation4], 1

</llo_original>
